<compile_context>
chip_gen: v7x
topology: tpu7x:2x2x1
jax: 0.10.0
libtpu: 0.0.40
codegen_flags: <defaults>
</compile_context>

<pallas_src>
import functools

import jax
import jax.numpy as jnp
from jax.experimental import pallas as pl
from jax.experimental.pallas import tpu as pltpu


# ----------------------------------------------------------------------------
# Fused Pallas kernel: stacked LSTM + hidden2tag, fully VMEM-resident
# ----------------------------------------------------------------------------
def _fused_lstm_kernel(num_layers, x_ref, len_ref, mask_ref, *args):
    """Single-invocation kernel (grid=(1,)).

    x_ref    : (T*B, E) bf16  time-major embedded inputs, row = t*B + b
    len_ref  : (B, 1)   i32   per-(sorted)-sequence lengths (0 for pad rows)
    mask_ref : (T*B, 1) f32   1.0 where t < len[b], else 0.0
    per layer l (3 refs): w_ih (in, 4H) bf16, w_hh (H, 4H) bf16, b (1, 4H) f32
                          (g-gate columns [2H:3H] pre-scaled by 2)
    h0_ref, c0_ref : (L, B, H) f32 initial states
    wtag_ref : (H, D) bf16 ; btag_ref : (1, D) f32
    out_ref  : (T*B, D) f32   logits, zeroed past each length
    scratch  : hseq (T*B, H) f32, xg (T*B, 4H) f32
    """
    L = num_layers
    layer_w = [args[3 * l: 3 * l + 3] for l in range(L)]
    (h0_ref, c0_ref, wtag_ref, btag_ref,
     out_ref, hseq_scr, xg_scr) = args[3 * L:]

    B = h0_ref.shape[1]
    H = h0_ref.shape[2]
    T = x_ref.shape[0] // B

    lens = len_ref[...]                                   # (B, 1) int32, one load

    for l in range(L):
        wih_ref, whh_ref, b_ref = layer_w[l]

        # ---- Input projection + bias for ALL timesteps in one MXU matmul ----
        if l == 0:
            xin = x_ref[...]                               # bf16 already
        else:
            # TODO(synk): when T*B scales up, keep hseq in a bf16 scratch to drop
            # this cast pass; at B=8 that would force sub-tile packed stores on
            # the serial path (bf16 tile = 16 sublanes), so f32 scratch is kept.
            xin = hseq_scr[...].astype(jnp.bfloat16)
        xg_scr[...] = jnp.dot(xin, wih_ref[...],
                              preferred_element_type=jnp.float32) + b_ref[...]

        # ---- Sequential recurrence: only h @ W_hh + gates on the critical path
        h = h0_ref[l]                                      # (B, H) f32, vreg-resident
        c = c0_ref[l]
        whh = whh_ref[...]                                 # (H, 4H) bf16, resident
        # TODO(synk): keep W_hh weight-stationary in the MXU across the time loop
        # (pltpu.matmul_push_rhs once, matmul_acc_lhs/matmul_pop per step) once
        # the 32x128 RHS shape/accumulator semantics are validated on-device.
        # TODO(synk): if T grows beyond ~16-32, switch to lax.fori_loop with
        # (h, c) carries + pl.multiple_of on the pl.ds start.
        for t in range(T):                                 # static unroll (T small)
            rows = pl.ds(t * B, B)                         # sublane-aligned static slice
            g = xg_scr[rows, :] + jnp.dot(h.astype(jnp.bfloat16), whh,
                                          preferred_element_type=jnp.float32)  # (B, 4H)
            # Single full-vreg EUP pass: g-gate columns were pre-scaled by 2,
            # so tanh(z) = 2*sigmoid(2z) - 1 is recovered with two VPU ops.
            sg = jax.nn.sigmoid(g)
            i_g = sg[:, 0 * H:1 * H]
            f_g = sg[:, 1 * H:2 * H]
            g_g = 2.0 * sg[:, 2 * H:3 * H] - 1.0
            o_g = sg[:, 3 * H:4 * H]
            c_new = f_g * c + i_g * g_g
            h_new = o_g * jnp.tanh(c_new)
            valid = lens > t                               # packed-seq mask (B, 1)
            c = jnp.where(valid, c_new, c)                 # freeze state past length
            h = jnp.where(valid, h_new, h)
            hseq_scr[rows, :] = jnp.where(valid, h_new, 0.0)  # zero output past length

    # ---- hidden2tag for the whole sequence as one matmul ---------------------
    # hseq rows past each length are already zero, so only the bias needs the
    # validity mask (pack_padded -> pad_packed(padding_value=0) round trip).
    out_ref[...] = (jnp.dot(hseq_scr[...].astype(jnp.bfloat16), wtag_ref[...],
                            preferred_element_type=jnp.float32)
                    + mask_ref[...] * btag_ref[...])


# ----------------------------------------------------------------------------
# pallas_call wrapper
# ----------------------------------------------------------------------------
def _full_spec(shape):
    zeros = (0,) * len(shape)
    return pl.BlockSpec(tuple(shape), lambda i: zeros)


def fused_lstm_forward(x_flat, lens_col, mask_col, lstm_weights, h0, c0, w_tag, b_tag):
    """x_flat: (T*B_pad, E) bf16 time-major rows -> (T*B_pad, D) f32 logits."""
    L = len(lstm_weights)
    _, B, H = h0.shape
    TB, E = x_flat.shape
    D = w_tag.shape[-1]

    flat_w = []
    in_specs = [_full_spec((TB, E)), _full_spec((B, 1)), _full_spec((TB, 1))]
    for wih, whh, b in lstm_weights:
        flat_w += [wih, whh, b]
        in_specs += [_full_spec(wih.shape), _full_spec(whh.shape), _full_spec(b.shape)]
    in_specs += [_full_spec(h0.shape), _full_spec(c0.shape),
                 _full_spec(w_tag.shape), _full_spec(b_tag.shape)]

    return pl.pallas_call(
        functools.partial(_fused_lstm_kernel, L),
        out_shape=jax.ShapeDtypeStruct((TB, D), jnp.float32),
        grid_spec=pltpu.PrefetchScalarGridSpec(
            num_scalar_prefetch=0,
            grid=(1,),                      # single step: no per-t / per-layer grid overhead
            in_specs=in_specs,
            out_specs=_full_spec((TB, D)),
            scratch_shapes=[
                pltpu.VMEM((TB, H), jnp.float32),       # current layer's hidden sequence
                pltpu.VMEM((TB, 4 * H), jnp.float32),   # hoisted input-gate terms
            ]),
        # TODO(synk): on v7x, when B_pad >= 16 add a leading batch-tile grid axis
        # marked "parallel" (multiples of 8 rows per TensorCore); at B_pad=8 the
        # single sublane group must stay on one core.
        compiler_params=pltpu.CompilerParams(
            dimension_semantics=("arbitrary",)),
    )(x_flat, lens_col, mask_col, *flat_w, h0, c0, w_tag, b_tag)


# ----------------------------------------------------------------------------
# Full model forward (glue in plain JAX: sort/unsort, embedding gather, padding)
# ----------------------------------------------------------------------------
@functools.partial(jax.jit, static_argnames=("max_len",))
def lstm_model_forward(inputs, token_lengths, params, max_len):
    """Replicates LSTMModel.forward (unidirectional, dropout=0).

    inputs        : (B, L) int32 token ids
    token_lengths : (B,)   int32
    returns       : (B, max_len, dictionary_size) f32, zero past each length
    """
    B = inputs.shape[0]
    H = params["h0"].shape[-1]

    # sort by length descending (pack_padded_sequence contract) + inverse permutation
    idx_sort = jnp.argsort(-token_lengths)
    idx_unsort = jnp.argsort(idx_sort)
    inputs_s = inputs[idx_sort]
    lengths_s = token_lengths[idx_sort].astype(jnp.int32)

    # Embedding gather emitted directly in time-major order (T, B, E), bf16 (MXU
    # LHS dtype): no activation-sized transpose/cast pass in the wrapper.
    # padding_idx=0 -> row 0 is zero.  nn.Dropout(p=0) is identity.
    # TODO(synk): stochastic dropout (p > 0) not emulated.
    ids_tb = jnp.transpose(inputs_s[:, :max_len])            # (T, B) int32, tiny
    x_tbe = jnp.take(params["embedding"], ids_tb, axis=0)    # (T, B, E) bf16

    # Pad batch to a full sublane group (8): full-width vector ops in-kernel.
    # Padded rows get length 0, so they stay frozen / zeroed and are sliced off.
    B_pad = max(8, -(-B // 8) * 8)
    pad = B_pad - B
    x_tbe = jnp.pad(x_tbe, ((0, 0), (0, pad), (0, 0)))
    lens_pad = jnp.pad(lengths_s, (0, pad))                   # (B_pad,)
    lens_col = lens_pad[:, None]                              # (B_pad, 1)
    h0 = jnp.pad(params["h0"], ((0, 0), (0, pad), (0, 0)))
    c0 = jnp.pad(params["c0"], ((0, 0), (0, pad), (0, 0)))

    T = max_len
    E = x_tbe.shape[-1]
    x_flat = x_tbe.reshape(T * B_pad, E)                      # free (contiguous) reshape

    # (T*B_pad, 1) validity column, masks only the hidden2tag bias in-kernel
    # (invalid hidden rows are already zero there). Tiny wrapper-side op.
    mask_col = (jnp.arange(T, dtype=jnp.int32)[:, None]
                < lens_pad[None, :]).astype(jnp.float32).reshape(T * B_pad, 1)

    # Fold the g-gate tanh into the single sigmoid pass: scale the g-gate columns
    # of W_ih / W_hh / b by 2 (tanh(z) = 2*sigmoid(2z) - 1). Scaling by 2 is exact
    # in f32 and bf16, so numerics match the unfolded weights. MXU weights -> bf16.
    gsl = slice(2 * H, 3 * H)
    lstm_k = []
    for (w_ih, w_hh, b) in params["lstm"]:
        lstm_k.append((w_ih.at[:, gsl].multiply(2.0).astype(jnp.bfloat16),
                       w_hh.at[:, gsl].multiply(2.0).astype(jnp.bfloat16),
                       b.at[:, gsl].multiply(2.0)))

    out_flat = fused_lstm_forward(x_flat, lens_col, mask_col, lstm_k, h0, c0,
                                  params["w_tag"].astype(jnp.bfloat16),
                                  params["b_tag"])            # (T*B_pad, D)
    out_tbd = out_flat.reshape(T, B_pad, -1)

    # Only remaining wrapper pass over activations (tiny): drop batch padding,
    # go batch-first, undo the length sort. XLA fuses this into one gather.
    return jnp.transpose(out_tbd[:, :B, :], (1, 0, 2))[idx_unsort]


# ----------------------------------------------------------------------------
# Pure-JAX reference (mirrors the kernel numerics: bf16 matmul inputs, f32 state,
# standard unfolded sigmoid/tanh gates)
# ----------------------------------------------------------------------------
def reference_forward(inputs, token_lengths, params, max_len):
    idx_sort = jnp.argsort(-token_lengths)
    idx_unsort = jnp.argsort(idx_sort)
    inputs_s = inputs[idx_sort]
    lengths_s = token_lengths[idx_sort].astype(jnp.int32)

    x = jnp.take(params["embedding"], inputs_s[:, :max_len].T, axis=0)  # (T, B, E) bf16
    T, B, _ = x.shape

    for l, (w_ih, w_hh, b) in enumerate(params["lstm"]):
        h = params["h0"][l]
        c = params["c0"][l]
        H = h.shape[-1]
        outs = []
        for t in range(T):
            g = (jnp.dot(x[t].astype(jnp.bfloat16), w_ih.astype(jnp.bfloat16),
                         preferred_element_type=jnp.float32)
                 + jnp.dot(h.astype(jnp.bfloat16), w_hh.astype(jnp.bfloat16),
                           preferred_element_type=jnp.float32)
                 + b)
            i_g = jax.nn.sigmoid(g[:, :H])
            f_g = jax.nn.sigmoid(g[:, H:2 * H])
            g_g = jnp.tanh(g[:, 2 * H:3 * H])
            o_g = jax.nn.sigmoid(g[:, 3 * H:])
            c_new = f_g * c + i_g * g_g
            h_new = o_g * jnp.tanh(c_new)
            valid = (lengths_s > t)[:, None]
            c = jnp.where(valid, c_new, c)
            h = jnp.where(valid, h_new, h)
            outs.append(jnp.where(valid, h_new, 0.0))
        x = jnp.stack(outs, axis=0)

    H = x.shape[-1]
    logits = (jnp.dot(x.reshape(T * B, H).astype(jnp.bfloat16),
                      params["w_tag"].astype(jnp.bfloat16),
                      preferred_element_type=jnp.float32)
              + params["b_tag"]).reshape(T, B, -1)
    valid = jnp.arange(T)[:, None, None] < lengths_s[None, :, None]
    logits = jnp.where(valid, logits, 0.0)
    return jnp.transpose(logits, (1, 0, 2))[idx_unsort]


# ----------------------------------------------------------------------------
# Parameter init (weights stored transposed for x @ W; f32 master weights,
# bf16 MXU copies are produced by the wrapper)
# ----------------------------------------------------------------------------
def init_params(key, dictionary_size, embedding_dim, hidden_size, num_layers, batch_size):
    keys = jax.random.split(key, 5 + 4 * num_layers)
    ki = iter(keys)

    emb = jax.random.normal(next(ki), (dictionary_size, embedding_dim), jnp.float32) * 0.1
    emb = emb.at[0].set(0.0)                                 # padding_idx=0
    emb = emb.astype(jnp.bfloat16)                           # consumed only as MXU LHS

    scale = 1.0 / jnp.sqrt(hidden_size)
    lstm = []
    for layer in range(num_layers):
        in_dim = embedding_dim if layer == 0 else hidden_size
        w_ih = jax.random.uniform(next(ki), (in_dim, 4 * hidden_size), jnp.float32,
                                  -scale, scale)
        w_hh = jax.random.uniform(next(ki), (hidden_size, 4 * hidden_size), jnp.float32,
                                  -scale, scale)
        b_ih = jax.random.uniform(next(ki), (4 * hidden_size,), jnp.float32, -scale, scale)
        b_hh = jax.random.uniform(next(ki), (4 * hidden_size,), jnp.float32, -scale, scale)
        lstm.append((w_ih, w_hh, (b_ih + b_hh)[None, :]))

    w_tag = jax.random.uniform(next(ki), (hidden_size, dictionary_size), jnp.float32,
                               -scale, scale)
    b_tag = jax.random.uniform(next(ki), (1, dictionary_size), jnp.float32, -scale, scale)

    # self.hidden = init_hidden(batch_size): randn initial states, reused per forward
    h0 = jax.random.normal(next(ki), (num_layers, batch_size, hidden_size), jnp.float32)
    c0 = jax.random.normal(next(ki), (num_layers, batch_size, hidden_size), jnp.float32)

    return {"embedding": emb, "lstm": lstm, "w_tag": w_tag, "b_tag": b_tag,
            "h0": h0, "c0": c0}


if __name__ == "__main__":
    dictionary_size = 128     # D = 128 -> lane-dense output stores
    embedding_dim = 32
    hidden_size = 32          # 4H = 128 -> gates fill exactly one vreg lane width
    num_layers = 2
    batch_size = 4
    code_length = 12

    key = jax.random.PRNGKey(0)
    k_par, k_tok = jax.random.split(key)

    params = init_params(k_par, dictionary_size, embedding_dim, hidden_size,
                         num_layers, batch_size)

    # deterministic example inputs: token ids in [1, dictionary_size), padded with 0
    token_lengths = jnp.array([10, 6, 8, 3], dtype=jnp.int32)
    tokens = jax.random.randint(k_tok, (batch_size, code_length), 1, dictionary_size,
                                dtype=jnp.int32)
    pos = jnp.arange(code_length, dtype=jnp.int32)[None, :]
    inputs = jnp.where(pos < token_lengths[:, None], tokens, 0)

    # Static max_len: no per-call host sync / recompile on the data-dependent max
    # length. Timesteps beyond a sequence's length are zeroed, so columns beyond
    # max(token_lengths) are all-zero padding (same values as PyTorch's output,
    # just padded out to code_length).
    max_len = code_length

    out = lstm_model_forward(inputs, token_lengths, params, max_len)
    out = jax.block_until_ready(out)
    assert out.shape == (batch_size, max_len, dictionary_size), out.shape

    ref = jax.block_until_ready(reference_forward(inputs, token_lengths, params, max_len))
    max_diff = float(jnp.max(jnp.abs(out - ref)))
    assert max_diff < 5e-2, f"max |kernel - reference| = {max_diff}"

    print("KERNEL_OK")
</pallas_src>

<mosaic_0001>
module attributes {stable_mosaic.version = 11 : i64} {
  func.func @_fused_lstm_kernel(%arg0: i32, %arg1: memref<96x32xbf16, #tpu.memory_space<vmem>>, %arg2: memref<8x1xi32, #tpu.memory_space<vmem>>, %arg3: memref<96x1xf32, #tpu.memory_space<vmem>>, %arg4: memref<32x128xbf16, #tpu.memory_space<vmem>>, %arg5: memref<32x128xbf16, #tpu.memory_space<vmem>>, %arg6: memref<1x128xf32, #tpu.memory_space<vmem>>, %arg7: memref<32x128xbf16, #tpu.memory_space<vmem>>, %arg8: memref<32x128xbf16, #tpu.memory_space<vmem>>, %arg9: memref<1x128xf32, #tpu.memory_space<vmem>>, %arg10: memref<2x8x32xf32, #tpu.memory_space<vmem>>, %arg11: memref<2x8x32xf32, #tpu.memory_space<vmem>>, %arg12: memref<32x128xbf16, #tpu.memory_space<vmem>>, %arg13: memref<1x128xf32, #tpu.memory_space<vmem>>, %arg14: memref<96x128xf32, #tpu.memory_space<vmem>>, %arg15: memref<96x32xf32, #tpu.memory_space<vmem>>, %arg16: memref<96x128xf32, #tpu.memory_space<vmem>>) attributes {dimension_semantics = [#tpu.dimension_semantics<arbitrary>], iteration_bounds = array<i64: 1>, scalar_prefetch = 0 : i64, scratch_operands = 2 : i64, tpu.core_type = #tpu.core_type<tc>, window_params = [{pipeline_mode = #tpu.pipeline_mode<synchronous>, transform_indices = @transform_0, window_bounds = array<i64: 96, 32>}, {pipeline_mode = #tpu.pipeline_mode<synchronous>, transform_indices = @transform_1, window_bounds = array<i64: 8, 1>}, {pipeline_mode = #tpu.pipeline_mode<synchronous>, transform_indices = @transform_2, window_bounds = array<i64: 96, 1>}, {pipeline_mode = #tpu.pipeline_mode<synchronous>, transform_indices = @transform_3, window_bounds = array<i64: 32, 128>}, {pipeline_mode = #tpu.pipeline_mode<synchronous>, transform_indices = @transform_4, window_bounds = array<i64: 32, 128>}, {pipeline_mode = #tpu.pipeline_mode<synchronous>, transform_indices = @transform_5, window_bounds = array<i64: 1, 128>}, {pipeline_mode = #tpu.pipeline_mode<synchronous>, transform_indices = @transform_6, window_bounds = array<i64: 32, 128>}, {pipeline_mode = #tpu.pipeline_mode<synchronous>, transform_indices = @transform_7, window_bounds = array<i64: 32, 128>}, {pipeline_mode = #tpu.pipeline_mode<synchronous>, transform_indices = @transform_8, window_bounds = array<i64: 1, 128>}, {pipeline_mode = #tpu.pipeline_mode<synchronous>, transform_indices = @transform_9, window_bounds = array<i64: 2, 8, 32>}, {pipeline_mode = #tpu.pipeline_mode<synchronous>, transform_indices = @transform_10, window_bounds = array<i64: 2, 8, 32>}, {pipeline_mode = #tpu.pipeline_mode<synchronous>, transform_indices = @transform_11, window_bounds = array<i64: 32, 128>}, {pipeline_mode = #tpu.pipeline_mode<synchronous>, transform_indices = @transform_12, window_bounds = array<i64: 1, 128>}, {pipeline_mode = #tpu.pipeline_mode<synchronous>, transform_indices = @transform_13, window_bounds = array<i64: 96, 128>}]} {
    %c0 = arith.constant 0 : index
    %c0_0 = arith.constant 0 : index
    %0 = vector.load %arg2[%c0, %c0_0] : memref<8x1xi32, #tpu.memory_space<vmem>>, vector<8x1xi32>
    %c0_1 = arith.constant 0 : index
    %c0_2 = arith.constant 0 : index
    %1 = vector.load %arg1[%c0_1, %c0_2] : memref<96x32xbf16, #tpu.memory_space<vmem>>, vector<96x32xbf16>
    %c0_3 = arith.constant 0 : index
    %c0_4 = arith.constant 0 : index
    %2 = vector.load %arg4[%c0_3, %c0_4] : memref<32x128xbf16, #tpu.memory_space<vmem>>, vector<32x128xbf16>
    %cst = arith.constant dense<0.000000e+00> : vector<96x128xf32>
    %3 = tpu.matmul %1, %2, %cst {dimension_numbers = #tpu.dot_dimension_numbers<[1], [0], [0], [1], [0, 0, 1, 1], [], []>} : vector<96x32xbf16>, vector<32x128xbf16>, vector<96x128xf32> -> vector<96x128xf32>
    %c0_5 = arith.constant 0 : index
    %c0_6 = arith.constant 0 : index
    %4 = vector.load %arg6[%c0_5, %c0_6] : memref<1x128xf32, #tpu.memory_space<vmem>>, vector<1x128xf32>
    %5 = vector.broadcast %4 : vector<1x128xf32> to vector<96x128xf32>
    %6 = arith.addf %3, %5 : vector<96x128xf32>
    %c0_7 = arith.constant 0 : index
    %c0_8 = arith.constant 0 : index
    %7 = vector.load %arg16[%c0_7, %c0_8] : memref<96x128xf32, #tpu.memory_space<vmem>>, vector<96x128xf32>
    tpu.vector_store %arg16[%c0_7, %c0_8], %6 {strides = array<i32>} : memref<96x128xf32, #tpu.memory_space<vmem>>, vector<96x128xf32>,
    %c0_9 = arith.constant 0 : index
    %c0_10 = arith.constant 0 : index
    %c0_11 = arith.constant 0 : index
    %8 = vector.load %arg10[%c0_9, %c0_10, %c0_11] : memref<2x8x32xf32, #tpu.memory_space<vmem>>, vector<1x8x32xf32>
    %9 = vector.shape_cast %8 : vector<1x8x32xf32> to vector<8x32xf32>
    %c0_12 = arith.constant 0 : index
    %c0_13 = arith.constant 0 : index
    %c0_14 = arith.constant 0 : index
    %10 = vector.load %arg11[%c0_12, %c0_13, %c0_14] : memref<2x8x32xf32, #tpu.memory_space<vmem>>, vector<1x8x32xf32>
    %11 = vector.shape_cast %10 : vector<1x8x32xf32> to vector<8x32xf32>
    %c0_15 = arith.constant 0 : index
    %c0_16 = arith.constant 0 : index
    %12 = vector.load %arg5[%c0_15, %c0_16] : memref<32x128xbf16, #tpu.memory_space<vmem>>, vector<32x128xbf16>
    %c0_17 = arith.constant 0 : index
    %c0_18 = arith.constant 0 : index
    %13 = vector.load %arg16[%c0_17, %c0_18] : memref<96x128xf32, #tpu.memory_space<vmem>>, vector<8x128xf32>
    %14 = arith.truncf %9 : vector<8x32xf32> to vector<8x32xbf16>
    %cst_19 = arith.constant dense<0.000000e+00> : vector<8x128xf32>
    %15 = tpu.matmul %14, %12, %cst_19 {dimension_numbers = #tpu.dot_dimension_numbers<[1], [0], [0], [1], [0, 0, 1, 1], [], []>} : vector<8x32xbf16>, vector<32x128xbf16>, vector<8x128xf32> -> vector<8x128xf32>
    %16 = arith.addf %13, %15 : vector<8x128xf32>
    %17 = arith.negf %16 : vector<8x128xf32>
    %18 = math.exp %17 : vector<8x128xf32>
    %cst_20 = arith.constant 1.000000e+00 : f32
    %19 = vector.broadcast %cst_20 : f32 to vector<8x128xf32>
    %20 = arith.addf %19, %18 : vector<8x128xf32>
    %21 = arith.divf %19, %20 : vector<8x128xf32>
    %22 = vector.extract_strided_slice %21 {offsets = [0, 0], sizes = [8, 32], strides = [1, 1]} : vector<8x128xf32> to vector<8x32xf32>
    %23 = vector.extract_strided_slice %21 {offsets = [0, 32], sizes = [8, 32], strides = [1, 1]} : vector<8x128xf32> to vector<8x32xf32>
    %24 = vector.extract_strided_slice %21 {offsets = [0, 64], sizes = [8, 32], strides = [1, 1]} : vector<8x128xf32> to vector<8x32xf32>
    %cst_21 = arith.constant 2.000000e+00 : f32
    %25 = vector.broadcast %cst_21 : f32 to vector<8x32xf32>
    %26 = arith.mulf %25, %24 : vector<8x32xf32>
    %cst_22 = arith.constant 1.000000e+00 : f32
    %27 = vector.broadcast %cst_22 : f32 to vector<8x32xf32>
    %28 = arith.subf %26, %27 : vector<8x32xf32>
    %29 = vector.extract_strided_slice %21 {offsets = [0, 96], sizes = [8, 32], strides = [1, 1]} : vector<8x128xf32> to vector<8x32xf32>
    %30 = arith.mulf %23, %11 : vector<8x32xf32>
    %31 = arith.mulf %22, %28 : vector<8x32xf32>
    %32 = arith.addf %30, %31 : vector<8x32xf32>
    %33 = math.tanh %32 : vector<8x32xf32>
    %34 = arith.mulf %29, %33 : vector<8x32xf32>
    %c0_i32 = arith.constant 0 : i32
    %35 = vector.broadcast %c0_i32 : i32 to vector<8x1xi32>
    %36 = arith.cmpi sgt, %0, %35 : vector<8x1xi32>
    %37 = vector.shape_cast %36 : vector<8x1xi1> to vector<8x1xi1>
    %38 = vector.broadcast %37 : vector<8x1xi1> to vector<8x32xi1>
    %39 = arith.select %38, %32, %11 : vector<8x32xi1>, vector<8x32xf32>
    %40 = vector.shape_cast %36 : vector<8x1xi1> to vector<8x1xi1>
    %41 = vector.broadcast %40 : vector<8x1xi1> to vector<8x32xi1>
    %42 = arith.select %41, %34, %9 : vector<8x32xi1>, vector<8x32xf32>
    %cst_23 = arith.constant 0.000000e+00 : f32
    %43 = vector.shape_cast %36 : vector<8x1xi1> to vector<8x1xi1>
    %44 = vector.broadcast %43 : vector<8x1xi1> to vector<8x32xi1>
    %45 = vector.broadcast %cst_23 : f32 to vector<8x32xf32>
    %46 = arith.select %44, %34, %45 : vector<8x32xi1>, vector<8x32xf32>
    %c0_24 = arith.constant 0 : index
    %c0_25 = arith.constant 0 : index
    %47 = vector.load %arg15[%c0_24, %c0_25] : memref<96x32xf32, #tpu.memory_space<vmem>>, vector<8x32xf32>
    tpu.vector_store %arg15[%c0_24, %c0_25], %46 {strides = array<i32>} : memref<96x32xf32, #tpu.memory_space<vmem>>, vector<8x32xf32>,
    %c8 = arith.constant 8 : index
    %c0_26 = arith.constant 0 : index
    %48 = vector.load %arg16[%c8, %c0_26] : memref<96x128xf32, #tpu.memory_space<vmem>>, vector<8x128xf32>
    %49 = arith.truncf %42 : vector<8x32xf32> to vector<8x32xbf16>
    %cst_27 = arith.constant dense<0.000000e+00> : vector<8x128xf32>
    %50 = tpu.matmul %49, %12, %cst_27 {dimension_numbers = #tpu.dot_dimension_numbers<[1], [0], [0], [1], [0, 0, 1, 1], [], []>} : vector<8x32xbf16>, vector<32x128xbf16>, vector<8x128xf32> -> vector<8x128xf32>
    %51 = arith.addf %48, %50 : vector<8x128xf32>
    %52 = arith.negf %51 : vector<8x128xf32>
    %53 = math.exp %52 : vector<8x128xf32>
    %cst_28 = arith.constant 1.000000e+00 : f32
    %54 = vector.broadcast %cst_28 : f32 to vector<8x128xf32>
    %55 = arith.addf %54, %53 : vector<8x128xf32>
    %56 = arith.divf %54, %55 : vector<8x128xf32>
    %57 = vector.extract_strided_slice %56 {offsets = [0, 0], sizes = [8, 32], strides = [1, 1]} : vector<8x128xf32> to vector<8x32xf32>
    %58 = vector.extract_strided_slice %56 {offsets = [0, 32], sizes = [8, 32], strides = [1, 1]} : vector<8x128xf32> to vector<8x32xf32>
    %59 = vector.extract_strided_slice %56 {offsets = [0, 64], sizes = [8, 32], strides = [1, 1]} : vector<8x128xf32> to vector<8x32xf32>
    %cst_29 = arith.constant 2.000000e+00 : f32
    %60 = vector.broadcast %cst_29 : f32 to vector<8x32xf32>
    %61 = arith.mulf %60, %59 : vector<8x32xf32>
    %cst_30 = arith.constant 1.000000e+00 : f32
    %62 = vector.broadcast %cst_30 : f32 to vector<8x32xf32>
    %63 = arith.subf %61, %62 : vector<8x32xf32>
    %64 = vector.extract_strided_slice %56 {offsets = [0, 96], sizes = [8, 32], strides = [1, 1]} : vector<8x128xf32> to vector<8x32xf32>
    %65 = arith.mulf %58, %39 : vector<8x32xf32>
    %66 = arith.mulf %57, %63 : vector<8x32xf32>
    %67 = arith.addf %65, %66 : vector<8x32xf32>
    %68 = math.tanh %67 : vector<8x32xf32>
    %69 = arith.mulf %64, %68 : vector<8x32xf32>
    %c1_i32 = arith.constant 1 : i32
    %70 = vector.broadcast %c1_i32 : i32 to vector<8x1xi32>
    %71 = arith.cmpi sgt, %0, %70 : vector<8x1xi32>
    %72 = vector.shape_cast %71 : vector<8x1xi1> to vector<8x1xi1>
    %73 = vector.broadcast %72 : vector<8x1xi1> to vector<8x32xi1>
    %74 = arith.select %73, %67, %39 : vector<8x32xi1>, vector<8x32xf32>
    %75 = vector.shape_cast %71 : vector<8x1xi1> to vector<8x1xi1>
    %76 = vector.broadcast %75 : vector<8x1xi1> to vector<8x32xi1>
    %77 = arith.select %76, %69, %42 : vector<8x32xi1>, vector<8x32xf32>
    %cst_31 = arith.constant 0.000000e+00 : f32
    %78 = vector.shape_cast %71 : vector<8x1xi1> to vector<8x1xi1>
    %79 = vector.broadcast %78 : vector<8x1xi1> to vector<8x32xi1>
    %80 = vector.broadcast %cst_31 : f32 to vector<8x32xf32>
    %81 = arith.select %79, %69, %80 : vector<8x32xi1>, vector<8x32xf32>
    %c8_32 = arith.constant 8 : index
    %c0_33 = arith.constant 0 : index
    %82 = vector.load %arg15[%c8_32, %c0_33] : memref<96x32xf32, #tpu.memory_space<vmem>>, vector<8x32xf32>
    tpu.vector_store %arg15[%c8_32, %c0_33], %81 {strides = array<i32>} : memref<96x32xf32, #tpu.memory_space<vmem>>, vector<8x32xf32>,
    %c16 = arith.constant 16 : index
    %c0_34 = arith.constant 0 : index
    %83 = vector.load %arg16[%c16, %c0_34] : memref<96x128xf32, #tpu.memory_space<vmem>>, vector<8x128xf32>
    %84 = arith.truncf %77 : vector<8x32xf32> to vector<8x32xbf16>
    %cst_35 = arith.constant dense<0.000000e+00> : vector<8x128xf32>
    %85 = tpu.matmul %84, %12, %cst_35 {dimension_numbers = #tpu.dot_dimension_numbers<[1], [0], [0], [1], [0, 0, 1, 1], [], []>} : vector<8x32xbf16>, vector<32x128xbf16>, vector<8x128xf32> -> vector<8x128xf32>
    %86 = arith.addf %83, %85 : vector<8x128xf32>
    %87 = arith.negf %86 : vector<8x128xf32>
    %88 = math.exp %87 : vector<8x128xf32>
    %cst_36 = arith.constant 1.000000e+00 : f32
    %89 = vector.broadcast %cst_36 : f32 to vector<8x128xf32>
    %90 = arith.addf %89, %88 : vector<8x128xf32>
    %91 = arith.divf %89, %90 : vector<8x128xf32>
    %92 = vector.extract_strided_slice %91 {offsets = [0, 0], sizes = [8, 32], strides = [1, 1]} : vector<8x128xf32> to vector<8x32xf32>
    %93 = vector.extract_strided_slice %91 {offsets = [0, 32], sizes = [8, 32], strides = [1, 1]} : vector<8x128xf32> to vector<8x32xf32>
    %94 = vector.extract_strided_slice %91 {offsets = [0, 64], sizes = [8, 32], strides = [1, 1]} : vector<8x128xf32> to vector<8x32xf32>
    %cst_37 = arith.constant 2.000000e+00 : f32
    %95 = vector.broadcast %cst_37 : f32 to vector<8x32xf32>
    %96 = arith.mulf %95, %94 : vector<8x32xf32>
    %cst_38 = arith.constant 1.000000e+00 : f32
    %97 = vector.broadcast %cst_38 : f32 to vector<8x32xf32>
    %98 = arith.subf %96, %97 : vector<8x32xf32>
    %99 = vector.extract_strided_slice %91 {offsets = [0, 96], sizes = [8, 32], strides = [1, 1]} : vector<8x128xf32> to vector<8x32xf32>
    %100 = arith.mulf %93, %74 : vector<8x32xf32>
    %101 = arith.mulf %92, %98 : vector<8x32xf32>
    %102 = arith.addf %100, %101 : vector<8x32xf32>
    %103 = math.tanh %102 : vector<8x32xf32>
    %104 = arith.mulf %99, %103 : vector<8x32xf32>
    %c2_i32 = arith.constant 2 : i32
    %105 = vector.broadcast %c2_i32 : i32 to vector<8x1xi32>
    %106 = arith.cmpi sgt, %0, %105 : vector<8x1xi32>
    %107 = vector.shape_cast %106 : vector<8x1xi1> to vector<8x1xi1>
    %108 = vector.broadcast %107 : vector<8x1xi1> to vector<8x32xi1>
    %109 = arith.select %108, %102, %74 : vector<8x32xi1>, vector<8x32xf32>
    %110 = vector.shape_cast %106 : vector<8x1xi1> to vector<8x1xi1>
    %111 = vector.broadcast %110 : vector<8x1xi1> to vector<8x32xi1>
    %112 = arith.select %111, %104, %77 : vector<8x32xi1>, vector<8x32xf32>
    %cst_39 = arith.constant 0.000000e+00 : f32
    %113 = vector.shape_cast %106 : vector<8x1xi1> to vector<8x1xi1>
    %114 = vector.broadcast %113 : vector<8x1xi1> to vector<8x32xi1>
    %115 = vector.broadcast %cst_39 : f32 to vector<8x32xf32>
    %116 = arith.select %114, %104, %115 : vector<8x32xi1>, vector<8x32xf32>
    %c16_40 = arith.constant 16 : index
    %c0_41 = arith.constant 0 : index
    %117 = vector.load %arg15[%c16_40, %c0_41] : memref<96x32xf32, #tpu.memory_space<vmem>>, vector<8x32xf32>
    tpu.vector_store %arg15[%c16_40, %c0_41], %116 {strides = array<i32>} : memref<96x32xf32, #tpu.memory_space<vmem>>, vector<8x32xf32>,
    %c24 = arith.constant 24 : index
    %c0_42 = arith.constant 0 : index
    %118 = vector.load %arg16[%c24, %c0_42] : memref<96x128xf32, #tpu.memory_space<vmem>>, vector<8x128xf32>
    %119 = arith.truncf %112 : vector<8x32xf32> to vector<8x32xbf16>
    %cst_43 = arith.constant dense<0.000000e+00> : vector<8x128xf32>
    %120 = tpu.matmul %119, %12, %cst_43 {dimension_numbers = #tpu.dot_dimension_numbers<[1], [0], [0], [1], [0, 0, 1, 1], [], []>} : vector<8x32xbf16>, vector<32x128xbf16>, vector<8x128xf32> -> vector<8x128xf32>
    %121 = arith.addf %118, %120 : vector<8x128xf32>
    %122 = arith.negf %121 : vector<8x128xf32>
    %123 = math.exp %122 : vector<8x128xf32>
    %cst_44 = arith.constant 1.000000e+00 : f32
    %124 = vector.broadcast %cst_44 : f32 to vector<8x128xf32>
    %125 = arith.addf %124, %123 : vector<8x128xf32>
    %126 = arith.divf %124, %125 : vector<8x128xf32>
    %127 = vector.extract_strided_slice %126 {offsets = [0, 0], sizes = [8, 32], strides = [1, 1]} : vector<8x128xf32> to vector<8x32xf32>
    %128 = vector.extract_strided_slice %126 {offsets = [0, 32], sizes = [8, 32], strides = [1, 1]} : vector<8x128xf32> to vector<8x32xf32>
    %129 = vector.extract_strided_slice %126 {offsets = [0, 64], sizes = [8, 32], strides = [1, 1]} : vector<8x128xf32> to vector<8x32xf32>
    %cst_45 = arith.constant 2.000000e+00 : f32
    %130 = vector.broadcast %cst_45 : f32 to vector<8x32xf32>
    %131 = arith.mulf %130, %129 : vector<8x32xf32>
    %cst_46 = arith.constant 1.000000e+00 : f32
    %132 = vector.broadcast %cst_46 : f32 to vector<8x32xf32>
    %133 = arith.subf %131, %132 : vector<8x32xf32>
    %134 = vector.extract_strided_slice %126 {offsets = [0, 96], sizes = [8, 32], strides = [1, 1]} : vector<8x128xf32> to vector<8x32xf32>
    %135 = arith.mulf %128, %109 : vector<8x32xf32>
    %136 = arith.mulf %127, %133 : vector<8x32xf32>
    %137 = arith.addf %135, %136 : vector<8x32xf32>
    %138 = math.tanh %137 : vector<8x32xf32>
    %139 = arith.mulf %134, %138 : vector<8x32xf32>
    %c3_i32 = arith.constant 3 : i32
    %140 = vector.broadcast %c3_i32 : i32 to vector<8x1xi32>
    %141 = arith.cmpi sgt, %0, %140 : vector<8x1xi32>
    %142 = vector.shape_cast %141 : vector<8x1xi1> to vector<8x1xi1>
    %143 = vector.broadcast %142 : vector<8x1xi1> to vector<8x32xi1>
    %144 = arith.select %143, %137, %109 : vector<8x32xi1>, vector<8x32xf32>
    %145 = vector.shape_cast %141 : vector<8x1xi1> to vector<8x1xi1>
    %146 = vector.broadcast %145 : vector<8x1xi1> to vector<8x32xi1>
    %147 = arith.select %146, %139, %112 : vector<8x32xi1>, vector<8x32xf32>
    %cst_47 = arith.constant 0.000000e+00 : f32
    %148 = vector.shape_cast %141 : vector<8x1xi1> to vector<8x1xi1>
    %149 = vector.broadcast %148 : vector<8x1xi1> to vector<8x32xi1>
    %150 = vector.broadcast %cst_47 : f32 to vector<8x32xf32>
    %151 = arith.select %149, %139, %150 : vector<8x32xi1>, vector<8x32xf32>
    %c24_48 = arith.constant 24 : index
    %c0_49 = arith.constant 0 : index
    %152 = vector.load %arg15[%c24_48, %c0_49] : memref<96x32xf32, #tpu.memory_space<vmem>>, vector<8x32xf32>
    tpu.vector_store %arg15[%c24_48, %c0_49], %151 {strides = array<i32>} : memref<96x32xf32, #tpu.memory_space<vmem>>, vector<8x32xf32>,
    %c32 = arith.constant 32 : index
    %c0_50 = arith.constant 0 : index
    %153 = vector.load %arg16[%c32, %c0_50] : memref<96x128xf32, #tpu.memory_space<vmem>>, vector<8x128xf32>
    %154 = arith.truncf %147 : vector<8x32xf32> to vector<8x32xbf16>
    %cst_51 = arith.constant dense<0.000000e+00> : vector<8x128xf32>
    %155 = tpu.matmul %154, %12, %cst_51 {dimension_numbers = #tpu.dot_dimension_numbers<[1], [0], [0], [1], [0, 0, 1, 1], [], []>} : vector<8x32xbf16>, vector<32x128xbf16>, vector<8x128xf32> -> vector<8x128xf32>
    %156 = arith.addf %153, %155 : vector<8x128xf32>
    %157 = arith.negf %156 : vector<8x128xf32>
    %158 = math.exp %157 : vector<8x128xf32>
    %cst_52 = arith.constant 1.000000e+00 : f32
    %159 = vector.broadcast %cst_52 : f32 to vector<8x128xf32>
    %160 = arith.addf %159, %158 : vector<8x128xf32>
    %161 = arith.divf %159, %160 : vector<8x128xf32>
    %162 = vector.extract_strided_slice %161 {offsets = [0, 0], sizes = [8, 32], strides = [1, 1]} : vector<8x128xf32> to vector<8x32xf32>
    %163 = vector.extract_strided_slice %161 {offsets = [0, 32], sizes = [8, 32], strides = [1, 1]} : vector<8x128xf32> to vector<8x32xf32>
    %164 = vector.extract_strided_slice %161 {offsets = [0, 64], sizes = [8, 32], strides = [1, 1]} : vector<8x128xf32> to vector<8x32xf32>
    %cst_53 = arith.constant 2.000000e+00 : f32
    %165 = vector.broadcast %cst_53 : f32 to vector<8x32xf32>
    %166 = arith.mulf %165, %164 : vector<8x32xf32>
    %cst_54 = arith.constant 1.000000e+00 : f32
    %167 = vector.broadcast %cst_54 : f32 to vector<8x32xf32>
    %168 = arith.subf %166, %167 : vector<8x32xf32>
    %169 = vector.extract_strided_slice %161 {offsets = [0, 96], sizes = [8, 32], strides = [1, 1]} : vector<8x128xf32> to vector<8x32xf32>
    %170 = arith.mulf %163, %144 : vector<8x32xf32>
    %171 = arith.mulf %162, %168 : vector<8x32xf32>
    %172 = arith.addf %170, %171 : vector<8x32xf32>
    %173 = math.tanh %172 : vector<8x32xf32>
    %174 = arith.mulf %169, %173 : vector<8x32xf32>
    %c4_i32 = arith.constant 4 : i32
    %175 = vector.broadcast %c4_i32 : i32 to vector<8x1xi32>
    %176 = arith.cmpi sgt, %0, %175 : vector<8x1xi32>
    %177 = vector.shape_cast %176 : vector<8x1xi1> to vector<8x1xi1>
    %178 = vector.broadcast %177 : vector<8x1xi1> to vector<8x32xi1>
    %179 = arith.select %178, %172, %144 : vector<8x32xi1>, vector<8x32xf32>
    %180 = vector.shape_cast %176 : vector<8x1xi1> to vector<8x1xi1>
    %181 = vector.broadcast %180 : vector<8x1xi1> to vector<8x32xi1>
    %182 = arith.select %181, %174, %147 : vector<8x32xi1>, vector<8x32xf32>
    %cst_55 = arith.constant 0.000000e+00 : f32
    %183 = vector.shape_cast %176 : vector<8x1xi1> to vector<8x1xi1>
    %184 = vector.broadcast %183 : vector<8x1xi1> to vector<8x32xi1>
    %185 = vector.broadcast %cst_55 : f32 to vector<8x32xf32>
    %186 = arith.select %184, %174, %185 : vector<8x32xi1>, vector<8x32xf32>
    %c32_56 = arith.constant 32 : index
    %c0_57 = arith.constant 0 : index
    %187 = vector.load %arg15[%c32_56, %c0_57] : memref<96x32xf32, #tpu.memory_space<vmem>>, vector<8x32xf32>
    tpu.vector_store %arg15[%c32_56, %c0_57], %186 {strides = array<i32>} : memref<96x32xf32, #tpu.memory_space<vmem>>, vector<8x32xf32>,
    %c40 = arith.constant 40 : index
    %c0_58 = arith.constant 0 : index
    %188 = vector.load %arg16[%c40, %c0_58] : memref<96x128xf32, #tpu.memory_space<vmem>>, vector<8x128xf32>
    %189 = arith.truncf %182 : vector<8x32xf32> to vector<8x32xbf16>
    %cst_59 = arith.constant dense<0.000000e+00> : vector<8x128xf32>
    %190 = tpu.matmul %189, %12, %cst_59 {dimension_numbers = #tpu.dot_dimension_numbers<[1], [0], [0], [1], [0, 0, 1, 1], [], []>} : vector<8x32xbf16>, vector<32x128xbf16>, vector<8x128xf32> -> vector<8x128xf32>
    %191 = arith.addf %188, %190 : vector<8x128xf32>
    %192 = arith.negf %191 : vector<8x128xf32>
    %193 = math.exp %192 : vector<8x128xf32>
    %cst_60 = arith.constant 1.000000e+00 : f32
    %194 = vector.broadcast %cst_60 : f32 to vector<8x128xf32>
    %195 = arith.addf %194, %193 : vector<8x128xf32>
    %196 = arith.divf %194, %195 : vector<8x128xf32>
    %197 = vector.extract_strided_slice %196 {offsets = [0, 0], sizes = [8, 32], strides = [1, 1]} : vector<8x128xf32> to vector<8x32xf32>
    %198 = vector.extract_strided_slice %196 {offsets = [0, 32], sizes = [8, 32], strides = [1, 1]} : vector<8x128xf32> to vector<8x32xf32>
    %199 = vector.extract_strided_slice %196 {offsets = [0, 64], sizes = [8, 32], strides = [1, 1]} : vector<8x128xf32> to vector<8x32xf32>
    %cst_61 = arith.constant 2.000000e+00 : f32
    %200 = vector.broadcast %cst_61 : f32 to vector<8x32xf32>
    %201 = arith.mulf %200, %199 : vector<8x32xf32>
    %cst_62 = arith.constant 1.000000e+00 : f32
    %202 = vector.broadcast %cst_62 : f32 to vector<8x32xf32>
    %203 = arith.subf %201, %202 : vector<8x32xf32>
    %204 = vector.extract_strided_slice %196 {offsets = [0, 96], sizes = [8, 32], strides = [1, 1]} : vector<8x128xf32> to vector<8x32xf32>
    %205 = arith.mulf %198, %179 : vector<8x32xf32>
    %206 = arith.mulf %197, %203 : vector<8x32xf32>
    %207 = arith.addf %205, %206 : vector<8x32xf32>
    %208 = math.tanh %207 : vector<8x32xf32>
    %209 = arith.mulf %204, %208 : vector<8x32xf32>
    %c5_i32 = arith.constant 5 : i32
    %210 = vector.broadcast %c5_i32 : i32 to vector<8x1xi32>
    %211 = arith.cmpi sgt, %0, %210 : vector<8x1xi32>
    %212 = vector.shape_cast %211 : vector<8x1xi1> to vector<8x1xi1>
    %213 = vector.broadcast %212 : vector<8x1xi1> to vector<8x32xi1>
    %214 = arith.select %213, %207, %179 : vector<8x32xi1>, vector<8x32xf32>
    %215 = vector.shape_cast %211 : vector<8x1xi1> to vector<8x1xi1>
    %216 = vector.broadcast %215 : vector<8x1xi1> to vector<8x32xi1>
    %217 = arith.select %216, %209, %182 : vector<8x32xi1>, vector<8x32xf32>
    %cst_63 = arith.constant 0.000000e+00 : f32
    %218 = vector.shape_cast %211 : vector<8x1xi1> to vector<8x1xi1>
    %219 = vector.broadcast %218 : vector<8x1xi1> to vector<8x32xi1>
    %220 = vector.broadcast %cst_63 : f32 to vector<8x32xf32>
    %221 = arith.select %219, %209, %220 : vector<8x32xi1>, vector<8x32xf32>
    %c40_64 = arith.constant 40 : index
    %c0_65 = arith.constant 0 : index
    %222 = vector.load %arg15[%c40_64, %c0_65] : memref<96x32xf32, #tpu.memory_space<vmem>>, vector<8x32xf32>
    tpu.vector_store %arg15[%c40_64, %c0_65], %221 {strides = array<i32>} : memref<96x32xf32, #tpu.memory_space<vmem>>, vector<8x32xf32>,
    %c48 = arith.constant 48 : index
    %c0_66 = arith.constant 0 : index
    %223 = vector.load %arg16[%c48, %c0_66] : memref<96x128xf32, #tpu.memory_space<vmem>>, vector<8x128xf32>
    %224 = arith.truncf %217 : vector<8x32xf32> to vector<8x32xbf16>
    %cst_67 = arith.constant dense<0.000000e+00> : vector<8x128xf32>
    %225 = tpu.matmul %224, %12, %cst_67 {dimension_numbers = #tpu.dot_dimension_numbers<[1], [0], [0], [1], [0, 0, 1, 1], [], []>} : vector<8x32xbf16>, vector<32x128xbf16>, vector<8x128xf32> -> vector<8x128xf32>
    %226 = arith.addf %223, %225 : vector<8x128xf32>
    %227 = arith.negf %226 : vector<8x128xf32>
    %228 = math.exp %227 : vector<8x128xf32>
    %cst_68 = arith.constant 1.000000e+00 : f32
    %229 = vector.broadcast %cst_68 : f32 to vector<8x128xf32>
    %230 = arith.addf %229, %228 : vector<8x128xf32>
    %231 = arith.divf %229, %230 : vector<8x128xf32>
    %232 = vector.extract_strided_slice %231 {offsets = [0, 0], sizes = [8, 32], strides = [1, 1]} : vector<8x128xf32> to vector<8x32xf32>
    %233 = vector.extract_strided_slice %231 {offsets = [0, 32], sizes = [8, 32], strides = [1, 1]} : vector<8x128xf32> to vector<8x32xf32>
    %234 = vector.extract_strided_slice %231 {offsets = [0, 64], sizes = [8, 32], strides = [1, 1]} : vector<8x128xf32> to vector<8x32xf32>
    %cst_69 = arith.constant 2.000000e+00 : f32
    %235 = vector.broadcast %cst_69 : f32 to vector<8x32xf32>
    %236 = arith.mulf %235, %234 : vector<8x32xf32>
    %cst_70 = arith.constant 1.000000e+00 : f32
    %237 = vector.broadcast %cst_70 : f32 to vector<8x32xf32>
    %238 = arith.subf %236, %237 : vector<8x32xf32>
    %239 = vector.extract_strided_slice %231 {offsets = [0, 96], sizes = [8, 32], strides = [1, 1]} : vector<8x128xf32> to vector<8x32xf32>
    %240 = arith.mulf %233, %214 : vector<8x32xf32>
    %241 = arith.mulf %232, %238 : vector<8x32xf32>
    %242 = arith.addf %240, %241 : vector<8x32xf32>
    %243 = math.tanh %242 : vector<8x32xf32>
    %244 = arith.mulf %239, %243 : vector<8x32xf32>
    %c6_i32 = arith.constant 6 : i32
    %245 = vector.broadcast %c6_i32 : i32 to vector<8x1xi32>
    %246 = arith.cmpi sgt, %0, %245 : vector<8x1xi32>
    %247 = vector.shape_cast %246 : vector<8x1xi1> to vector<8x1xi1>
    %248 = vector.broadcast %247 : vector<8x1xi1> to vector<8x32xi1>
    %249 = arith.select %248, %242, %214 : vector<8x32xi1>, vector<8x32xf32>
    %250 = vector.shape_cast %246 : vector<8x1xi1> to vector<8x1xi1>
    %251 = vector.broadcast %250 : vector<8x1xi1> to vector<8x32xi1>
    %252 = arith.select %251, %244, %217 : vector<8x32xi1>, vector<8x32xf32>
    %cst_71 = arith.constant 0.000000e+00 : f32
    %253 = vector.shape_cast %246 : vector<8x1xi1> to vector<8x1xi1>
    %254 = vector.broadcast %253 : vector<8x1xi1> to vector<8x32xi1>
    %255 = vector.broadcast %cst_71 : f32 to vector<8x32xf32>
    %256 = arith.select %254, %244, %255 : vector<8x32xi1>, vector<8x32xf32>
    %c48_72 = arith.constant 48 : index
    %c0_73 = arith.constant 0 : index
    %257 = vector.load %arg15[%c48_72, %c0_73] : memref<96x32xf32, #tpu.memory_space<vmem>>, vector<8x32xf32>
    tpu.vector_store %arg15[%c48_72, %c0_73], %256 {strides = array<i32>} : memref<96x32xf32, #tpu.memory_space<vmem>>, vector<8x32xf32>,
    %c56 = arith.constant 56 : index
    %c0_74 = arith.constant 0 : index
    %258 = vector.load %arg16[%c56, %c0_74] : memref<96x128xf32, #tpu.memory_space<vmem>>, vector<8x128xf32>
    %259 = arith.truncf %252 : vector<8x32xf32> to vector<8x32xbf16>
    %cst_75 = arith.constant dense<0.000000e+00> : vector<8x128xf32>
    %260 = tpu.matmul %259, %12, %cst_75 {dimension_numbers = #tpu.dot_dimension_numbers<[1], [0], [0], [1], [0, 0, 1, 1], [], []>} : vector<8x32xbf16>, vector<32x128xbf16>, vector<8x128xf32> -> vector<8x128xf32>
    %261 = arith.addf %258, %260 : vector<8x128xf32>
    %262 = arith.negf %261 : vector<8x128xf32>
    %263 = math.exp %262 : vector<8x128xf32>
    %cst_76 = arith.constant 1.000000e+00 : f32
    %264 = vector.broadcast %cst_76 : f32 to vector<8x128xf32>
    %265 = arith.addf %264, %263 : vector<8x128xf32>
    %266 = arith.divf %264, %265 : vector<8x128xf32>
    %267 = vector.extract_strided_slice %266 {offsets = [0, 0], sizes = [8, 32], strides = [1, 1]} : vector<8x128xf32> to vector<8x32xf32>
    %268 = vector.extract_strided_slice %266 {offsets = [0, 32], sizes = [8, 32], strides = [1, 1]} : vector<8x128xf32> to vector<8x32xf32>
    %269 = vector.extract_strided_slice %266 {offsets = [0, 64], sizes = [8, 32], strides = [1, 1]} : vector<8x128xf32> to vector<8x32xf32>
    %cst_77 = arith.constant 2.000000e+00 : f32
    %270 = vector.broadcast %cst_77 : f32 to vector<8x32xf32>
    %271 = arith.mulf %270, %269 : vector<8x32xf32>
    %cst_78 = arith.constant 1.000000e+00 : f32
    %272 = vector.broadcast %cst_78 : f32 to vector<8x32xf32>
    %273 = arith.subf %271, %272 : vector<8x32xf32>
    %274 = vector.extract_strided_slice %266 {offsets = [0, 96], sizes = [8, 32], strides = [1, 1]} : vector<8x128xf32> to vector<8x32xf32>
    %275 = arith.mulf %268, %249 : vector<8x32xf32>
    %276 = arith.mulf %267, %273 : vector<8x32xf32>
    %277 = arith.addf %275, %276 : vector<8x32xf32>
    %278 = math.tanh %277 : vector<8x32xf32>
    %279 = arith.mulf %274, %278 : vector<8x32xf32>
    %c7_i32 = arith.constant 7 : i32
    %280 = vector.broadcast %c7_i32 : i32 to vector<8x1xi32>
    %281 = arith.cmpi sgt, %0, %280 : vector<8x1xi32>
    %282 = vector.shape_cast %281 : vector<8x1xi1> to vector<8x1xi1>
    %283 = vector.broadcast %282 : vector<8x1xi1> to vector<8x32xi1>
    %284 = arith.select %283, %277, %249 : vector<8x32xi1>, vector<8x32xf32>
    %285 = vector.shape_cast %281 : vector<8x1xi1> to vector<8x1xi1>
    %286 = vector.broadcast %285 : vector<8x1xi1> to vector<8x32xi1>
    %287 = arith.select %286, %279, %252 : vector<8x32xi1>, vector<8x32xf32>
    %cst_79 = arith.constant 0.000000e+00 : f32
    %288 = vector.shape_cast %281 : vector<8x1xi1> to vector<8x1xi1>
    %289 = vector.broadcast %288 : vector<8x1xi1> to vector<8x32xi1>
    %290 = vector.broadcast %cst_79 : f32 to vector<8x32xf32>
    %291 = arith.select %289, %279, %290 : vector<8x32xi1>, vector<8x32xf32>
    %c56_80 = arith.constant 56 : index
    %c0_81 = arith.constant 0 : index
    %292 = vector.load %arg15[%c56_80, %c0_81] : memref<96x32xf32, #tpu.memory_space<vmem>>, vector<8x32xf32>
    tpu.vector_store %arg15[%c56_80, %c0_81], %291 {strides = array<i32>} : memref<96x32xf32, #tpu.memory_space<vmem>>, vector<8x32xf32>,
    %c64 = arith.constant 64 : index
    %c0_82 = arith.constant 0 : index
    %293 = vector.load %arg16[%c64, %c0_82] : memref<96x128xf32, #tpu.memory_space<vmem>>, vector<8x128xf32>
    %294 = arith.truncf %287 : vector<8x32xf32> to vector<8x32xbf16>
    %cst_83 = arith.constant dense<0.000000e+00> : vector<8x128xf32>
    %295 = tpu.matmul %294, %12, %cst_83 {dimension_numbers = #tpu.dot_dimension_numbers<[1], [0], [0], [1], [0, 0, 1, 1], [], []>} : vector<8x32xbf16>, vector<32x128xbf16>, vector<8x128xf32> -> vector<8x128xf32>
    %296 = arith.addf %293, %295 : vector<8x128xf32>
    %297 = arith.negf %296 : vector<8x128xf32>
    %298 = math.exp %297 : vector<8x128xf32>
    %cst_84 = arith.constant 1.000000e+00 : f32
    %299 = vector.broadcast %cst_84 : f32 to vector<8x128xf32>
    %300 = arith.addf %299, %298 : vector<8x128xf32>
    %301 = arith.divf %299, %300 : vector<8x128xf32>
    %302 = vector.extract_strided_slice %301 {offsets = [0, 0], sizes = [8, 32], strides = [1, 1]} : vector<8x128xf32> to vector<8x32xf32>
    %303 = vector.extract_strided_slice %301 {offsets = [0, 32], sizes = [8, 32], strides = [1, 1]} : vector<8x128xf32> to vector<8x32xf32>
    %304 = vector.extract_strided_slice %301 {offsets = [0, 64], sizes = [8, 32], strides = [1, 1]} : vector<8x128xf32> to vector<8x32xf32>
    %cst_85 = arith.constant 2.000000e+00 : f32
    %305 = vector.broadcast %cst_85 : f32 to vector<8x32xf32>
    %306 = arith.mulf %305, %304 : vector<8x32xf32>
    %cst_86 = arith.constant 1.000000e+00 : f32
    %307 = vector.broadcast %cst_86 : f32 to vector<8x32xf32>
    %308 = arith.subf %306, %307 : vector<8x32xf32>
    %309 = vector.extract_strided_slice %301 {offsets = [0, 96], sizes = [8, 32], strides = [1, 1]} : vector<8x128xf32> to vector<8x32xf32>
    %310 = arith.mulf %303, %284 : vector<8x32xf32>
    %311 = arith.mulf %302, %308 : vector<8x32xf32>
    %312 = arith.addf %310, %311 : vector<8x32xf32>
    %313 = math.tanh %312 : vector<8x32xf32>
    %314 = arith.mulf %309, %313 : vector<8x32xf32>
    %c8_i32 = arith.constant 8 : i32
    %315 = vector.broadcast %c8_i32 : i32 to vector<8x1xi32>
    %316 = arith.cmpi sgt, %0, %315 : vector<8x1xi32>
    %317 = vector.shape_cast %316 : vector<8x1xi1> to vector<8x1xi1>
    %318 = vector.broadcast %317 : vector<8x1xi1> to vector<8x32xi1>
    %319 = arith.select %318, %312, %284 : vector<8x32xi1>, vector<8x32xf32>
    %320 = vector.shape_cast %316 : vector<8x1xi1> to vector<8x1xi1>
    %321 = vector.broadcast %320 : vector<8x1xi1> to vector<8x32xi1>
    %322 = arith.select %321, %314, %287 : vector<8x32xi1>, vector<8x32xf32>
    %cst_87 = arith.constant 0.000000e+00 : f32
    %323 = vector.shape_cast %316 : vector<8x1xi1> to vector<8x1xi1>
    %324 = vector.broadcast %323 : vector<8x1xi1> to vector<8x32xi1>
    %325 = vector.broadcast %cst_87 : f32 to vector<8x32xf32>
    %326 = arith.select %324, %314, %325 : vector<8x32xi1>, vector<8x32xf32>
    %c64_88 = arith.constant 64 : index
    %c0_89 = arith.constant 0 : index
    %327 = vector.load %arg15[%c64_88, %c0_89] : memref<96x32xf32, #tpu.memory_space<vmem>>, vector<8x32xf32>
    tpu.vector_store %arg15[%c64_88, %c0_89], %326 {strides = array<i32>} : memref<96x32xf32, #tpu.memory_space<vmem>>, vector<8x32xf32>,
    %c72 = arith.constant 72 : index
    %c0_90 = arith.constant 0 : index
    %328 = vector.load %arg16[%c72, %c0_90] : memref<96x128xf32, #tpu.memory_space<vmem>>, vector<8x128xf32>
    %329 = arith.truncf %322 : vector<8x32xf32> to vector<8x32xbf16>
    %cst_91 = arith.constant dense<0.000000e+00> : vector<8x128xf32>
    %330 = tpu.matmul %329, %12, %cst_91 {dimension_numbers = #tpu.dot_dimension_numbers<[1], [0], [0], [1], [0, 0, 1, 1], [], []>} : vector<8x32xbf16>, vector<32x128xbf16>, vector<8x128xf32> -> vector<8x128xf32>
    %331 = arith.addf %328, %330 : vector<8x128xf32>
    %332 = arith.negf %331 : vector<8x128xf32>
    %333 = math.exp %332 : vector<8x128xf32>
    %cst_92 = arith.constant 1.000000e+00 : f32
    %334 = vector.broadcast %cst_92 : f32 to vector<8x128xf32>
    %335 = arith.addf %334, %333 : vector<8x128xf32>
    %336 = arith.divf %334, %335 : vector<8x128xf32>
    %337 = vector.extract_strided_slice %336 {offsets = [0, 0], sizes = [8, 32], strides = [1, 1]} : vector<8x128xf32> to vector<8x32xf32>
    %338 = vector.extract_strided_slice %336 {offsets = [0, 32], sizes = [8, 32], strides = [1, 1]} : vector<8x128xf32> to vector<8x32xf32>
    %339 = vector.extract_strided_slice %336 {offsets = [0, 64], sizes = [8, 32], strides = [1, 1]} : vector<8x128xf32> to vector<8x32xf32>
    %cst_93 = arith.constant 2.000000e+00 : f32
    %340 = vector.broadcast %cst_93 : f32 to vector<8x32xf32>
    %341 = arith.mulf %340, %339 : vector<8x32xf32>
    %cst_94 = arith.constant 1.000000e+00 : f32
    %342 = vector.broadcast %cst_94 : f32 to vector<8x32xf32>
    %343 = arith.subf %341, %342 : vector<8x32xf32>
    %344 = vector.extract_strided_slice %336 {offsets = [0, 96], sizes = [8, 32], strides = [1, 1]} : vector<8x128xf32> to vector<8x32xf32>
    %345 = arith.mulf %338, %319 : vector<8x32xf32>
    %346 = arith.mulf %337, %343 : vector<8x32xf32>
    %347 = arith.addf %345, %346 : vector<8x32xf32>
    %348 = math.tanh %347 : vector<8x32xf32>
    %349 = arith.mulf %344, %348 : vector<8x32xf32>
    %c9_i32 = arith.constant 9 : i32
    %350 = vector.broadcast %c9_i32 : i32 to vector<8x1xi32>
    %351 = arith.cmpi sgt, %0, %350 : vector<8x1xi32>
    %352 = vector.shape_cast %351 : vector<8x1xi1> to vector<8x1xi1>
    %353 = vector.broadcast %352 : vector<8x1xi1> to vector<8x32xi1>
    %354 = arith.select %353, %347, %319 : vector<8x32xi1>, vector<8x32xf32>
    %355 = vector.shape_cast %351 : vector<8x1xi1> to vector<8x1xi1>
    %356 = vector.broadcast %355 : vector<8x1xi1> to vector<8x32xi1>
    %357 = arith.select %356, %349, %322 : vector<8x32xi1>, vector<8x32xf32>
    %cst_95 = arith.constant 0.000000e+00 : f32
    %358 = vector.shape_cast %351 : vector<8x1xi1> to vector<8x1xi1>
    %359 = vector.broadcast %358 : vector<8x1xi1> to vector<8x32xi1>
    %360 = vector.broadcast %cst_95 : f32 to vector<8x32xf32>
    %361 = arith.select %359, %349, %360 : vector<8x32xi1>, vector<8x32xf32>
    %c72_96 = arith.constant 72 : index
    %c0_97 = arith.constant 0 : index
    %362 = vector.load %arg15[%c72_96, %c0_97] : memref<96x32xf32, #tpu.memory_space<vmem>>, vector<8x32xf32>
    tpu.vector_store %arg15[%c72_96, %c0_97], %361 {strides = array<i32>} : memref<96x32xf32, #tpu.memory_space<vmem>>, vector<8x32xf32>,
    %c80 = arith.constant 80 : index
    %c0_98 = arith.constant 0 : index
    %363 = vector.load %arg16[%c80, %c0_98] : memref<96x128xf32, #tpu.memory_space<vmem>>, vector<8x128xf32>
    %364 = arith.truncf %357 : vector<8x32xf32> to vector<8x32xbf16>
    %cst_99 = arith.constant dense<0.000000e+00> : vector<8x128xf32>
    %365 = tpu.matmul %364, %12, %cst_99 {dimension_numbers = #tpu.dot_dimension_numbers<[1], [0], [0], [1], [0, 0, 1, 1], [], []>} : vector<8x32xbf16>, vector<32x128xbf16>, vector<8x128xf32> -> vector<8x128xf32>
    %366 = arith.addf %363, %365 : vector<8x128xf32>
    %367 = arith.negf %366 : vector<8x128xf32>
    %368 = math.exp %367 : vector<8x128xf32>
    %cst_100 = arith.constant 1.000000e+00 : f32
    %369 = vector.broadcast %cst_100 : f32 to vector<8x128xf32>
    %370 = arith.addf %369, %368 : vector<8x128xf32>
    %371 = arith.divf %369, %370 : vector<8x128xf32>
    %372 = vector.extract_strided_slice %371 {offsets = [0, 0], sizes = [8, 32], strides = [1, 1]} : vector<8x128xf32> to vector<8x32xf32>
    %373 = vector.extract_strided_slice %371 {offsets = [0, 32], sizes = [8, 32], strides = [1, 1]} : vector<8x128xf32> to vector<8x32xf32>
    %374 = vector.extract_strided_slice %371 {offsets = [0, 64], sizes = [8, 32], strides = [1, 1]} : vector<8x128xf32> to vector<8x32xf32>
    %cst_101 = arith.constant 2.000000e+00 : f32
    %375 = vector.broadcast %cst_101 : f32 to vector<8x32xf32>
    %376 = arith.mulf %375, %374 : vector<8x32xf32>
    %cst_102 = arith.constant 1.000000e+00 : f32
    %377 = vector.broadcast %cst_102 : f32 to vector<8x32xf32>
    %378 = arith.subf %376, %377 : vector<8x32xf32>
    %379 = vector.extract_strided_slice %371 {offsets = [0, 96], sizes = [8, 32], strides = [1, 1]} : vector<8x128xf32> to vector<8x32xf32>
    %380 = arith.mulf %373, %354 : vector<8x32xf32>
    %381 = arith.mulf %372, %378 : vector<8x32xf32>
    %382 = arith.addf %380, %381 : vector<8x32xf32>
    %383 = math.tanh %382 : vector<8x32xf32>
    %384 = arith.mulf %379, %383 : vector<8x32xf32>
    %c10_i32 = arith.constant 10 : i32
    %385 = vector.broadcast %c10_i32 : i32 to vector<8x1xi32>
    %386 = arith.cmpi sgt, %0, %385 : vector<8x1xi32>
    %387 = vector.shape_cast %386 : vector<8x1xi1> to vector<8x1xi1>
    %388 = vector.broadcast %387 : vector<8x1xi1> to vector<8x32xi1>
    %389 = arith.select %388, %382, %354 : vector<8x32xi1>, vector<8x32xf32>
    %390 = vector.shape_cast %386 : vector<8x1xi1> to vector<8x1xi1>
    %391 = vector.broadcast %390 : vector<8x1xi1> to vector<8x32xi1>
    %392 = arith.select %391, %384, %357 : vector<8x32xi1>, vector<8x32xf32>
    %cst_103 = arith.constant 0.000000e+00 : f32
    %393 = vector.shape_cast %386 : vector<8x1xi1> to vector<8x1xi1>
    %394 = vector.broadcast %393 : vector<8x1xi1> to vector<8x32xi1>
    %395 = vector.broadcast %cst_103 : f32 to vector<8x32xf32>
    %396 = arith.select %394, %384, %395 : vector<8x32xi1>, vector<8x32xf32>
    %c80_104 = arith.constant 80 : index
    %c0_105 = arith.constant 0 : index
    %397 = vector.load %arg15[%c80_104, %c0_105] : memref<96x32xf32, #tpu.memory_space<vmem>>, vector<8x32xf32>
    tpu.vector_store %arg15[%c80_104, %c0_105], %396 {strides = array<i32>} : memref<96x32xf32, #tpu.memory_space<vmem>>, vector<8x32xf32>,
    %c88 = arith.constant 88 : index
    %c0_106 = arith.constant 0 : index
    %398 = vector.load %arg16[%c88, %c0_106] : memref<96x128xf32, #tpu.memory_space<vmem>>, vector<8x128xf32>
    %399 = arith.truncf %392 : vector<8x32xf32> to vector<8x32xbf16>
    %cst_107 = arith.constant dense<0.000000e+00> : vector<8x128xf32>
    %400 = tpu.matmul %399, %12, %cst_107 {dimension_numbers = #tpu.dot_dimension_numbers<[1], [0], [0], [1], [0, 0, 1, 1], [], []>} : vector<8x32xbf16>, vector<32x128xbf16>, vector<8x128xf32> -> vector<8x128xf32>
    %401 = arith.addf %398, %400 : vector<8x128xf32>
    %402 = arith.negf %401 : vector<8x128xf32>
    %403 = math.exp %402 : vector<8x128xf32>
    %cst_108 = arith.constant 1.000000e+00 : f32
    %404 = vector.broadcast %cst_108 : f32 to vector<8x128xf32>
    %405 = arith.addf %404, %403 : vector<8x128xf32>
    %406 = arith.divf %404, %405 : vector<8x128xf32>
    %407 = vector.extract_strided_slice %406 {offsets = [0, 0], sizes = [8, 32], strides = [1, 1]} : vector<8x128xf32> to vector<8x32xf32>
    %408 = vector.extract_strided_slice %406 {offsets = [0, 32], sizes = [8, 32], strides = [1, 1]} : vector<8x128xf32> to vector<8x32xf32>
    %409 = vector.extract_strided_slice %406 {offsets = [0, 64], sizes = [8, 32], strides = [1, 1]} : vector<8x128xf32> to vector<8x32xf32>
    %cst_109 = arith.constant 2.000000e+00 : f32
    %410 = vector.broadcast %cst_109 : f32 to vector<8x32xf32>
    %411 = arith.mulf %410, %409 : vector<8x32xf32>
    %cst_110 = arith.constant 1.000000e+00 : f32
    %412 = vector.broadcast %cst_110 : f32 to vector<8x32xf32>
    %413 = arith.subf %411, %412 : vector<8x32xf32>
    %414 = vector.extract_strided_slice %406 {offsets = [0, 96], sizes = [8, 32], strides = [1, 1]} : vector<8x128xf32> to vector<8x32xf32>
    %415 = arith.mulf %408, %389 : vector<8x32xf32>
    %416 = arith.mulf %407, %413 : vector<8x32xf32>
    %417 = arith.addf %415, %416 : vector<8x32xf32>
    %418 = math.tanh %417 : vector<8x32xf32>
    %419 = arith.mulf %414, %418 : vector<8x32xf32>
    %c11_i32 = arith.constant 11 : i32
    %420 = vector.broadcast %c11_i32 : i32 to vector<8x1xi32>
    %421 = arith.cmpi sgt, %0, %420 : vector<8x1xi32>
    %cst_111 = arith.constant 0.000000e+00 : f32
    %422 = vector.shape_cast %421 : vector<8x1xi1> to vector<8x1xi1>
    %423 = vector.broadcast %422 : vector<8x1xi1> to vector<8x32xi1>
    %424 = vector.broadcast %cst_111 : f32 to vector<8x32xf32>
    %425 = arith.select %423, %419, %424 : vector<8x32xi1>, vector<8x32xf32>
    %c88_112 = arith.constant 88 : index
    %c0_113 = arith.constant 0 : index
    %426 = vector.load %arg15[%c88_112, %c0_113] : memref<96x32xf32, #tpu.memory_space<vmem>>, vector<8x32xf32>
    tpu.vector_store %arg15[%c88_112, %c0_113], %425 {strides = array<i32>} : memref<96x32xf32, #tpu.memory_space<vmem>>, vector<8x32xf32>,
    %c0_114 = arith.constant 0 : index
    %c0_115 = arith.constant 0 : index
    %427 = vector.load %arg15[%c0_114, %c0_115] : memref<96x32xf32, #tpu.memory_space<vmem>>, vector<96x32xf32>
    %428 = arith.truncf %427 : vector<96x32xf32> to vector<96x32xbf16>
    %c0_116 = arith.constant 0 : index
    %c0_117 = arith.constant 0 : index
    %429 = vector.load %arg7[%c0_116, %c0_117] : memref<32x128xbf16, #tpu.memory_space<vmem>>, vector<32x128xbf16>
    %cst_118 = arith.constant dense<0.000000e+00> : vector<96x128xf32>
    %430 = tpu.matmul %428, %429, %cst_118 {dimension_numbers = #tpu.dot_dimension_numbers<[1], [0], [0], [1], [0, 0, 1, 1], [], []>} : vector<96x32xbf16>, vector<32x128xbf16>, vector<96x128xf32> -> vector<96x128xf32>
    %c0_119 = arith.constant 0 : index
    %c0_120 = arith.constant 0 : index
    %431 = vector.load %arg9[%c0_119, %c0_120] : memref<1x128xf32, #tpu.memory_space<vmem>>, vector<1x128xf32>
    %432 = vector.broadcast %431 : vector<1x128xf32> to vector<96x128xf32>
    %433 = arith.addf %430, %432 : vector<96x128xf32>
    %c0_121 = arith.constant 0 : index
    %c0_122 = arith.constant 0 : index
    %434 = vector.load %arg16[%c0_121, %c0_122] : memref<96x128xf32, #tpu.memory_space<vmem>>, vector<96x128xf32>
    tpu.vector_store %arg16[%c0_121, %c0_122], %433 {strides = array<i32>} : memref<96x128xf32, #tpu.memory_space<vmem>>, vector<96x128xf32>,
    %c1 = arith.constant 1 : index
    %c0_123 = arith.constant 0 : index
    %c0_124 = arith.constant 0 : index
    %435 = vector.load %arg10[%c1, %c0_123, %c0_124] : memref<2x8x32xf32, #tpu.memory_space<vmem>>, vector<1x8x32xf32>
    %436 = vector.shape_cast %435 : vector<1x8x32xf32> to vector<8x32xf32>
    %c1_125 = arith.constant 1 : index
    %c0_126 = arith.constant 0 : index
    %c0_127 = arith.constant 0 : index
    %437 = vector.load %arg11[%c1_125, %c0_126, %c0_127] : memref<2x8x32xf32, #tpu.memory_space<vmem>>, vector<1x8x32xf32>
    %438 = vector.shape_cast %437 : vector<1x8x32xf32> to vector<8x32xf32>
    %c0_128 = arith.constant 0 : index
    %c0_129 = arith.constant 0 : index
    %439 = vector.load %arg8[%c0_128, %c0_129] : memref<32x128xbf16, #tpu.memory_space<vmem>>, vector<32x128xbf16>
    %c0_130 = arith.constant 0 : index
    %c0_131 = arith.constant 0 : index
    %440 = vector.load %arg16[%c0_130, %c0_131] : memref<96x128xf32, #tpu.memory_space<vmem>>, vector<8x128xf32>
    %441 = arith.truncf %436 : vector<8x32xf32> to vector<8x32xbf16>
    %cst_132 = arith.constant dense<0.000000e+00> : vector<8x128xf32>
    %442 = tpu.matmul %441, %439, %cst_132 {dimension_numbers = #tpu.dot_dimension_numbers<[1], [0], [0], [1], [0, 0, 1, 1], [], []>} : vector<8x32xbf16>, vector<32x128xbf16>, vector<8x128xf32> -> vector<8x128xf32>
    %443 = arith.addf %440, %442 : vector<8x128xf32>
    %444 = arith.negf %443 : vector<8x128xf32>
    %445 = math.exp %444 : vector<8x128xf32>
    %cst_133 = arith.constant 1.000000e+00 : f32
    %446 = vector.broadcast %cst_133 : f32 to vector<8x128xf32>
    %447 = arith.addf %446, %445 : vector<8x128xf32>
    %448 = arith.divf %446, %447 : vector<8x128xf32>
    %449 = vector.extract_strided_slice %448 {offsets = [0, 0], sizes = [8, 32], strides = [1, 1]} : vector<8x128xf32> to vector<8x32xf32>
    %450 = vector.extract_strided_slice %448 {offsets = [0, 32], sizes = [8, 32], strides = [1, 1]} : vector<8x128xf32> to vector<8x32xf32>
    %451 = vector.extract_strided_slice %448 {offsets = [0, 64], sizes = [8, 32], strides = [1, 1]} : vector<8x128xf32> to vector<8x32xf32>
    %cst_134 = arith.constant 2.000000e+00 : f32
    %452 = vector.broadcast %cst_134 : f32 to vector<8x32xf32>
    %453 = arith.mulf %452, %451 : vector<8x32xf32>
    %cst_135 = arith.constant 1.000000e+00 : f32
    %454 = vector.broadcast %cst_135 : f32 to vector<8x32xf32>
    %455 = arith.subf %453, %454 : vector<8x32xf32>
    %456 = vector.extract_strided_slice %448 {offsets = [0, 96], sizes = [8, 32], strides = [1, 1]} : vector<8x128xf32> to vector<8x32xf32>
    %457 = arith.mulf %450, %438 : vector<8x32xf32>
    %458 = arith.mulf %449, %455 : vector<8x32xf32>
    %459 = arith.addf %457, %458 : vector<8x32xf32>
    %460 = math.tanh %459 : vector<8x32xf32>
    %461 = arith.mulf %456, %460 : vector<8x32xf32>
    %c0_i32_136 = arith.constant 0 : i32
    %462 = vector.broadcast %c0_i32_136 : i32 to vector<8x1xi32>
    %463 = arith.cmpi sgt, %0, %462 : vector<8x1xi32>
    %464 = vector.shape_cast %463 : vector<8x1xi1> to vector<8x1xi1>
    %465 = vector.broadcast %464 : vector<8x1xi1> to vector<8x32xi1>
    %466 = arith.select %465, %459, %438 : vector<8x32xi1>, vector<8x32xf32>
    %467 = vector.shape_cast %463 : vector<8x1xi1> to vector<8x1xi1>
    %468 = vector.broadcast %467 : vector<8x1xi1> to vector<8x32xi1>
    %469 = arith.select %468, %461, %436 : vector<8x32xi1>, vector<8x32xf32>
    %cst_137 = arith.constant 0.000000e+00 : f32
    %470 = vector.shape_cast %463 : vector<8x1xi1> to vector<8x1xi1>
    %471 = vector.broadcast %470 : vector<8x1xi1> to vector<8x32xi1>
    %472 = vector.broadcast %cst_137 : f32 to vector<8x32xf32>
    %473 = arith.select %471, %461, %472 : vector<8x32xi1>, vector<8x32xf32>
    %c0_138 = arith.constant 0 : index
    %c0_139 = arith.constant 0 : index
    %474 = vector.load %arg15[%c0_138, %c0_139] : memref<96x32xf32, #tpu.memory_space<vmem>>, vector<8x32xf32>
    tpu.vector_store %arg15[%c0_138, %c0_139], %473 {strides = array<i32>} : memref<96x32xf32, #tpu.memory_space<vmem>>, vector<8x32xf32>,
    %c8_140 = arith.constant 8 : index
    %c0_141 = arith.constant 0 : index
    %475 = vector.load %arg16[%c8_140, %c0_141] : memref<96x128xf32, #tpu.memory_space<vmem>>, vector<8x128xf32>
    %476 = arith.truncf %469 : vector<8x32xf32> to vector<8x32xbf16>
    %cst_142 = arith.constant dense<0.000000e+00> : vector<8x128xf32>
    %477 = tpu.matmul %476, %439, %cst_142 {dimension_numbers = #tpu.dot_dimension_numbers<[1], [0], [0], [1], [0, 0, 1, 1], [], []>} : vector<8x32xbf16>, vector<32x128xbf16>, vector<8x128xf32> -> vector<8x128xf32>
    %478 = arith.addf %475, %477 : vector<8x128xf32>
    %479 = arith.negf %478 : vector<8x128xf32>
    %480 = math.exp %479 : vector<8x128xf32>
    %cst_143 = arith.constant 1.000000e+00 : f32
    %481 = vector.broadcast %cst_143 : f32 to vector<8x128xf32>
    %482 = arith.addf %481, %480 : vector<8x128xf32>
    %483 = arith.divf %481, %482 : vector<8x128xf32>
    %484 = vector.extract_strided_slice %483 {offsets = [0, 0], sizes = [8, 32], strides = [1, 1]} : vector<8x128xf32> to vector<8x32xf32>
    %485 = vector.extract_strided_slice %483 {offsets = [0, 32], sizes = [8, 32], strides = [1, 1]} : vector<8x128xf32> to vector<8x32xf32>
    %486 = vector.extract_strided_slice %483 {offsets = [0, 64], sizes = [8, 32], strides = [1, 1]} : vector<8x128xf32> to vector<8x32xf32>
    %cst_144 = arith.constant 2.000000e+00 : f32
    %487 = vector.broadcast %cst_144 : f32 to vector<8x32xf32>
    %488 = arith.mulf %487, %486 : vector<8x32xf32>
    %cst_145 = arith.constant 1.000000e+00 : f32
    %489 = vector.broadcast %cst_145 : f32 to vector<8x32xf32>
    %490 = arith.subf %488, %489 : vector<8x32xf32>
    %491 = vector.extract_strided_slice %483 {offsets = [0, 96], sizes = [8, 32], strides = [1, 1]} : vector<8x128xf32> to vector<8x32xf32>
    %492 = arith.mulf %485, %466 : vector<8x32xf32>
    %493 = arith.mulf %484, %490 : vector<8x32xf32>
    %494 = arith.addf %492, %493 : vector<8x32xf32>
    %495 = math.tanh %494 : vector<8x32xf32>
    %496 = arith.mulf %491, %495 : vector<8x32xf32>
    %c1_i32_146 = arith.constant 1 : i32
    %497 = vector.broadcast %c1_i32_146 : i32 to vector<8x1xi32>
    %498 = arith.cmpi sgt, %0, %497 : vector<8x1xi32>
    %499 = vector.shape_cast %498 : vector<8x1xi1> to vector<8x1xi1>
    %500 = vector.broadcast %499 : vector<8x1xi1> to vector<8x32xi1>
    %501 = arith.select %500, %494, %466 : vector<8x32xi1>, vector<8x32xf32>
    %502 = vector.shape_cast %498 : vector<8x1xi1> to vector<8x1xi1>
    %503 = vector.broadcast %502 : vector<8x1xi1> to vector<8x32xi1>
    %504 = arith.select %503, %496, %469 : vector<8x32xi1>, vector<8x32xf32>
    %cst_147 = arith.constant 0.000000e+00 : f32
    %505 = vector.shape_cast %498 : vector<8x1xi1> to vector<8x1xi1>
    %506 = vector.broadcast %505 : vector<8x1xi1> to vector<8x32xi1>
    %507 = vector.broadcast %cst_147 : f32 to vector<8x32xf32>
    %508 = arith.select %506, %496, %507 : vector<8x32xi1>, vector<8x32xf32>
    %c8_148 = arith.constant 8 : index
    %c0_149 = arith.constant 0 : index
    %509 = vector.load %arg15[%c8_148, %c0_149] : memref<96x32xf32, #tpu.memory_space<vmem>>, vector<8x32xf32>
    tpu.vector_store %arg15[%c8_148, %c0_149], %508 {strides = array<i32>} : memref<96x32xf32, #tpu.memory_space<vmem>>, vector<8x32xf32>,
    %c16_150 = arith.constant 16 : index
    %c0_151 = arith.constant 0 : index
    %510 = vector.load %arg16[%c16_150, %c0_151] : memref<96x128xf32, #tpu.memory_space<vmem>>, vector<8x128xf32>
    %511 = arith.truncf %504 : vector<8x32xf32> to vector<8x32xbf16>
    %cst_152 = arith.constant dense<0.000000e+00> : vector<8x128xf32>
    %512 = tpu.matmul %511, %439, %cst_152 {dimension_numbers = #tpu.dot_dimension_numbers<[1], [0], [0], [1], [0, 0, 1, 1], [], []>} : vector<8x32xbf16>, vector<32x128xbf16>, vector<8x128xf32> -> vector<8x128xf32>
    %513 = arith.addf %510, %512 : vector<8x128xf32>
    %514 = arith.negf %513 : vector<8x128xf32>
    %515 = math.exp %514 : vector<8x128xf32>
    %cst_153 = arith.constant 1.000000e+00 : f32
    %516 = vector.broadcast %cst_153 : f32 to vector<8x128xf32>
    %517 = arith.addf %516, %515 : vector<8x128xf32>
    %518 = arith.divf %516, %517 : vector<8x128xf32>
    %519 = vector.extract_strided_slice %518 {offsets = [0, 0], sizes = [8, 32], strides = [1, 1]} : vector<8x128xf32> to vector<8x32xf32>
    %520 = vector.extract_strided_slice %518 {offsets = [0, 32], sizes = [8, 32], strides = [1, 1]} : vector<8x128xf32> to vector<8x32xf32>
    %521 = vector.extract_strided_slice %518 {offsets = [0, 64], sizes = [8, 32], strides = [1, 1]} : vector<8x128xf32> to vector<8x32xf32>
    %cst_154 = arith.constant 2.000000e+00 : f32
    %522 = vector.broadcast %cst_154 : f32 to vector<8x32xf32>
    %523 = arith.mulf %522, %521 : vector<8x32xf32>
    %cst_155 = arith.constant 1.000000e+00 : f32
    %524 = vector.broadcast %cst_155 : f32 to vector<8x32xf32>
    %525 = arith.subf %523, %524 : vector<8x32xf32>
    %526 = vector.extract_strided_slice %518 {offsets = [0, 96], sizes = [8, 32], strides = [1, 1]} : vector<8x128xf32> to vector<8x32xf32>
    %527 = arith.mulf %520, %501 : vector<8x32xf32>
    %528 = arith.mulf %519, %525 : vector<8x32xf32>
    %529 = arith.addf %527, %528 : vector<8x32xf32>
    %530 = math.tanh %529 : vector<8x32xf32>
    %531 = arith.mulf %526, %530 : vector<8x32xf32>
    %c2_i32_156 = arith.constant 2 : i32
    %532 = vector.broadcast %c2_i32_156 : i32 to vector<8x1xi32>
    %533 = arith.cmpi sgt, %0, %532 : vector<8x1xi32>
    %534 = vector.shape_cast %533 : vector<8x1xi1> to vector<8x1xi1>
    %535 = vector.broadcast %534 : vector<8x1xi1> to vector<8x32xi1>
    %536 = arith.select %535, %529, %501 : vector<8x32xi1>, vector<8x32xf32>
    %537 = vector.shape_cast %533 : vector<8x1xi1> to vector<8x1xi1>
    %538 = vector.broadcast %537 : vector<8x1xi1> to vector<8x32xi1>
    %539 = arith.select %538, %531, %504 : vector<8x32xi1>, vector<8x32xf32>
    %cst_157 = arith.constant 0.000000e+00 : f32
    %540 = vector.shape_cast %533 : vector<8x1xi1> to vector<8x1xi1>
    %541 = vector.broadcast %540 : vector<8x1xi1> to vector<8x32xi1>
    %542 = vector.broadcast %cst_157 : f32 to vector<8x32xf32>
    %543 = arith.select %541, %531, %542 : vector<8x32xi1>, vector<8x32xf32>
    %c16_158 = arith.constant 16 : index
    %c0_159 = arith.constant 0 : index
    %544 = vector.load %arg15[%c16_158, %c0_159] : memref<96x32xf32, #tpu.memory_space<vmem>>, vector<8x32xf32>
    tpu.vector_store %arg15[%c16_158, %c0_159], %543 {strides = array<i32>} : memref<96x32xf32, #tpu.memory_space<vmem>>, vector<8x32xf32>,
    %c24_160 = arith.constant 24 : index
    %c0_161 = arith.constant 0 : index
    %545 = vector.load %arg16[%c24_160, %c0_161] : memref<96x128xf32, #tpu.memory_space<vmem>>, vector<8x128xf32>
    %546 = arith.truncf %539 : vector<8x32xf32> to vector<8x32xbf16>
    %cst_162 = arith.constant dense<0.000000e+00> : vector<8x128xf32>
    %547 = tpu.matmul %546, %439, %cst_162 {dimension_numbers = #tpu.dot_dimension_numbers<[1], [0], [0], [1], [0, 0, 1, 1], [], []>} : vector<8x32xbf16>, vector<32x128xbf16>, vector<8x128xf32> -> vector<8x128xf32>
    %548 = arith.addf %545, %547 : vector<8x128xf32>
    %549 = arith.negf %548 : vector<8x128xf32>
    %550 = math.exp %549 : vector<8x128xf32>
    %cst_163 = arith.constant 1.000000e+00 : f32
    %551 = vector.broadcast %cst_163 : f32 to vector<8x128xf32>
    %552 = arith.addf %551, %550 : vector<8x128xf32>
    %553 = arith.divf %551, %552 : vector<8x128xf32>
    %554 = vector.extract_strided_slice %553 {offsets = [0, 0], sizes = [8, 32], strides = [1, 1]} : vector<8x128xf32> to vector<8x32xf32>
    %555 = vector.extract_strided_slice %553 {offsets = [0, 32], sizes = [8, 32], strides = [1, 1]} : vector<8x128xf32> to vector<8x32xf32>
    %556 = vector.extract_strided_slice %553 {offsets = [0, 64], sizes = [8, 32], strides = [1, 1]} : vector<8x128xf32> to vector<8x32xf32>
    %cst_164 = arith.constant 2.000000e+00 : f32
    %557 = vector.broadcast %cst_164 : f32 to vector<8x32xf32>
    %558 = arith.mulf %557, %556 : vector<8x32xf32>
    %cst_165 = arith.constant 1.000000e+00 : f32
    %559 = vector.broadcast %cst_165 : f32 to vector<8x32xf32>
    %560 = arith.subf %558, %559 : vector<8x32xf32>
    %561 = vector.extract_strided_slice %553 {offsets = [0, 96], sizes = [8, 32], strides = [1, 1]} : vector<8x128xf32> to vector<8x32xf32>
    %562 = arith.mulf %555, %536 : vector<8x32xf32>
    %563 = arith.mulf %554, %560 : vector<8x32xf32>
    %564 = arith.addf %562, %563 : vector<8x32xf32>
    %565 = math.tanh %564 : vector<8x32xf32>
    %566 = arith.mulf %561, %565 : vector<8x32xf32>
    %c3_i32_166 = arith.constant 3 : i32
    %567 = vector.broadcast %c3_i32_166 : i32 to vector<8x1xi32>
    %568 = arith.cmpi sgt, %0, %567 : vector<8x1xi32>
    %569 = vector.shape_cast %568 : vector<8x1xi1> to vector<8x1xi1>
    %570 = vector.broadcast %569 : vector<8x1xi1> to vector<8x32xi1>
    %571 = arith.select %570, %564, %536 : vector<8x32xi1>, vector<8x32xf32>
    %572 = vector.shape_cast %568 : vector<8x1xi1> to vector<8x1xi1>
    %573 = vector.broadcast %572 : vector<8x1xi1> to vector<8x32xi1>
    %574 = arith.select %573, %566, %539 : vector<8x32xi1>, vector<8x32xf32>
    %cst_167 = arith.constant 0.000000e+00 : f32
    %575 = vector.shape_cast %568 : vector<8x1xi1> to vector<8x1xi1>
    %576 = vector.broadcast %575 : vector<8x1xi1> to vector<8x32xi1>
    %577 = vector.broadcast %cst_167 : f32 to vector<8x32xf32>
    %578 = arith.select %576, %566, %577 : vector<8x32xi1>, vector<8x32xf32>
    %c24_168 = arith.constant 24 : index
    %c0_169 = arith.constant 0 : index
    %579 = vector.load %arg15[%c24_168, %c0_169] : memref<96x32xf32, #tpu.memory_space<vmem>>, vector<8x32xf32>
    tpu.vector_store %arg15[%c24_168, %c0_169], %578 {strides = array<i32>} : memref<96x32xf32, #tpu.memory_space<vmem>>, vector<8x32xf32>,
    %c32_170 = arith.constant 32 : index
    %c0_171 = arith.constant 0 : index
    %580 = vector.load %arg16[%c32_170, %c0_171] : memref<96x128xf32, #tpu.memory_space<vmem>>, vector<8x128xf32>
    %581 = arith.truncf %574 : vector<8x32xf32> to vector<8x32xbf16>
    %cst_172 = arith.constant dense<0.000000e+00> : vector<8x128xf32>
    %582 = tpu.matmul %581, %439, %cst_172 {dimension_numbers = #tpu.dot_dimension_numbers<[1], [0], [0], [1], [0, 0, 1, 1], [], []>} : vector<8x32xbf16>, vector<32x128xbf16>, vector<8x128xf32> -> vector<8x128xf32>
    %583 = arith.addf %580, %582 : vector<8x128xf32>
    %584 = arith.negf %583 : vector<8x128xf32>
    %585 = math.exp %584 : vector<8x128xf32>
    %cst_173 = arith.constant 1.000000e+00 : f32
    %586 = vector.broadcast %cst_173 : f32 to vector<8x128xf32>
    %587 = arith.addf %586, %585 : vector<8x128xf32>
    %588 = arith.divf %586, %587 : vector<8x128xf32>
    %589 = vector.extract_strided_slice %588 {offsets = [0, 0], sizes = [8, 32], strides = [1, 1]} : vector<8x128xf32> to vector<8x32xf32>
    %590 = vector.extract_strided_slice %588 {offsets = [0, 32], sizes = [8, 32], strides = [1, 1]} : vector<8x128xf32> to vector<8x32xf32>
    %591 = vector.extract_strided_slice %588 {offsets = [0, 64], sizes = [8, 32], strides = [1, 1]} : vector<8x128xf32> to vector<8x32xf32>
    %cst_174 = arith.constant 2.000000e+00 : f32
    %592 = vector.broadcast %cst_174 : f32 to vector<8x32xf32>
    %593 = arith.mulf %592, %591 : vector<8x32xf32>
    %cst_175 = arith.constant 1.000000e+00 : f32
    %594 = vector.broadcast %cst_175 : f32 to vector<8x32xf32>
    %595 = arith.subf %593, %594 : vector<8x32xf32>
    %596 = vector.extract_strided_slice %588 {offsets = [0, 96], sizes = [8, 32], strides = [1, 1]} : vector<8x128xf32> to vector<8x32xf32>
    %597 = arith.mulf %590, %571 : vector<8x32xf32>
    %598 = arith.mulf %589, %595 : vector<8x32xf32>
    %599 = arith.addf %597, %598 : vector<8x32xf32>
    %600 = math.tanh %599 : vector<8x32xf32>
    %601 = arith.mulf %596, %600 : vector<8x32xf32>
    %c4_i32_176 = arith.constant 4 : i32
    %602 = vector.broadcast %c4_i32_176 : i32 to vector<8x1xi32>
    %603 = arith.cmpi sgt, %0, %602 : vector<8x1xi32>
    %604 = vector.shape_cast %603 : vector<8x1xi1> to vector<8x1xi1>
    %605 = vector.broadcast %604 : vector<8x1xi1> to vector<8x32xi1>
    %606 = arith.select %605, %599, %571 : vector<8x32xi1>, vector<8x32xf32>
    %607 = vector.shape_cast %603 : vector<8x1xi1> to vector<8x1xi1>
    %608 = vector.broadcast %607 : vector<8x1xi1> to vector<8x32xi1>
    %609 = arith.select %608, %601, %574 : vector<8x32xi1>, vector<8x32xf32>
    %cst_177 = arith.constant 0.000000e+00 : f32
    %610 = vector.shape_cast %603 : vector<8x1xi1> to vector<8x1xi1>
    %611 = vector.broadcast %610 : vector<8x1xi1> to vector<8x32xi1>
    %612 = vector.broadcast %cst_177 : f32 to vector<8x32xf32>
    %613 = arith.select %611, %601, %612 : vector<8x32xi1>, vector<8x32xf32>
    %c32_178 = arith.constant 32 : index
    %c0_179 = arith.constant 0 : index
    %614 = vector.load %arg15[%c32_178, %c0_179] : memref<96x32xf32, #tpu.memory_space<vmem>>, vector<8x32xf32>
    tpu.vector_store %arg15[%c32_178, %c0_179], %613 {strides = array<i32>} : memref<96x32xf32, #tpu.memory_space<vmem>>, vector<8x32xf32>,
    %c40_180 = arith.constant 40 : index
    %c0_181 = arith.constant 0 : index
    %615 = vector.load %arg16[%c40_180, %c0_181] : memref<96x128xf32, #tpu.memory_space<vmem>>, vector<8x128xf32>
    %616 = arith.truncf %609 : vector<8x32xf32> to vector<8x32xbf16>
    %cst_182 = arith.constant dense<0.000000e+00> : vector<8x128xf32>
    %617 = tpu.matmul %616, %439, %cst_182 {dimension_numbers = #tpu.dot_dimension_numbers<[1], [0], [0], [1], [0, 0, 1, 1], [], []>} : vector<8x32xbf16>, vector<32x128xbf16>, vector<8x128xf32> -> vector<8x128xf32>
    %618 = arith.addf %615, %617 : vector<8x128xf32>
    %619 = arith.negf %618 : vector<8x128xf32>
    %620 = math.exp %619 : vector<8x128xf32>
    %cst_183 = arith.constant 1.000000e+00 : f32
    %621 = vector.broadcast %cst_183 : f32 to vector<8x128xf32>
    %622 = arith.addf %621, %620 : vector<8x128xf32>
    %623 = arith.divf %621, %622 : vector<8x128xf32>
    %624 = vector.extract_strided_slice %623 {offsets = [0, 0], sizes = [8, 32], strides = [1, 1]} : vector<8x128xf32> to vector<8x32xf32>
    %625 = vector.extract_strided_slice %623 {offsets = [0, 32], sizes = [8, 32], strides = [1, 1]} : vector<8x128xf32> to vector<8x32xf32>
    %626 = vector.extract_strided_slice %623 {offsets = [0, 64], sizes = [8, 32], strides = [1, 1]} : vector<8x128xf32> to vector<8x32xf32>
    %cst_184 = arith.constant 2.000000e+00 : f32
    %627 = vector.broadcast %cst_184 : f32 to vector<8x32xf32>
    %628 = arith.mulf %627, %626 : vector<8x32xf32>
    %cst_185 = arith.constant 1.000000e+00 : f32
    %629 = vector.broadcast %cst_185 : f32 to vector<8x32xf32>
    %630 = arith.subf %628, %629 : vector<8x32xf32>
    %631 = vector.extract_strided_slice %623 {offsets = [0, 96], sizes = [8, 32], strides = [1, 1]} : vector<8x128xf32> to vector<8x32xf32>
    %632 = arith.mulf %625, %606 : vector<8x32xf32>
    %633 = arith.mulf %624, %630 : vector<8x32xf32>
    %634 = arith.addf %632, %633 : vector<8x32xf32>
    %635 = math.tanh %634 : vector<8x32xf32>
    %636 = arith.mulf %631, %635 : vector<8x32xf32>
    %c5_i32_186 = arith.constant 5 : i32
    %637 = vector.broadcast %c5_i32_186 : i32 to vector<8x1xi32>
    %638 = arith.cmpi sgt, %0, %637 : vector<8x1xi32>
    %639 = vector.shape_cast %638 : vector<8x1xi1> to vector<8x1xi1>
    %640 = vector.broadcast %639 : vector<8x1xi1> to vector<8x32xi1>
    %641 = arith.select %640, %634, %606 : vector<8x32xi1>, vector<8x32xf32>
    %642 = vector.shape_cast %638 : vector<8x1xi1> to vector<8x1xi1>
    %643 = vector.broadcast %642 : vector<8x1xi1> to vector<8x32xi1>
    %644 = arith.select %643, %636, %609 : vector<8x32xi1>, vector<8x32xf32>
    %cst_187 = arith.constant 0.000000e+00 : f32
    %645 = vector.shape_cast %638 : vector<8x1xi1> to vector<8x1xi1>
    %646 = vector.broadcast %645 : vector<8x1xi1> to vector<8x32xi1>
    %647 = vector.broadcast %cst_187 : f32 to vector<8x32xf32>
    %648 = arith.select %646, %636, %647 : vector<8x32xi1>, vector<8x32xf32>
    %c40_188 = arith.constant 40 : index
    %c0_189 = arith.constant 0 : index
    %649 = vector.load %arg15[%c40_188, %c0_189] : memref<96x32xf32, #tpu.memory_space<vmem>>, vector<8x32xf32>
    tpu.vector_store %arg15[%c40_188, %c0_189], %648 {strides = array<i32>} : memref<96x32xf32, #tpu.memory_space<vmem>>, vector<8x32xf32>,
    %c48_190 = arith.constant 48 : index
    %c0_191 = arith.constant 0 : index
    %650 = vector.load %arg16[%c48_190, %c0_191] : memref<96x128xf32, #tpu.memory_space<vmem>>, vector<8x128xf32>
    %651 = arith.truncf %644 : vector<8x32xf32> to vector<8x32xbf16>
    %cst_192 = arith.constant dense<0.000000e+00> : vector<8x128xf32>
    %652 = tpu.matmul %651, %439, %cst_192 {dimension_numbers = #tpu.dot_dimension_numbers<[1], [0], [0], [1], [0, 0, 1, 1], [], []>} : vector<8x32xbf16>, vector<32x128xbf16>, vector<8x128xf32> -> vector<8x128xf32>
    %653 = arith.addf %650, %652 : vector<8x128xf32>
    %654 = arith.negf %653 : vector<8x128xf32>
    %655 = math.exp %654 : vector<8x128xf32>
    %cst_193 = arith.constant 1.000000e+00 : f32
    %656 = vector.broadcast %cst_193 : f32 to vector<8x128xf32>
    %657 = arith.addf %656, %655 : vector<8x128xf32>
    %658 = arith.divf %656, %657 : vector<8x128xf32>
    %659 = vector.extract_strided_slice %658 {offsets = [0, 0], sizes = [8, 32], strides = [1, 1]} : vector<8x128xf32> to vector<8x32xf32>
    %660 = vector.extract_strided_slice %658 {offsets = [0, 32], sizes = [8, 32], strides = [1, 1]} : vector<8x128xf32> to vector<8x32xf32>
    %661 = vector.extract_strided_slice %658 {offsets = [0, 64], sizes = [8, 32], strides = [1, 1]} : vector<8x128xf32> to vector<8x32xf32>
    %cst_194 = arith.constant 2.000000e+00 : f32
    %662 = vector.broadcast %cst_194 : f32 to vector<8x32xf32>
    %663 = arith.mulf %662, %661 : vector<8x32xf32>
    %cst_195 = arith.constant 1.000000e+00 : f32
    %664 = vector.broadcast %cst_195 : f32 to vector<8x32xf32>
    %665 = arith.subf %663, %664 : vector<8x32xf32>
    %666 = vector.extract_strided_slice %658 {offsets = [0, 96], sizes = [8, 32], strides = [1, 1]} : vector<8x128xf32> to vector<8x32xf32>
    %667 = arith.mulf %660, %641 : vector<8x32xf32>
    %668 = arith.mulf %659, %665 : vector<8x32xf32>
    %669 = arith.addf %667, %668 : vector<8x32xf32>
    %670 = math.tanh %669 : vector<8x32xf32>
    %671 = arith.mulf %666, %670 : vector<8x32xf32>
    %c6_i32_196 = arith.constant 6 : i32
    %672 = vector.broadcast %c6_i32_196 : i32 to vector<8x1xi32>
    %673 = arith.cmpi sgt, %0, %672 : vector<8x1xi32>
    %674 = vector.shape_cast %673 : vector<8x1xi1> to vector<8x1xi1>
    %675 = vector.broadcast %674 : vector<8x1xi1> to vector<8x32xi1>
    %676 = arith.select %675, %669, %641 : vector<8x32xi1>, vector<8x32xf32>
    %677 = vector.shape_cast %673 : vector<8x1xi1> to vector<8x1xi1>
    %678 = vector.broadcast %677 : vector<8x1xi1> to vector<8x32xi1>
    %679 = arith.select %678, %671, %644 : vector<8x32xi1>, vector<8x32xf32>
    %cst_197 = arith.constant 0.000000e+00 : f32
    %680 = vector.shape_cast %673 : vector<8x1xi1> to vector<8x1xi1>
    %681 = vector.broadcast %680 : vector<8x1xi1> to vector<8x32xi1>
    %682 = vector.broadcast %cst_197 : f32 to vector<8x32xf32>
    %683 = arith.select %681, %671, %682 : vector<8x32xi1>, vector<8x32xf32>
    %c48_198 = arith.constant 48 : index
    %c0_199 = arith.constant 0 : index
    %684 = vector.load %arg15[%c48_198, %c0_199] : memref<96x32xf32, #tpu.memory_space<vmem>>, vector<8x32xf32>
    tpu.vector_store %arg15[%c48_198, %c0_199], %683 {strides = array<i32>} : memref<96x32xf32, #tpu.memory_space<vmem>>, vector<8x32xf32>,
    %c56_200 = arith.constant 56 : index
    %c0_201 = arith.constant 0 : index
    %685 = vector.load %arg16[%c56_200, %c0_201] : memref<96x128xf32, #tpu.memory_space<vmem>>, vector<8x128xf32>
    %686 = arith.truncf %679 : vector<8x32xf32> to vector<8x32xbf16>
    %cst_202 = arith.constant dense<0.000000e+00> : vector<8x128xf32>
    %687 = tpu.matmul %686, %439, %cst_202 {dimension_numbers = #tpu.dot_dimension_numbers<[1], [0], [0], [1], [0, 0, 1, 1], [], []>} : vector<8x32xbf16>, vector<32x128xbf16>, vector<8x128xf32> -> vector<8x128xf32>
    %688 = arith.addf %685, %687 : vector<8x128xf32>
    %689 = arith.negf %688 : vector<8x128xf32>
    %690 = math.exp %689 : vector<8x128xf32>
    %cst_203 = arith.constant 1.000000e+00 : f32
    %691 = vector.broadcast %cst_203 : f32 to vector<8x128xf32>
    %692 = arith.addf %691, %690 : vector<8x128xf32>
    %693 = arith.divf %691, %692 : vector<8x128xf32>
    %694 = vector.extract_strided_slice %693 {offsets = [0, 0], sizes = [8, 32], strides = [1, 1]} : vector<8x128xf32> to vector<8x32xf32>
    %695 = vector.extract_strided_slice %693 {offsets = [0, 32], sizes = [8, 32], strides = [1, 1]} : vector<8x128xf32> to vector<8x32xf32>
    %696 = vector.extract_strided_slice %693 {offsets = [0, 64], sizes = [8, 32], strides = [1, 1]} : vector<8x128xf32> to vector<8x32xf32>
    %cst_204 = arith.constant 2.000000e+00 : f32
    %697 = vector.broadcast %cst_204 : f32 to vector<8x32xf32>
    %698 = arith.mulf %697, %696 : vector<8x32xf32>
    %cst_205 = arith.constant 1.000000e+00 : f32
    %699 = vector.broadcast %cst_205 : f32 to vector<8x32xf32>
    %700 = arith.subf %698, %699 : vector<8x32xf32>
    %701 = vector.extract_strided_slice %693 {offsets = [0, 96], sizes = [8, 32], strides = [1, 1]} : vector<8x128xf32> to vector<8x32xf32>
    %702 = arith.mulf %695, %676 : vector<8x32xf32>
    %703 = arith.mulf %694, %700 : vector<8x32xf32>
    %704 = arith.addf %702, %703 : vector<8x32xf32>
    %705 = math.tanh %704 : vector<8x32xf32>
    %706 = arith.mulf %701, %705 : vector<8x32xf32>
    %c7_i32_206 = arith.constant 7 : i32
    %707 = vector.broadcast %c7_i32_206 : i32 to vector<8x1xi32>
    %708 = arith.cmpi sgt, %0, %707 : vector<8x1xi32>
    %709 = vector.shape_cast %708 : vector<8x1xi1> to vector<8x1xi1>
    %710 = vector.broadcast %709 : vector<8x1xi1> to vector<8x32xi1>
    %711 = arith.select %710, %704, %676 : vector<8x32xi1>, vector<8x32xf32>
    %712 = vector.shape_cast %708 : vector<8x1xi1> to vector<8x1xi1>
    %713 = vector.broadcast %712 : vector<8x1xi1> to vector<8x32xi1>
    %714 = arith.select %713, %706, %679 : vector<8x32xi1>, vector<8x32xf32>
    %cst_207 = arith.constant 0.000000e+00 : f32
    %715 = vector.shape_cast %708 : vector<8x1xi1> to vector<8x1xi1>
    %716 = vector.broadcast %715 : vector<8x1xi1> to vector<8x32xi1>
    %717 = vector.broadcast %cst_207 : f32 to vector<8x32xf32>
    %718 = arith.select %716, %706, %717 : vector<8x32xi1>, vector<8x32xf32>
    %c56_208 = arith.constant 56 : index
    %c0_209 = arith.constant 0 : index
    %719 = vector.load %arg15[%c56_208, %c0_209] : memref<96x32xf32, #tpu.memory_space<vmem>>, vector<8x32xf32>
    tpu.vector_store %arg15[%c56_208, %c0_209], %718 {strides = array<i32>} : memref<96x32xf32, #tpu.memory_space<vmem>>, vector<8x32xf32>,
    %c64_210 = arith.constant 64 : index
    %c0_211 = arith.constant 0 : index
    %720 = vector.load %arg16[%c64_210, %c0_211] : memref<96x128xf32, #tpu.memory_space<vmem>>, vector<8x128xf32>
    %721 = arith.truncf %714 : vector<8x32xf32> to vector<8x32xbf16>
    %cst_212 = arith.constant dense<0.000000e+00> : vector<8x128xf32>
    %722 = tpu.matmul %721, %439, %cst_212 {dimension_numbers = #tpu.dot_dimension_numbers<[1], [0], [0], [1], [0, 0, 1, 1], [], []>} : vector<8x32xbf16>, vector<32x128xbf16>, vector<8x128xf32> -> vector<8x128xf32>
    %723 = arith.addf %720, %722 : vector<8x128xf32>
    %724 = arith.negf %723 : vector<8x128xf32>
    %725 = math.exp %724 : vector<8x128xf32>
    %cst_213 = arith.constant 1.000000e+00 : f32
    %726 = vector.broadcast %cst_213 : f32 to vector<8x128xf32>
    %727 = arith.addf %726, %725 : vector<8x128xf32>
    %728 = arith.divf %726, %727 : vector<8x128xf32>
    %729 = vector.extract_strided_slice %728 {offsets = [0, 0], sizes = [8, 32], strides = [1, 1]} : vector<8x128xf32> to vector<8x32xf32>
    %730 = vector.extract_strided_slice %728 {offsets = [0, 32], sizes = [8, 32], strides = [1, 1]} : vector<8x128xf32> to vector<8x32xf32>
    %731 = vector.extract_strided_slice %728 {offsets = [0, 64], sizes = [8, 32], strides = [1, 1]} : vector<8x128xf32> to vector<8x32xf32>
    %cst_214 = arith.constant 2.000000e+00 : f32
    %732 = vector.broadcast %cst_214 : f32 to vector<8x32xf32>
    %733 = arith.mulf %732, %731 : vector<8x32xf32>
    %cst_215 = arith.constant 1.000000e+00 : f32
    %734 = vector.broadcast %cst_215 : f32 to vector<8x32xf32>
    %735 = arith.subf %733, %734 : vector<8x32xf32>
    %736 = vector.extract_strided_slice %728 {offsets = [0, 96], sizes = [8, 32], strides = [1, 1]} : vector<8x128xf32> to vector<8x32xf32>
    %737 = arith.mulf %730, %711 : vector<8x32xf32>
    %738 = arith.mulf %729, %735 : vector<8x32xf32>
    %739 = arith.addf %737, %738 : vector<8x32xf32>
    %740 = math.tanh %739 : vector<8x32xf32>
    %741 = arith.mulf %736, %740 : vector<8x32xf32>
    %c8_i32_216 = arith.constant 8 : i32
    %742 = vector.broadcast %c8_i32_216 : i32 to vector<8x1xi32>
    %743 = arith.cmpi sgt, %0, %742 : vector<8x1xi32>
    %744 = vector.shape_cast %743 : vector<8x1xi1> to vector<8x1xi1>
    %745 = vector.broadcast %744 : vector<8x1xi1> to vector<8x32xi1>
    %746 = arith.select %745, %739, %711 : vector<8x32xi1>, vector<8x32xf32>
    %747 = vector.shape_cast %743 : vector<8x1xi1> to vector<8x1xi1>
    %748 = vector.broadcast %747 : vector<8x1xi1> to vector<8x32xi1>
    %749 = arith.select %748, %741, %714 : vector<8x32xi1>, vector<8x32xf32>
    %cst_217 = arith.constant 0.000000e+00 : f32
    %750 = vector.shape_cast %743 : vector<8x1xi1> to vector<8x1xi1>
    %751 = vector.broadcast %750 : vector<8x1xi1> to vector<8x32xi1>
    %752 = vector.broadcast %cst_217 : f32 to vector<8x32xf32>
    %753 = arith.select %751, %741, %752 : vector<8x32xi1>, vector<8x32xf32>
    %c64_218 = arith.constant 64 : index
    %c0_219 = arith.constant 0 : index
    %754 = vector.load %arg15[%c64_218, %c0_219] : memref<96x32xf32, #tpu.memory_space<vmem>>, vector<8x32xf32>
    tpu.vector_store %arg15[%c64_218, %c0_219], %753 {strides = array<i32>} : memref<96x32xf32, #tpu.memory_space<vmem>>, vector<8x32xf32>,
    %c72_220 = arith.constant 72 : index
    %c0_221 = arith.constant 0 : index
    %755 = vector.load %arg16[%c72_220, %c0_221] : memref<96x128xf32, #tpu.memory_space<vmem>>, vector<8x128xf32>
    %756 = arith.truncf %749 : vector<8x32xf32> to vector<8x32xbf16>
    %cst_222 = arith.constant dense<0.000000e+00> : vector<8x128xf32>
    %757 = tpu.matmul %756, %439, %cst_222 {dimension_numbers = #tpu.dot_dimension_numbers<[1], [0], [0], [1], [0, 0, 1, 1], [], []>} : vector<8x32xbf16>, vector<32x128xbf16>, vector<8x128xf32> -> vector<8x128xf32>
    %758 = arith.addf %755, %757 : vector<8x128xf32>
    %759 = arith.negf %758 : vector<8x128xf32>
    %760 = math.exp %759 : vector<8x128xf32>
    %cst_223 = arith.constant 1.000000e+00 : f32
    %761 = vector.broadcast %cst_223 : f32 to vector<8x128xf32>
    %762 = arith.addf %761, %760 : vector<8x128xf32>
    %763 = arith.divf %761, %762 : vector<8x128xf32>
    %764 = vector.extract_strided_slice %763 {offsets = [0, 0], sizes = [8, 32], strides = [1, 1]} : vector<8x128xf32> to vector<8x32xf32>
    %765 = vector.extract_strided_slice %763 {offsets = [0, 32], sizes = [8, 32], strides = [1, 1]} : vector<8x128xf32> to vector<8x32xf32>
    %766 = vector.extract_strided_slice %763 {offsets = [0, 64], sizes = [8, 32], strides = [1, 1]} : vector<8x128xf32> to vector<8x32xf32>
    %cst_224 = arith.constant 2.000000e+00 : f32
    %767 = vector.broadcast %cst_224 : f32 to vector<8x32xf32>
    %768 = arith.mulf %767, %766 : vector<8x32xf32>
    %cst_225 = arith.constant 1.000000e+00 : f32
    %769 = vector.broadcast %cst_225 : f32 to vector<8x32xf32>
    %770 = arith.subf %768, %769 : vector<8x32xf32>
    %771 = vector.extract_strided_slice %763 {offsets = [0, 96], sizes = [8, 32], strides = [1, 1]} : vector<8x128xf32> to vector<8x32xf32>
    %772 = arith.mulf %765, %746 : vector<8x32xf32>
    %773 = arith.mulf %764, %770 : vector<8x32xf32>
    %774 = arith.addf %772, %773 : vector<8x32xf32>
    %775 = math.tanh %774 : vector<8x32xf32>
    %776 = arith.mulf %771, %775 : vector<8x32xf32>
    %c9_i32_226 = arith.constant 9 : i32
    %777 = vector.broadcast %c9_i32_226 : i32 to vector<8x1xi32>
    %778 = arith.cmpi sgt, %0, %777 : vector<8x1xi32>
    %779 = vector.shape_cast %778 : vector<8x1xi1> to vector<8x1xi1>
    %780 = vector.broadcast %779 : vector<8x1xi1> to vector<8x32xi1>
    %781 = arith.select %780, %774, %746 : vector<8x32xi1>, vector<8x32xf32>
    %782 = vector.shape_cast %778 : vector<8x1xi1> to vector<8x1xi1>
    %783 = vector.broadcast %782 : vector<8x1xi1> to vector<8x32xi1>
    %784 = arith.select %783, %776, %749 : vector<8x32xi1>, vector<8x32xf32>
    %cst_227 = arith.constant 0.000000e+00 : f32
    %785 = vector.shape_cast %778 : vector<8x1xi1> to vector<8x1xi1>
    %786 = vector.broadcast %785 : vector<8x1xi1> to vector<8x32xi1>
    %787 = vector.broadcast %cst_227 : f32 to vector<8x32xf32>
    %788 = arith.select %786, %776, %787 : vector<8x32xi1>, vector<8x32xf32>
    %c72_228 = arith.constant 72 : index
    %c0_229 = arith.constant 0 : index
    %789 = vector.load %arg15[%c72_228, %c0_229] : memref<96x32xf32, #tpu.memory_space<vmem>>, vector<8x32xf32>
    tpu.vector_store %arg15[%c72_228, %c0_229], %788 {strides = array<i32>} : memref<96x32xf32, #tpu.memory_space<vmem>>, vector<8x32xf32>,
    %c80_230 = arith.constant 80 : index
    %c0_231 = arith.constant 0 : index
    %790 = vector.load %arg16[%c80_230, %c0_231] : memref<96x128xf32, #tpu.memory_space<vmem>>, vector<8x128xf32>
    %791 = arith.truncf %784 : vector<8x32xf32> to vector<8x32xbf16>
    %cst_232 = arith.constant dense<0.000000e+00> : vector<8x128xf32>
    %792 = tpu.matmul %791, %439, %cst_232 {dimension_numbers = #tpu.dot_dimension_numbers<[1], [0], [0], [1], [0, 0, 1, 1], [], []>} : vector<8x32xbf16>, vector<32x128xbf16>, vector<8x128xf32> -> vector<8x128xf32>
    %793 = arith.addf %790, %792 : vector<8x128xf32>
    %794 = arith.negf %793 : vector<8x128xf32>
    %795 = math.exp %794 : vector<8x128xf32>
    %cst_233 = arith.constant 1.000000e+00 : f32
    %796 = vector.broadcast %cst_233 : f32 to vector<8x128xf32>
    %797 = arith.addf %796, %795 : vector<8x128xf32>
    %798 = arith.divf %796, %797 : vector<8x128xf32>
    %799 = vector.extract_strided_slice %798 {offsets = [0, 0], sizes = [8, 32], strides = [1, 1]} : vector<8x128xf32> to vector<8x32xf32>
    %800 = vector.extract_strided_slice %798 {offsets = [0, 32], sizes = [8, 32], strides = [1, 1]} : vector<8x128xf32> to vector<8x32xf32>
    %801 = vector.extract_strided_slice %798 {offsets = [0, 64], sizes = [8, 32], strides = [1, 1]} : vector<8x128xf32> to vector<8x32xf32>
    %cst_234 = arith.constant 2.000000e+00 : f32
    %802 = vector.broadcast %cst_234 : f32 to vector<8x32xf32>
    %803 = arith.mulf %802, %801 : vector<8x32xf32>
    %cst_235 = arith.constant 1.000000e+00 : f32
    %804 = vector.broadcast %cst_235 : f32 to vector<8x32xf32>
    %805 = arith.subf %803, %804 : vector<8x32xf32>
    %806 = vector.extract_strided_slice %798 {offsets = [0, 96], sizes = [8, 32], strides = [1, 1]} : vector<8x128xf32> to vector<8x32xf32>
    %807 = arith.mulf %800, %781 : vector<8x32xf32>
    %808 = arith.mulf %799, %805 : vector<8x32xf32>
    %809 = arith.addf %807, %808 : vector<8x32xf32>
    %810 = math.tanh %809 : vector<8x32xf32>
    %811 = arith.mulf %806, %810 : vector<8x32xf32>
    %c10_i32_236 = arith.constant 10 : i32
    %812 = vector.broadcast %c10_i32_236 : i32 to vector<8x1xi32>
    %813 = arith.cmpi sgt, %0, %812 : vector<8x1xi32>
    %814 = vector.shape_cast %813 : vector<8x1xi1> to vector<8x1xi1>
    %815 = vector.broadcast %814 : vector<8x1xi1> to vector<8x32xi1>
    %816 = arith.select %815, %809, %781 : vector<8x32xi1>, vector<8x32xf32>
    %817 = vector.shape_cast %813 : vector<8x1xi1> to vector<8x1xi1>
    %818 = vector.broadcast %817 : vector<8x1xi1> to vector<8x32xi1>
    %819 = arith.select %818, %811, %784 : vector<8x32xi1>, vector<8x32xf32>
    %cst_237 = arith.constant 0.000000e+00 : f32
    %820 = vector.shape_cast %813 : vector<8x1xi1> to vector<8x1xi1>
    %821 = vector.broadcast %820 : vector<8x1xi1> to vector<8x32xi1>
    %822 = vector.broadcast %cst_237 : f32 to vector<8x32xf32>
    %823 = arith.select %821, %811, %822 : vector<8x32xi1>, vector<8x32xf32>
    %c80_238 = arith.constant 80 : index
    %c0_239 = arith.constant 0 : index
    %824 = vector.load %arg15[%c80_238, %c0_239] : memref<96x32xf32, #tpu.memory_space<vmem>>, vector<8x32xf32>
    tpu.vector_store %arg15[%c80_238, %c0_239], %823 {strides = array<i32>} : memref<96x32xf32, #tpu.memory_space<vmem>>, vector<8x32xf32>,
    %c88_240 = arith.constant 88 : index
    %c0_241 = arith.constant 0 : index
    %825 = vector.load %arg16[%c88_240, %c0_241] : memref<96x128xf32, #tpu.memory_space<vmem>>, vector<8x128xf32>
    %826 = arith.truncf %819 : vector<8x32xf32> to vector<8x32xbf16>
    %cst_242 = arith.constant dense<0.000000e+00> : vector<8x128xf32>
    %827 = tpu.matmul %826, %439, %cst_242 {dimension_numbers = #tpu.dot_dimension_numbers<[1], [0], [0], [1], [0, 0, 1, 1], [], []>} : vector<8x32xbf16>, vector<32x128xbf16>, vector<8x128xf32> -> vector<8x128xf32>
    %828 = arith.addf %825, %827 : vector<8x128xf32>
    %829 = arith.negf %828 : vector<8x128xf32>
    %830 = math.exp %829 : vector<8x128xf32>
    %cst_243 = arith.constant 1.000000e+00 : f32
    %831 = vector.broadcast %cst_243 : f32 to vector<8x128xf32>
    %832 = arith.addf %831, %830 : vector<8x128xf32>
    %833 = arith.divf %831, %832 : vector<8x128xf32>
    %834 = vector.extract_strided_slice %833 {offsets = [0, 0], sizes = [8, 32], strides = [1, 1]} : vector<8x128xf32> to vector<8x32xf32>
    %835 = vector.extract_strided_slice %833 {offsets = [0, 32], sizes = [8, 32], strides = [1, 1]} : vector<8x128xf32> to vector<8x32xf32>
    %836 = vector.extract_strided_slice %833 {offsets = [0, 64], sizes = [8, 32], strides = [1, 1]} : vector<8x128xf32> to vector<8x32xf32>
    %cst_244 = arith.constant 2.000000e+00 : f32
    %837 = vector.broadcast %cst_244 : f32 to vector<8x32xf32>
    %838 = arith.mulf %837, %836 : vector<8x32xf32>
    %cst_245 = arith.constant 1.000000e+00 : f32
    %839 = vector.broadcast %cst_245 : f32 to vector<8x32xf32>
    %840 = arith.subf %838, %839 : vector<8x32xf32>
    %841 = vector.extract_strided_slice %833 {offsets = [0, 96], sizes = [8, 32], strides = [1, 1]} : vector<8x128xf32> to vector<8x32xf32>
    %842 = arith.mulf %835, %816 : vector<8x32xf32>
    %843 = arith.mulf %834, %840 : vector<8x32xf32>
    %844 = arith.addf %842, %843 : vector<8x32xf32>
    %845 = math.tanh %844 : vector<8x32xf32>
    %846 = arith.mulf %841, %845 : vector<8x32xf32>
    %c11_i32_246 = arith.constant 11 : i32
    %847 = vector.broadcast %c11_i32_246 : i32 to vector<8x1xi32>
    %848 = arith.cmpi sgt, %0, %847 : vector<8x1xi32>
    %cst_247 = arith.constant 0.000000e+00 : f32
    %849 = vector.shape_cast %848 : vector<8x1xi1> to vector<8x1xi1>
    %850 = vector.broadcast %849 : vector<8x1xi1> to vector<8x32xi1>
    %851 = vector.broadcast %cst_247 : f32 to vector<8x32xf32>
    %852 = arith.select %850, %846, %851 : vector<8x32xi1>, vector<8x32xf32>
    %c88_248 = arith.constant 88 : index
    %c0_249 = arith.constant 0 : index
    %853 = vector.load %arg15[%c88_248, %c0_249] : memref<96x32xf32, #tpu.memory_space<vmem>>, vector<8x32xf32>
    tpu.vector_store %arg15[%c88_248, %c0_249], %852 {strides = array<i32>} : memref<96x32xf32, #tpu.memory_space<vmem>>, vector<8x32xf32>,
    %c0_250 = arith.constant 0 : index
    %c0_251 = arith.constant 0 : index
    %854 = vector.load %arg15[%c0_250, %c0_251] : memref<96x32xf32, #tpu.memory_space<vmem>>, vector<96x32xf32>
    %855 = arith.truncf %854 : vector<96x32xf32> to vector<96x32xbf16>
    %c0_252 = arith.constant 0 : index
    %c0_253 = arith.constant 0 : index
    %856 = vector.load %arg12[%c0_252, %c0_253] : memref<32x128xbf16, #tpu.memory_space<vmem>>, vector<32x128xbf16>
    %cst_254 = arith.constant dense<0.000000e+00> : vector<96x128xf32>
    %857 = tpu.matmul %855, %856, %cst_254 {dimension_numbers = #tpu.dot_dimension_numbers<[1], [0], [0], [1], [0, 0, 1, 1], [], []>} : vector<96x32xbf16>, vector<32x128xbf16>, vector<96x128xf32> -> vector<96x128xf32>
    %c0_255 = arith.constant 0 : index
    %c0_256 = arith.constant 0 : index
    %858 = vector.load %arg3[%c0_255, %c0_256] : memref<96x1xf32, #tpu.memory_space<vmem>>, vector<96x1xf32>
    %c0_257 = arith.constant 0 : index
    %c0_258 = arith.constant 0 : index
    %859 = vector.load %arg13[%c0_257, %c0_258] : memref<1x128xf32, #tpu.memory_space<vmem>>, vector<1x128xf32>
    %860 = vector.broadcast %858 : vector<96x1xf32> to vector<96x128xf32>
    %861 = vector.broadcast %859 : vector<1x128xf32> to vector<96x128xf32>
    %862 = arith.mulf %860, %861 : vector<96x128xf32>
    %863 = arith.addf %857, %862 : vector<96x128xf32>
    %c0_259 = arith.constant 0 : index
    %c0_260 = arith.constant 0 : index
    %864 = vector.load %arg14[%c0_259, %c0_260] : memref<96x128xf32, #tpu.memory_space<vmem>>, vector<96x128xf32>
    tpu.vector_store %arg14[%c0_259, %c0_260], %863 {strides = array<i32>} : memref<96x128xf32, #tpu.memory_space<vmem>>, vector<96x128xf32>,
    return
  }
  func.func @transform_0(%arg0: i32) -> (i32, i32) {
    %c0_i32 = arith.constant 0 : i32
    %c0_i32_0 = arith.constant 0 : i32
    %c0_i32_1 = arith.constant 0 : i32
    return %c0_i32, %c0_i32_0 : i32, i32
  }
  func.func @transform_1(%arg0: i32) -> (i32, i32) {
    %c0_i32 = arith.constant 0 : i32
    %c0_i32_0 = arith.constant 0 : i32
    %c0_i32_1 = arith.constant 0 : i32
    return %c0_i32, %c0_i32_0 : i32, i32
  }
  func.func @transform_2(%arg0: i32) -> (i32, i32) {
    %c0_i32 = arith.constant 0 : i32
    %c0_i32_0 = arith.constant 0 : i32
    %c0_i32_1 = arith.constant 0 : i32
    return %c0_i32, %c0_i32_0 : i32, i32
  }
  func.func @transform_3(%arg0: i32) -> (i32, i32) {
    %c0_i32 = arith.constant 0 : i32
    %c0_i32_0 = arith.constant 0 : i32
    %c0_i32_1 = arith.constant 0 : i32
    return %c0_i32, %c0_i32_0 : i32, i32
  }
  func.func @transform_4(%arg0: i32) -> (i32, i32) {
    %c0_i32 = arith.constant 0 : i32
    %c0_i32_0 = arith.constant 0 : i32
    %c0_i32_1 = arith.constant 0 : i32
    return %c0_i32, %c0_i32_0 : i32, i32
  }
  func.func @transform_5(%arg0: i32) -> (i32, i32) {
    %c0_i32 = arith.constant 0 : i32
    %c0_i32_0 = arith.constant 0 : i32
    %c0_i32_1 = arith.constant 0 : i32
    return %c0_i32, %c0_i32_0 : i32, i32
  }
  func.func @transform_6(%arg0: i32) -> (i32, i32) {
    %c0_i32 = arith.constant 0 : i32
    %c0_i32_0 = arith.constant 0 : i32
    %c0_i32_1 = arith.constant 0 : i32
    return %c0_i32, %c0_i32_0 : i32, i32
  }
  func.func @transform_7(%arg0: i32) -> (i32, i32) {
    %c0_i32 = arith.constant 0 : i32
    %c0_i32_0 = arith.constant 0 : i32
    %c0_i32_1 = arith.constant 0 : i32
    return %c0_i32, %c0_i32_0 : i32, i32
  }
  func.func @transform_8(%arg0: i32) -> (i32, i32) {
    %c0_i32 = arith.constant 0 : i32
    %c0_i32_0 = arith.constant 0 : i32
    %c0_i32_1 = arith.constant 0 : i32
    return %c0_i32, %c0_i32_0 : i32, i32
  }
  func.func @transform_9(%arg0: i32) -> (i32, i32, i32) {
    %c0_i32 = arith.constant 0 : i32
    %c0_i32_0 = arith.constant 0 : i32
    %c0_i32_1 = arith.constant 0 : i32
    %c0_i32_2 = arith.constant 0 : i32
    return %c0_i32, %c0_i32_0, %c0_i32_1 : i32, i32, i32
  }
  func.func @transform_10(%arg0: i32) -> (i32, i32, i32) {
    %c0_i32 = arith.constant 0 : i32
    %c0_i32_0 = arith.constant 0 : i32
    %c0_i32_1 = arith.constant 0 : i32
    %c0_i32_2 = arith.constant 0 : i32
    return %c0_i32, %c0_i32_0, %c0_i32_1 : i32, i32, i32
  }
  func.func @transform_11(%arg0: i32) -> (i32, i32) {
    %c0_i32 = arith.constant 0 : i32
    %c0_i32_0 = arith.constant 0 : i32
    %c0_i32_1 = arith.constant 0 : i32
    return %c0_i32, %c0_i32_0 : i32, i32
  }
  func.func @transform_12(%arg0: i32) -> (i32, i32) {
    %c0_i32 = arith.constant 0 : i32
    %c0_i32_0 = arith.constant 0 : i32
    %c0_i32_1 = arith.constant 0 : i32
    return %c0_i32, %c0_i32_0 : i32, i32
  }
  func.func @transform_13(%arg0: i32) -> (i32, i32) {
    %c0_i32 = arith.constant 0 : i32
    %c0_i32_0 = arith.constant 0 : i32
    %c0_i32_1 = arith.constant 0 : i32
    return %c0_i32, %c0_i32_0 : i32, i32
  }
}

</mosaic_0001>

<llo_original>
// kernel: neg.1
$region0: #{neg.1}
  #allocation0 [shape = 's32[1]{0}', space=sflag, size = 0x4, scoped, tag = 'scoped memory for neg.1']
  %s0 = inlined_call_operand.vmem [shape: s32[4], index: 0, kind: input, shape index: {}]
  %s1 = inlined_call_operand.vmem [shape: s32[4], index: 1, kind: output, shape index: {}]
  %v2 = vld [vmem:[%s0] sm:$0x1]
  %3 = xla_tuple %v2
  %4 = xla_tuple %3
  %v5 = vsub.s32 0, %v2
  %6 = xla_tuple %v5
  %7 = vst [vmem:[%s1] sm:$0x1] %v5

// kernel: lstm_model_forward.1
$region0: #{lstm_model_forward.1}
  #allocation0 [shape = 'u32[]', space=smem, size = 0x4, offset = 0x4, fixed_abs, tag = 'smem constant byte address 0x4 - core index']
  #allocation1 [shape = 'u32[144,128]{1,0:T(1,128)}', space=vmem, size = 0x12000, scoped, tag = 'internal scratch']
  #allocation2 [shape = 'f32[96,32]{1,0:T(8,128)}', space=vmem, size = 0xc000, scoped, tag = 'scratch operand']
  #allocation3 [shape = 'f32[96,128]{1,0:T(8,128)}', space=vmem, size = 0xc000, scoped, tag = 'scratch operand']
  %s0 = inlined_call_operand.vmem [shape: bf16[96,32], index: 0, kind: input, shape index: {}]
  %s1 = inlined_call_operand.vmem [shape: s32[8,1], index: 1, kind: input, shape index: {}]
  %s2 = inlined_call_operand.vmem [shape: f32[96,1], index: 2, kind: input, shape index: {}]
  %s3 = inlined_call_operand.vmem [shape: bf16[32,128], index: 3, kind: input, shape index: {}]
  %s4 = inlined_call_operand.vmem [shape: bf16[32,128], index: 4, kind: input, shape index: {}]
  %s5 = inlined_call_operand.vmem [shape: f32[1,128], index: 5, kind: input, shape index: {}]
  %s6 = inlined_call_operand.vmem [shape: bf16[32,128], index: 6, kind: input, shape index: {}]
  %s7 = inlined_call_operand.vmem [shape: bf16[32,128], index: 7, kind: input, shape index: {}]
  %s8 = inlined_call_operand.vmem [shape: f32[1,128], index: 8, kind: input, shape index: {}]
  %s9 = inlined_call_operand.vmem [shape: f32[2,8,32], index: 9, kind: input, shape index: {}]
  %s10 = inlined_call_operand.vmem [shape: f32[2,8,32], index: 10, kind: input, shape index: {}]
  %s11 = inlined_call_operand.vmem [shape: bf16[32,128], index: 11, kind: input, shape index: {}]
  %s12 = inlined_call_operand.vmem [shape: f32[1,128], index: 12, kind: input, shape index: {}]
  %s13 = inlined_call_operand.vmem [shape: f32[96,128], index: 13, kind: output, shape index: {}]
  %s14 = sld [smem:[#allocation0]]
  $region62: #{lstm_model_forward.1} parent=0
    _
  %s16 = ssub.s32 1, %s14
  %s17 = scalar_select 0, %s16, %s14
  // Predicated region
  $region2: #{lstm_model_forward.1} parent=0 // pred_check
    _
  $region3: #{lstm_model_forward.1} parent=0 // pred_check_branch
    %19 = sbr.rel (0) target = $region5
  $region4: #{lstm_model_forward.1} parent=0 // pred_region
    _
  $region5: #{lstm_model_forward.1} parent=0 // pred_fallthru
    _
  // Predicated region
  $region6: #{lstm_model_forward.1} parent=0 // pred_check
    _
  $region7: #{lstm_model_forward.1} parent=0 // pred_check_branch
    %21 = sbr.rel (0) target = $region9
  $region8: #{lstm_model_forward.1} parent=0 // pred_region
    _
  $region9: #{lstm_model_forward.1} parent=0 // pred_fallthru
    _
  // Predicated region
  $region10: #{lstm_model_forward.1} parent=0 // pred_check
    _
  $region11: #{lstm_model_forward.1} parent=0 // pred_check_branch
    %23 = sbr.rel (0) target = $region13
  $region12: #{lstm_model_forward.1} parent=0 // pred_region
    _
  $region13: #{lstm_model_forward.1} parent=0 // pred_fallthru
    _
  // Predicated region
  $region14: #{lstm_model_forward.1} parent=0 // pred_check
    _
  $region15: #{lstm_model_forward.1} parent=0 // pred_check_branch
    %25 = sbr.rel (0) target = $region17
  $region16: #{lstm_model_forward.1} parent=0 // pred_region
    _
  $region17: #{lstm_model_forward.1} parent=0 // pred_fallthru
    _
  // Predicated region
  $region18: #{lstm_model_forward.1} parent=0 // pred_check
    _
  $region19: #{lstm_model_forward.1} parent=0 // pred_check_branch
    %27 = sbr.rel (0) target = $region21
  $region20: #{lstm_model_forward.1} parent=0 // pred_region
    _
  $region21: #{lstm_model_forward.1} parent=0 // pred_fallthru
    _
  // Predicated region
  $region22: #{lstm_model_forward.1} parent=0 // pred_check
    _
  $region23: #{lstm_model_forward.1} parent=0 // pred_check_branch
    %29 = sbr.rel (0) target = $region25
  $region24: #{lstm_model_forward.1} parent=0 // pred_region
    _
  $region25: #{lstm_model_forward.1} parent=0 // pred_fallthru
    _
  // Predicated region
  $region26: #{lstm_model_forward.1} parent=0 // pred_check
    _
  $region27: #{lstm_model_forward.1} parent=0 // pred_check_branch
    %31 = sbr.rel (0) target = $region29
  $region28: #{lstm_model_forward.1} parent=0 // pred_region
    _
  $region29: #{lstm_model_forward.1} parent=0 // pred_fallthru
    _
  // Predicated region
  $region30: #{lstm_model_forward.1} parent=0 // pred_check
    _
  $region31: #{lstm_model_forward.1} parent=0 // pred_check_branch
    %33 = sbr.rel (0) target = $region33
  $region32: #{lstm_model_forward.1} parent=0 // pred_region
    _
  $region33: #{lstm_model_forward.1} parent=0 // pred_fallthru
    _
  // Predicated region
  $region34: #{lstm_model_forward.1} parent=0 // pred_check
    _
  $region35: #{lstm_model_forward.1} parent=0 // pred_check_branch
    %35 = sbr.rel (0) target = $region37
  $region36: #{lstm_model_forward.1} parent=0 // pred_region
    _
  $region37: #{lstm_model_forward.1} parent=0 // pred_fallthru
    _
  // Predicated region
  $region38: #{lstm_model_forward.1} parent=0 // pred_check
    _
  $region39: #{lstm_model_forward.1} parent=0 // pred_check_branch
    %37 = sbr.rel (0) target = $region41
  $region40: #{lstm_model_forward.1} parent=0 // pred_region
    _
  $region41: #{lstm_model_forward.1} parent=0 // pred_fallthru
    _
  // Predicated region
  $region42: #{lstm_model_forward.1} parent=0 // pred_check
    _
  $region43: #{lstm_model_forward.1} parent=0 // pred_check_branch
    %39 = sbr.rel (0) target = $region45
  $region44: #{lstm_model_forward.1} parent=0 // pred_region
    _
  $region45: #{lstm_model_forward.1} parent=0 // pred_fallthru
    _
  // Predicated region
  $region46: #{lstm_model_forward.1} parent=0 // pred_check
    _
  $region47: #{lstm_model_forward.1} parent=0 // pred_check_branch
    %41 = sbr.rel (0) target = $region49
  $region48: #{lstm_model_forward.1} parent=0 // pred_region
    _
  $region49: #{lstm_model_forward.1} parent=0 // pred_fallthru
    _
  // Predicated region
  $region50: #{lstm_model_forward.1} parent=0 // pred_check
    _
  $region51: #{lstm_model_forward.1} parent=0 // pred_check_branch
    %43 = sbr.rel (0) target = $region53
  $region52: #{lstm_model_forward.1} parent=0 // pred_region
    _
  $region53: #{lstm_model_forward.1} parent=0 // pred_fallthru
    _
  %v45 = vld [vmem:[%s1] sm:$0xff]
  %v46 = vld [vmem:[%s0] sm:$0xf]
  %v47 = vld [vmem:[%s0 + $0x4] sm:$0xf]
  %v48 = vld [vmem:[%s0 + $0x8] sm:$0xf]
  %v49 = vld [vmem:[%s0 + $0xc] sm:$0xf]
  %v50 = vld [vmem:[%s0 + $0x10] sm:$0xf]
  %v51 = vld [vmem:[%s0 + $0x14] sm:$0xf]
  %v52 = vld [vmem:[%s0 + $0x18] sm:$0xf]
  %v53 = vld [vmem:[%s0 + $0x1c] sm:$0xf]
  %v54 = vld [vmem:[%s0 + $0x20] sm:$0xf]
  %v55 = vld [vmem:[%s0 + $0x24] sm:$0xf]
  %v56 = vld [vmem:[%s0 + $0x28] sm:$0xf]
  %v57 = vld [vmem:[%s0 + $0x2c] sm:$0xf]
  %v58 = vld [vmem:[%s3] sm:$0xf]
  %v59 = vld [vmem:[%s3 + $0x4] sm:$0xf]
  %v60 = vld [vmem:[%s3 + $0x8] sm:$0xf]
  %v61 = vld [vmem:[%s3 + $0xc] sm:$0xf]
  %v62 = vld [vmem:[%s5] sm:$0x1]
  %v64 = vlaneseq
  %v65 = vshrl.u32 %v64, 7
  %v66 = vsub.s32 0, %v65
  %v67 = vrot.slane %v62, %v66
  %v81 = vunpack.c.l.b16 %v46
  %v82 = vunpack.c.l.b16 %v47
  %v83 = vunpack.c.l.b16 %v48
  %v84 = vunpack.c.l.b16 %v49
  %v85 = vunpack.c.l.b16 %v50
  %v86 = vunpack.c.l.b16 %v51
  %v87 = vunpack.c.l.b16 %v52
  %v88 = vunpack.c.l.b16 %v53
  %v89 = vunpack.c.l.b16 %v54
  %v90 = vunpack.c.l.b16 %v55
  %v91 = vunpack.c.l.b16 %v56
  %v92 = vunpack.c.l.b16 %v57
  %v93 = vpack.c.b16 %v82, %v81
  %v94 = vpack.c.b16 %v84, %v83
  %v95 = vpack.c.b16 %v86, %v85
  %v96 = vpack.c.b16 %v88, %v87
  %v97 = vpack.c.b16 %v90, %v89
  %v98 = vpack.c.b16 %v92, %v91
  %v103 = vunpack.c.l.b16 %v58
  %v104 = vunpack.c.l.b16 %v59
  %v105 = vunpack.c.l.b16 %v60
  %v106 = vunpack.c.l.b16 %v61
  %v107 = vpack.c.b16 %v104, %v103
  %v108 = vpack.c.b16 %v106, %v105
  %vm111 = vcmask 261120
  %v113 = vsel %vm111, %v93, 0
  %v116 = vsel %vm111, %v94, 0
  %v119 = vsel %vm111, %v95, 0
  %v122 = vsel %vm111, %v96, 0
  %v125 = vsel %vm111, %v97, 0
  %v128 = vsel %vm111, %v98, 0
  %130 = vmatprep.subr.bf16.mxu0 0
  %131 = vmatpush1.bf16.msra.mxu0 %v107
  %132 = vmatprep.subr.bf16.mxu0 0
  %133 = vmatpush1.bf16.msra.mxu0 %v108
  %134 = vmatprep.subr.bf16.mxu0 0
  %135 = vmatpush1.bf16.msra.mxu0 0
  %136 = vmatprep.subr.bf16.mxu0 0
  %137 = vmatpush1.bf16.msra.mxu0 0
  %138 = vmatprep.subr.bf16.mxu0 0
  %139 = vmatpush1.bf16.msra.mxu0 0
  %140 = vmatprep.subr.bf16.mxu0 0
  %141 = vmatpush1.bf16.msra.mxu0 0
  %142 = vmatprep.subr.bf16.mxu0 0
  %143 = vmatpush1.bf16.msra.mxu0 0
  %144 = vmatprep.subr.bf16.mxu0 0
  %145 = vmatpush1.bf16.msra.mxu0 0
  %146 = vmatprep.subr.bf16.mxu0 0
  %147 = vmatpush1.bf16.msra.mxu0 0
  %148 = vmatprep.subr.bf16.mxu0 0
  %149 = vmatpush1.bf16.msra.mxu0 0
  %150 = vmatprep.subr.bf16.mxu0 0
  %151 = vmatpush1.bf16.msra.mxu0 0
  %152 = vmatprep.subr.bf16.mxu0 0
  %153 = vmatpush1.bf16.msra.mxu0 0
  %154 = vmatprep.subr.bf16.mxu0 0
  %155 = vmatpush1.bf16.msra.mxu0 0
  %156 = vmatprep.subr.bf16.mxu0 0
  %157 = vmatpush1.bf16.msra.mxu0 0
  %158 = vmatprep.subr.bf16.mxu0 0
  %159 = vmatpush1.bf16.msra.mxu0 0
  %160 = vmatprep.subr.bf16.mxu0 0
  %161 = vmatpush1.bf16.msra.mxu0 0
  %162 = vmatprep.mubr.bf16.mxu0 0
  %163 = vmatmul.mubr.bf16.gmra.mrb[0].mxu0 %v113
  %v164 = vpop.f32.mrb[0].mxu0
  %v165 = vadd.f32 %v67, %v164
  %v166 = vpop.f32.mrb[0].mxu0
  %v167 = vpop.f32.mrb[0].mxu0
  %v168 = vadd.f32 %v67, %v167
  %v169 = vpop.f32.mrb[0].mxu0
  %170 = vmatprep.mubr.bf16.mxu0 0
  %171 = vmatmul.mubr.bf16.gmra.mrb[0].mxu0 %v116
  %v172 = vpop.f32.mrb[0].mxu0
  %v173 = vadd.f32 %v67, %v172
  %v174 = vpop.f32.mrb[0].mxu0
  %v175 = vpop.f32.mrb[0].mxu0
  %v176 = vadd.f32 %v67, %v175
  %v177 = vpop.f32.mrb[0].mxu0
  %178 = vmatprep.mubr.bf16.mxu0 0
  %179 = vmatmul.mubr.bf16.gmra.mrb[0].mxu0 %v119
  %v180 = vpop.f32.mrb[0].mxu0
  %v181 = vadd.f32 %v67, %v180
  %v182 = vpop.f32.mrb[0].mxu0
  %v183 = vpop.f32.mrb[0].mxu0
  %v184 = vadd.f32 %v67, %v183
  %v185 = vpop.f32.mrb[0].mxu0
  %186 = vmatprep.mubr.bf16.mxu0 0
  %187 = vmatmul.mubr.bf16.gmra.mrb[0].mxu0 %v122
  %v188 = vpop.f32.mrb[0].mxu0
  %v189 = vadd.f32 %v67, %v188
  %v190 = vpop.f32.mrb[0].mxu0
  %v191 = vpop.f32.mrb[0].mxu0
  %v192 = vadd.f32 %v67, %v191
  %v193 = vpop.f32.mrb[0].mxu0
  %194 = vmatprep.mubr.bf16.mxu0 0
  %195 = vmatmul.mubr.bf16.gmra.mrb[0].mxu0 %v125
  %v196 = vpop.f32.mrb[0].mxu0
  %v197 = vadd.f32 %v67, %v196
  %v198 = vpop.f32.mrb[0].mxu0
  %v199 = vpop.f32.mrb[0].mxu0
  %v200 = vadd.f32 %v67, %v199
  %v201 = vpop.f32.mrb[0].mxu0
  %202 = vmatprep.mubr.bf16.mxu0 0
  %203 = vmatmul.mubr.bf16.gmra.mrb[0].mxu0 %v128
  %v204 = vpop.f32.mrb[0].mxu0
  %v205 = vadd.f32 %v67, %v204
  %v206 = vpop.f32.mrb[0].mxu0
  %v207 = vpop.f32.mrb[0].mxu0
  %v208 = vadd.f32 %v67, %v207
  %v209 = vpop.f32.mrb[0].mxu0
  %210 = vdwg.mxu0
  %211 = vst [vmem:[#allocation3] sm:$0xff] %v165
  %212 = vst [vmem:[#allocation3 + $0x8] sm:$0xff] %v168
  %213 = vst [vmem:[#allocation3 + $0x10] sm:$0xff] %v173
  %214 = vst [vmem:[#allocation3 + $0x18] sm:$0xff] %v176
  %215 = vst [vmem:[#allocation3 + $0x20] sm:$0xff] %v181
  %216 = vst [vmem:[#allocation3 + $0x28] sm:$0xff] %v184
  %217 = vst [vmem:[#allocation3 + $0x30] sm:$0xff] %v189
  %218 = vst [vmem:[#allocation3 + $0x38] sm:$0xff] %v192
  %219 = vst [vmem:[#allocation3 + $0x40] sm:$0xff] %v197
  %220 = vst [vmem:[#allocation3 + $0x48] sm:$0xff] %v200
  %221 = vst [vmem:[#allocation3 + $0x50] sm:$0xff] %v205
  %222 = vst [vmem:[#allocation3 + $0x58] sm:$0xff] %v208
  %v223 = vld [vmem:[%s9] sm:$0xff]
  %v224 = vld [vmem:[%s10] sm:$0xff]
  %v225 = vld [vmem:[%s4] sm:$0xf]
  %v226 = vld [vmem:[%s4 + $0x4] sm:$0xf]
  %v227 = vld [vmem:[%s4 + $0x8] sm:$0xf]
  %v228 = vld [vmem:[%s4 + $0xc] sm:$0xf]
  %v229 = vld [vmem:[#allocation3] sm:$0xff]
  %v230 = vpack.c.bf16 %v223, %v223
  %v235 = vunpack.c.l.b16 %v225
  %v236 = vunpack.c.l.b16 %v226
  %v237 = vunpack.c.l.b16 %v227
  %v238 = vunpack.c.l.b16 %v228
  %v239 = vpack.c.b16 %v236, %v235
  %v240 = vpack.c.b16 %v238, %v237
  %v244 = vsel %vm111, %v230, 0
  %246 = vmatprep.subr.bf16.mxu0 0
  %247 = vmatpush1.bf16.msra.mxu0 %v239
  %248 = vmatprep.subr.bf16.mxu0 0
  %249 = vmatpush1.bf16.msra.mxu0 %v240
  %250 = vmatprep.subr.bf16.mxu0 0
  %251 = vmatpush1.bf16.msra.mxu0 0
  %252 = vmatprep.subr.bf16.mxu0 0
  %253 = vmatpush1.bf16.msra.mxu0 0
  %254 = vmatprep.subr.bf16.mxu0 0
  %255 = vmatpush1.bf16.msra.mxu0 0
  %256 = vmatprep.subr.bf16.mxu0 0
  %257 = vmatpush1.bf16.msra.mxu0 0
  %258 = vmatprep.subr.bf16.mxu0 0
  %259 = vmatpush1.bf16.msra.mxu0 0
  %260 = vmatprep.subr.bf16.mxu0 0
  %261 = vmatpush1.bf16.msra.mxu0 0
  %262 = vmatprep.subr.bf16.mxu0 0
  %263 = vmatpush1.bf16.msra.mxu0 0
  %264 = vmatprep.subr.bf16.mxu0 0
  %265 = vmatpush1.bf16.msra.mxu0 0
  %266 = vmatprep.subr.bf16.mxu0 0
  %267 = vmatpush1.bf16.msra.mxu0 0
  %268 = vmatprep.subr.bf16.mxu0 0
  %269 = vmatpush1.bf16.msra.mxu0 0
  %270 = vmatprep.subr.bf16.mxu0 0
  %271 = vmatpush1.bf16.msra.mxu0 0
  %272 = vmatprep.subr.bf16.mxu0 0
  %273 = vmatpush1.bf16.msra.mxu0 0
  %274 = vmatprep.subr.bf16.mxu0 0
  %275 = vmatpush1.bf16.msra.mxu0 0
  %276 = vmatprep.subr.bf16.mxu0 0
  %277 = vmatpush1.bf16.msra.mxu0 0
  %278 = vmatprep.mubr.bf16.mxu0 0
  %279 = vmatmul.mubr.bf16.gmra.mrb[0].mxu0 %v244
  %v280 = vpop.f32.mrb[0].mxu0
  %v281 = vadd.f32 0.0, %v280
  %v282 = vpop.f32.mrb[0].mxu0
  %v283 = vpop.f32.mrb[0].mxu0
  %v284 = vpop.f32.mrb[0].mxu0
  %285 = vdwg.mxu0
  %v286 = vadd.f32 %v229, %v281
  %v287 = vxor.u32 %v286, 2147483648
  %v288 = vmul.f32 %v287, 1.442695
  %v289 = vpow.pop %v288
  %v290 = vadd.f32 %v289, 1.0
  %v291 = vrcp.pop %v290
  %v292 = vmul.f32 1.0, %v291
  %v293 = vmul.f32 %v292, 2.0
  %v294 = vsub.f32 %v293, 1.0
  %296 = vrot.lane.b32.xlu0 %v224, 32
  %v297 = vpop.permute.xlu0 %296
  %v299 = vmul.f32 %v292, %v297
  %301 = vrot.lane.b32.xlu0 %v294, 64
  %v302 = vpop.permute.xlu0 %301
  %v304 = vmul.f32 %v292, %v302
  %306 = vrot.lane.b32.xlu0 %v304, 32
  %v307 = vpop.permute.xlu0 %306
  %v309 = vadd.f32 %v299, %v307
  %v310 = vtanh.pop %v309
  %312 = vrot.lane.b32.xlu0 %v310, 64
  %v313 = vpop.permute.xlu0 %312
  %v315 = vmul.f32 %v292, %v313
  %vm316 = vcmp.gt.s32.totalorder %v45, 0
  %v317 = vsel %vm316, 1, 0
  %318 = vset.pattern.permute.xlu0 0
  %319 = vperm.xlu0 %318, %v317
  %v320 = vpop.permute.xlu0 %319
  %vm321 = vcmp.eq.s32.totalorder %v320, 1
  %v322 = vsel %vm321, %v309, %v297
  %324 = vrot.lane.b32.xlu0 %v223, 96
  %v325 = vpop.permute.xlu0 %324
  %v327 = vsel %vm321, %v315, %v325
  %v328 = vsel %vm321, %v315, 0.0
  %330 = vrot.lane.b32.xlu0 %v328, 32
  %v331 = vpop.permute.xlu0 %330
  %333 = vst.msk [vmem:[#allocation2] sm:$0xff] %vm111, %v331
  %v334 = vld [vmem:[#allocation3 + $0x8] sm:$0xff]
  %v335 = vpack.c.bf16 %v327, %v327
  %337 = vrot.lane.b32.xlu0 %v335, 32
  %v338 = vpop.permute.xlu0 %337
  %v340 = vsel %vm111, %v338, 0
  %342 = vmatprep.subr.bf16.mxu0 0
  %343 = vmatpush1.bf16.msra.mxu0 %v239
  %344 = vmatprep.subr.bf16.mxu0 0
  %345 = vmatpush1.bf16.msra.mxu0 %v240
  %346 = vmatprep.subr.bf16.mxu0 0
  %347 = vmatpush1.bf16.msra.mxu0 0
  %348 = vmatprep.subr.bf16.mxu0 0
  %349 = vmatpush1.bf16.msra.mxu0 0
  %350 = vmatprep.subr.bf16.mxu0 0
  %351 = vmatpush1.bf16.msra.mxu0 0
  %352 = vmatprep.subr.bf16.mxu0 0
  %353 = vmatpush1.bf16.msra.mxu0 0
  %354 = vmatprep.subr.bf16.mxu0 0
  %355 = vmatpush1.bf16.msra.mxu0 0
  %356 = vmatprep.subr.bf16.mxu0 0
  %357 = vmatpush1.bf16.msra.mxu0 0
  %358 = vmatprep.subr.bf16.mxu0 0
  %359 = vmatpush1.bf16.msra.mxu0 0
  %360 = vmatprep.subr.bf16.mxu0 0
  %361 = vmatpush1.bf16.msra.mxu0 0
  %362 = vmatprep.subr.bf16.mxu0 0
  %363 = vmatpush1.bf16.msra.mxu0 0
  %364 = vmatprep.subr.bf16.mxu0 0
  %365 = vmatpush1.bf16.msra.mxu0 0
  %366 = vmatprep.subr.bf16.mxu0 0
  %367 = vmatpush1.bf16.msra.mxu0 0
  %368 = vmatprep.subr.bf16.mxu0 0
  %369 = vmatpush1.bf16.msra.mxu0 0
  %370 = vmatprep.subr.bf16.mxu0 0
  %371 = vmatpush1.bf16.msra.mxu0 0
  %372 = vmatprep.subr.bf16.mxu0 0
  %373 = vmatpush1.bf16.msra.mxu0 0
  %374 = vmatprep.mubr.bf16.mxu0 0
  %375 = vmatmul.mubr.bf16.gmra.mrb[0].mxu0 %v340
  %v376 = vpop.f32.mrb[0].mxu0
  %v377 = vadd.f32 0.0, %v376
  %v378 = vpop.f32.mrb[0].mxu0
  %v379 = vpop.f32.mrb[0].mxu0
  %v380 = vpop.f32.mrb[0].mxu0
  %381 = vdwg.mxu0
  %v382 = vadd.f32 %v334, %v377
  %v383 = vxor.u32 %v382, 2147483648
  %v384 = vmul.f32 %v383, 1.442695
  %v385 = vpow.pop %v384
  %v386 = vadd.f32 %v385, 1.0
  %v387 = vrcp.pop %v386
  %v388 = vmul.f32 1.0, %v387
  %v389 = vmul.f32 %v388, 2.0
  %v390 = vsub.f32 %v389, 1.0
  %v391 = vmul.f32 %v388, %v322
  %393 = vrot.lane.b32.xlu0 %v390, 64
  %v394 = vpop.permute.xlu0 %393
  %v396 = vmul.f32 %v388, %v394
  %398 = vrot.lane.b32.xlu0 %v396, 32
  %v399 = vpop.permute.xlu0 %398
  %v401 = vadd.f32 %v391, %v399
  %v402 = vtanh.pop %v401
  %404 = vrot.lane.b32.xlu0 %v402, 64
  %v405 = vpop.permute.xlu0 %404
  %v407 = vmul.f32 %v388, %v405
  %vm408 = vcmp.gt.s32.totalorder %v45, 1
  %v409 = vsel %vm408, 1, 0
  %410 = vset.pattern.permute.xlu0 0
  %411 = vperm.xlu0 %410, %v409
  %v412 = vpop.permute.xlu0 %411
  %vm413 = vcmp.eq.s32.totalorder %v412, 1
  %v414 = vsel %vm413, %v401, %v322
  %v415 = vsel %vm413, %v407, %v327
  %v416 = vsel %vm413, %v407, 0.0
  %418 = vrot.lane.b32.xlu0 %v416, 32
  %v419 = vpop.permute.xlu0 %418
  %421 = vst.msk [vmem:[#allocation2 + $0x8] sm:$0xff] %vm111, %v419
  %v422 = vld [vmem:[#allocation3 + $0x10] sm:$0xff]
  %v423 = vpack.c.bf16 %v415, %v415
  %425 = vrot.lane.b32.xlu0 %v423, 32
  %v426 = vpop.permute.xlu0 %425
  %v428 = vsel %vm111, %v426, 0
  %430 = vmatprep.subr.bf16.mxu0 0
  %431 = vmatpush1.bf16.msra.mxu0 %v239
  %432 = vmatprep.subr.bf16.mxu0 0
  %433 = vmatpush1.bf16.msra.mxu0 %v240
  %434 = vmatprep.subr.bf16.mxu0 0
  %435 = vmatpush1.bf16.msra.mxu0 0
  %436 = vmatprep.subr.bf16.mxu0 0
  %437 = vmatpush1.bf16.msra.mxu0 0
  %438 = vmatprep.subr.bf16.mxu0 0
  %439 = vmatpush1.bf16.msra.mxu0 0
  %440 = vmatprep.subr.bf16.mxu0 0
  %441 = vmatpush1.bf16.msra.mxu0 0
  %442 = vmatprep.subr.bf16.mxu0 0
  %443 = vmatpush1.bf16.msra.mxu0 0
  %444 = vmatprep.subr.bf16.mxu0 0
  %445 = vmatpush1.bf16.msra.mxu0 0
  %446 = vmatprep.subr.bf16.mxu0 0
  %447 = vmatpush1.bf16.msra.mxu0 0
  %448 = vmatprep.subr.bf16.mxu0 0
  %449 = vmatpush1.bf16.msra.mxu0 0
  %450 = vmatprep.subr.bf16.mxu0 0
  %451 = vmatpush1.bf16.msra.mxu0 0
  %452 = vmatprep.subr.bf16.mxu0 0
  %453 = vmatpush1.bf16.msra.mxu0 0
  %454 = vmatprep.subr.bf16.mxu0 0
  %455 = vmatpush1.bf16.msra.mxu0 0
  %456 = vmatprep.subr.bf16.mxu0 0
  %457 = vmatpush1.bf16.msra.mxu0 0
  %458 = vmatprep.subr.bf16.mxu0 0
  %459 = vmatpush1.bf16.msra.mxu0 0
  %460 = vmatprep.subr.bf16.mxu0 0
  %461 = vmatpush1.bf16.msra.mxu0 0
  %462 = vmatprep.mubr.bf16.mxu0 0
  %463 = vmatmul.mubr.bf16.gmra.mrb[0].mxu0 %v428
  %v464 = vpop.f32.mrb[0].mxu0
  %v465 = vadd.f32 0.0, %v464
  %v466 = vpop.f32.mrb[0].mxu0
  %v467 = vpop.f32.mrb[0].mxu0
  %v468 = vpop.f32.mrb[0].mxu0
  %469 = vdwg.mxu0
  %v470 = vadd.f32 %v422, %v465
  %v471 = vxor.u32 %v470, 2147483648
  %v472 = vmul.f32 %v471, 1.442695
  %v473 = vpow.pop %v472
  %v474 = vadd.f32 %v473, 1.0
  %v475 = vrcp.pop %v474
  %v476 = vmul.f32 1.0, %v475
  %v477 = vmul.f32 %v476, 2.0
  %v478 = vsub.f32 %v477, 1.0
  %v479 = vmul.f32 %v476, %v414
  %481 = vrot.lane.b32.xlu0 %v478, 64
  %v482 = vpop.permute.xlu0 %481
  %v484 = vmul.f32 %v476, %v482
  %486 = vrot.lane.b32.xlu0 %v484, 32
  %v487 = vpop.permute.xlu0 %486
  %v489 = vadd.f32 %v479, %v487
  %v490 = vtanh.pop %v489
  %492 = vrot.lane.b32.xlu0 %v490, 64
  %v493 = vpop.permute.xlu0 %492
  %v495 = vmul.f32 %v476, %v493
  %vm496 = vcmp.gt.s32.totalorder %v45, 2
  %v497 = vsel %vm496, 1, 0
  %498 = vset.pattern.permute.xlu0 0
  %499 = vperm.xlu0 %498, %v497
  %v500 = vpop.permute.xlu0 %499
  %vm501 = vcmp.eq.s32.totalorder %v500, 1
  %v502 = vsel %vm501, %v489, %v414
  %v503 = vsel %vm501, %v495, %v415
  %v504 = vsel %vm501, %v495, 0.0
  %506 = vrot.lane.b32.xlu0 %v504, 32
  %v507 = vpop.permute.xlu0 %506
  %509 = vst.msk [vmem:[#allocation2 + $0x10] sm:$0xff] %vm111, %v507
  %v510 = vld [vmem:[#allocation3 + $0x18] sm:$0xff]
  %v511 = vpack.c.bf16 %v503, %v503
  %513 = vrot.lane.b32.xlu0 %v511, 32
  %v514 = vpop.permute.xlu0 %513
  %v516 = vsel %vm111, %v514, 0
  %518 = vmatprep.subr.bf16.mxu0 0
  %519 = vmatpush1.bf16.msra.mxu0 %v239
  %520 = vmatprep.subr.bf16.mxu0 0
  %521 = vmatpush1.bf16.msra.mxu0 %v240
  %522 = vmatprep.subr.bf16.mxu0 0
  %523 = vmatpush1.bf16.msra.mxu0 0
  %524 = vmatprep.subr.bf16.mxu0 0
  %525 = vmatpush1.bf16.msra.mxu0 0
  %526 = vmatprep.subr.bf16.mxu0 0
  %527 = vmatpush1.bf16.msra.mxu0 0
  %528 = vmatprep.subr.bf16.mxu0 0
  %529 = vmatpush1.bf16.msra.mxu0 0
  %530 = vmatprep.subr.bf16.mxu0 0
  %531 = vmatpush1.bf16.msra.mxu0 0
  %532 = vmatprep.subr.bf16.mxu0 0
  %533 = vmatpush1.bf16.msra.mxu0 0
  %534 = vmatprep.subr.bf16.mxu0 0
  %535 = vmatpush1.bf16.msra.mxu0 0
  %536 = vmatprep.subr.bf16.mxu0 0
  %537 = vmatpush1.bf16.msra.mxu0 0
  %538 = vmatprep.subr.bf16.mxu0 0
  %539 = vmatpush1.bf16.msra.mxu0 0
  %540 = vmatprep.subr.bf16.mxu0 0
  %541 = vmatpush1.bf16.msra.mxu0 0
  %542 = vmatprep.subr.bf16.mxu0 0
  %543 = vmatpush1.bf16.msra.mxu0 0
  %544 = vmatprep.subr.bf16.mxu0 0
  %545 = vmatpush1.bf16.msra.mxu0 0
  %546 = vmatprep.subr.bf16.mxu0 0
  %547 = vmatpush1.bf16.msra.mxu0 0
  %548 = vmatprep.subr.bf16.mxu0 0
  %549 = vmatpush1.bf16.msra.mxu0 0
  %550 = vmatprep.mubr.bf16.mxu0 0
  %551 = vmatmul.mubr.bf16.gmra.mrb[0].mxu0 %v516
  %v552 = vpop.f32.mrb[0].mxu0
  %v553 = vadd.f32 0.0, %v552
  %v554 = vpop.f32.mrb[0].mxu0
  %v555 = vpop.f32.mrb[0].mxu0
  %v556 = vpop.f32.mrb[0].mxu0
  %557 = vdwg.mxu0
  %v558 = vadd.f32 %v510, %v553
  %v559 = vxor.u32 %v558, 2147483648
  %v560 = vmul.f32 %v559, 1.442695
  %v561 = vpow.pop %v560
  %v562 = vadd.f32 %v561, 1.0
  %v563 = vrcp.pop %v562
  %v564 = vmul.f32 1.0, %v563
  %v565 = vmul.f32 %v564, 2.0
  %v566 = vsub.f32 %v565, 1.0
  %v567 = vmul.f32 %v564, %v502
  %569 = vrot.lane.b32.xlu0 %v566, 64
  %v570 = vpop.permute.xlu0 %569
  %v572 = vmul.f32 %v564, %v570
  %574 = vrot.lane.b32.xlu0 %v572, 32
  %v575 = vpop.permute.xlu0 %574
  %v577 = vadd.f32 %v567, %v575
  %v578 = vtanh.pop %v577
  %580 = vrot.lane.b32.xlu0 %v578, 64
  %v581 = vpop.permute.xlu0 %580
  %v583 = vmul.f32 %v564, %v581
  %vm584 = vcmp.gt.s32.totalorder %v45, 3
  %v585 = vsel %vm584, 1, 0
  %586 = vset.pattern.permute.xlu0 0
  %587 = vperm.xlu0 %586, %v585
  %v588 = vpop.permute.xlu0 %587
  %vm589 = vcmp.eq.s32.totalorder %v588, 1
  %v590 = vsel %vm589, %v577, %v502
  %v591 = vsel %vm589, %v583, %v503
  %v592 = vsel %vm589, %v583, 0.0
  %594 = vrot.lane.b32.xlu0 %v592, 32
  %v595 = vpop.permute.xlu0 %594
  %597 = vst.msk [vmem:[#allocation2 + $0x18] sm:$0xff] %vm111, %v595
  %v598 = vld [vmem:[#allocation3 + $0x20] sm:$0xff]
  %v599 = vpack.c.bf16 %v591, %v591
  %601 = vrot.lane.b32.xlu0 %v599, 32
  %v602 = vpop.permute.xlu0 %601
  %v604 = vsel %vm111, %v602, 0
  %606 = vmatprep.subr.bf16.mxu0 0
  %607 = vmatpush1.bf16.msra.mxu0 %v239
  %608 = vmatprep.subr.bf16.mxu0 0
  %609 = vmatpush1.bf16.msra.mxu0 %v240
  %610 = vmatprep.subr.bf16.mxu0 0
  %611 = vmatpush1.bf16.msra.mxu0 0
  %612 = vmatprep.subr.bf16.mxu0 0
  %613 = vmatpush1.bf16.msra.mxu0 0
  %614 = vmatprep.subr.bf16.mxu0 0
  %615 = vmatpush1.bf16.msra.mxu0 0
  %616 = vmatprep.subr.bf16.mxu0 0
  %617 = vmatpush1.bf16.msra.mxu0 0
  %618 = vmatprep.subr.bf16.mxu0 0
  %619 = vmatpush1.bf16.msra.mxu0 0
  %620 = vmatprep.subr.bf16.mxu0 0
  %621 = vmatpush1.bf16.msra.mxu0 0
  %622 = vmatprep.subr.bf16.mxu0 0
  %623 = vmatpush1.bf16.msra.mxu0 0
  %624 = vmatprep.subr.bf16.mxu0 0
  %625 = vmatpush1.bf16.msra.mxu0 0
  %626 = vmatprep.subr.bf16.mxu0 0
  %627 = vmatpush1.bf16.msra.mxu0 0
  %628 = vmatprep.subr.bf16.mxu0 0
  %629 = vmatpush1.bf16.msra.mxu0 0
  %630 = vmatprep.subr.bf16.mxu0 0
  %631 = vmatpush1.bf16.msra.mxu0 0
  %632 = vmatprep.subr.bf16.mxu0 0
  %633 = vmatpush1.bf16.msra.mxu0 0
  %634 = vmatprep.subr.bf16.mxu0 0
  %635 = vmatpush1.bf16.msra.mxu0 0
  %636 = vmatprep.subr.bf16.mxu0 0
  %637 = vmatpush1.bf16.msra.mxu0 0
  %638 = vmatprep.mubr.bf16.mxu0 0
  %639 = vmatmul.mubr.bf16.gmra.mrb[0].mxu0 %v604
  %v640 = vpop.f32.mrb[0].mxu0
  %v641 = vadd.f32 0.0, %v640
  %v642 = vpop.f32.mrb[0].mxu0
  %v643 = vpop.f32.mrb[0].mxu0
  %v644 = vpop.f32.mrb[0].mxu0
  %645 = vdwg.mxu0
  %v646 = vadd.f32 %v598, %v641
  %v647 = vxor.u32 %v646, 2147483648
  %v648 = vmul.f32 %v647, 1.442695
  %v649 = vpow.pop %v648
  %v650 = vadd.f32 %v649, 1.0
  %v651 = vrcp.pop %v650
  %v652 = vmul.f32 1.0, %v651
  %v653 = vmul.f32 %v652, 2.0
  %v654 = vsub.f32 %v653, 1.0
  %v655 = vmul.f32 %v652, %v590
  %657 = vrot.lane.b32.xlu0 %v654, 64
  %v658 = vpop.permute.xlu0 %657
  %v660 = vmul.f32 %v652, %v658
  %662 = vrot.lane.b32.xlu0 %v660, 32
  %v663 = vpop.permute.xlu0 %662
  %v665 = vadd.f32 %v655, %v663
  %v666 = vtanh.pop %v665
  %668 = vrot.lane.b32.xlu0 %v666, 64
  %v669 = vpop.permute.xlu0 %668
  %v671 = vmul.f32 %v652, %v669
  %vm672 = vcmp.gt.s32.totalorder %v45, 4
  %v673 = vsel %vm672, 1, 0
  %674 = vset.pattern.permute.xlu0 0
  %675 = vperm.xlu0 %674, %v673
  %v676 = vpop.permute.xlu0 %675
  %vm677 = vcmp.eq.s32.totalorder %v676, 1
  %v678 = vsel %vm677, %v665, %v590
  %v679 = vsel %vm677, %v671, %v591
  %v680 = vsel %vm677, %v671, 0.0
  %682 = vrot.lane.b32.xlu0 %v680, 32
  %v683 = vpop.permute.xlu0 %682
  %685 = vst.msk [vmem:[#allocation2 + $0x20] sm:$0xff] %vm111, %v683
  %v686 = vld [vmem:[#allocation3 + $0x28] sm:$0xff]
  %v687 = vpack.c.bf16 %v679, %v679
  %689 = vrot.lane.b32.xlu0 %v687, 32
  %v690 = vpop.permute.xlu0 %689
  %v692 = vsel %vm111, %v690, 0
  %694 = vmatprep.subr.bf16.mxu0 0
  %695 = vmatpush1.bf16.msra.mxu0 %v239
  %696 = vmatprep.subr.bf16.mxu0 0
  %697 = vmatpush1.bf16.msra.mxu0 %v240
  %698 = vmatprep.subr.bf16.mxu0 0
  %699 = vmatpush1.bf16.msra.mxu0 0
  %700 = vmatprep.subr.bf16.mxu0 0
  %701 = vmatpush1.bf16.msra.mxu0 0
  %702 = vmatprep.subr.bf16.mxu0 0
  %703 = vmatpush1.bf16.msra.mxu0 0
  %704 = vmatprep.subr.bf16.mxu0 0
  %705 = vmatpush1.bf16.msra.mxu0 0
  %706 = vmatprep.subr.bf16.mxu0 0
  %707 = vmatpush1.bf16.msra.mxu0 0
  %708 = vmatprep.subr.bf16.mxu0 0
  %709 = vmatpush1.bf16.msra.mxu0 0
  %710 = vmatprep.subr.bf16.mxu0 0
  %711 = vmatpush1.bf16.msra.mxu0 0
  %712 = vmatprep.subr.bf16.mxu0 0
  %713 = vmatpush1.bf16.msra.mxu0 0
  %714 = vmatprep.subr.bf16.mxu0 0
  %715 = vmatpush1.bf16.msra.mxu0 0
  %716 = vmatprep.subr.bf16.mxu0 0
  %717 = vmatpush1.bf16.msra.mxu0 0
  %718 = vmatprep.subr.bf16.mxu0 0
  %719 = vmatpush1.bf16.msra.mxu0 0
  %720 = vmatprep.subr.bf16.mxu0 0
  %721 = vmatpush1.bf16.msra.mxu0 0
  %722 = vmatprep.subr.bf16.mxu0 0
  %723 = vmatpush1.bf16.msra.mxu0 0
  %724 = vmatprep.subr.bf16.mxu0 0
  %725 = vmatpush1.bf16.msra.mxu0 0
  %726 = vmatprep.mubr.bf16.mxu0 0
  %727 = vmatmul.mubr.bf16.gmra.mrb[0].mxu0 %v692
  %v728 = vpop.f32.mrb[0].mxu0
  %v729 = vadd.f32 0.0, %v728
  %v730 = vpop.f32.mrb[0].mxu0
  %v731 = vpop.f32.mrb[0].mxu0
  %v732 = vpop.f32.mrb[0].mxu0
  %733 = vdwg.mxu0
  %v734 = vadd.f32 %v686, %v729
  %v735 = vxor.u32 %v734, 2147483648
  %v736 = vmul.f32 %v735, 1.442695
  %v737 = vpow.pop %v736
  %v738 = vadd.f32 %v737, 1.0
  %v739 = vrcp.pop %v738
  %v740 = vmul.f32 1.0, %v739
  %v741 = vmul.f32 %v740, 2.0
  %v742 = vsub.f32 %v741, 1.0
  %v743 = vmul.f32 %v740, %v678
  %745 = vrot.lane.b32.xlu0 %v742, 64
  %v746 = vpop.permute.xlu0 %745
  %v748 = vmul.f32 %v740, %v746
  %750 = vrot.lane.b32.xlu0 %v748, 32
  %v751 = vpop.permute.xlu0 %750
  %v753 = vadd.f32 %v743, %v751
  %v754 = vtanh.pop %v753
  %756 = vrot.lane.b32.xlu0 %v754, 64
  %v757 = vpop.permute.xlu0 %756
  %v759 = vmul.f32 %v740, %v757
  %vm760 = vcmp.gt.s32.totalorder %v45, 5
  %v761 = vsel %vm760, 1, 0
  %762 = vset.pattern.permute.xlu0 0
  %763 = vperm.xlu0 %762, %v761
  %v764 = vpop.permute.xlu0 %763
  %vm765 = vcmp.eq.s32.totalorder %v764, 1
  %v766 = vsel %vm765, %v753, %v678
  %v767 = vsel %vm765, %v759, %v679
  %v768 = vsel %vm765, %v759, 0.0
  %770 = vrot.lane.b32.xlu0 %v768, 32
  %v771 = vpop.permute.xlu0 %770
  %773 = vst.msk [vmem:[#allocation2 + $0x28] sm:$0xff] %vm111, %v771
  %v774 = vld [vmem:[#allocation3 + $0x30] sm:$0xff]
  %v775 = vpack.c.bf16 %v767, %v767
  %777 = vrot.lane.b32.xlu0 %v775, 32
  %v778 = vpop.permute.xlu0 %777
  %v780 = vsel %vm111, %v778, 0
  %782 = vmatprep.subr.bf16.mxu0 0
  %783 = vmatpush1.bf16.msra.mxu0 %v239
  %784 = vmatprep.subr.bf16.mxu0 0
  %785 = vmatpush1.bf16.msra.mxu0 %v240
  %786 = vmatprep.subr.bf16.mxu0 0
  %787 = vmatpush1.bf16.msra.mxu0 0
  %788 = vmatprep.subr.bf16.mxu0 0
  %789 = vmatpush1.bf16.msra.mxu0 0
  %790 = vmatprep.subr.bf16.mxu0 0
  %791 = vmatpush1.bf16.msra.mxu0 0
  %792 = vmatprep.subr.bf16.mxu0 0
  %793 = vmatpush1.bf16.msra.mxu0 0
  %794 = vmatprep.subr.bf16.mxu0 0
  %795 = vmatpush1.bf16.msra.mxu0 0
  %796 = vmatprep.subr.bf16.mxu0 0
  %797 = vmatpush1.bf16.msra.mxu0 0
  %798 = vmatprep.subr.bf16.mxu0 0
  %799 = vmatpush1.bf16.msra.mxu0 0
  %800 = vmatprep.subr.bf16.mxu0 0
  %801 = vmatpush1.bf16.msra.mxu0 0
  %802 = vmatprep.subr.bf16.mxu0 0
  %803 = vmatpush1.bf16.msra.mxu0 0
  %804 = vmatprep.subr.bf16.mxu0 0
  %805 = vmatpush1.bf16.msra.mxu0 0
  %806 = vmatprep.subr.bf16.mxu0 0
  %807 = vmatpush1.bf16.msra.mxu0 0
  %808 = vmatprep.subr.bf16.mxu0 0
  %809 = vmatpush1.bf16.msra.mxu0 0
  %810 = vmatprep.subr.bf16.mxu0 0
  %811 = vmatpush1.bf16.msra.mxu0 0
  %812 = vmatprep.subr.bf16.mxu0 0
  %813 = vmatpush1.bf16.msra.mxu0 0
  %814 = vmatprep.mubr.bf16.mxu0 0
  %815 = vmatmul.mubr.bf16.gmra.mrb[0].mxu0 %v780
  %v816 = vpop.f32.mrb[0].mxu0
  %v817 = vadd.f32 0.0, %v816
  %v818 = vpop.f32.mrb[0].mxu0
  %v819 = vpop.f32.mrb[0].mxu0
  %v820 = vpop.f32.mrb[0].mxu0
  %821 = vdwg.mxu0
  %v822 = vadd.f32 %v774, %v817
  %v823 = vxor.u32 %v822, 2147483648
  %v824 = vmul.f32 %v823, 1.442695
  %v825 = vpow.pop %v824
  %v826 = vadd.f32 %v825, 1.0
  %v827 = vrcp.pop %v826
  %v828 = vmul.f32 1.0, %v827
  %v829 = vmul.f32 %v828, 2.0
  %v830 = vsub.f32 %v829, 1.0
  %v831 = vmul.f32 %v828, %v766
  %833 = vrot.lane.b32.xlu0 %v830, 64
  %v834 = vpop.permute.xlu0 %833
  %v836 = vmul.f32 %v828, %v834
  %838 = vrot.lane.b32.xlu0 %v836, 32
  %v839 = vpop.permute.xlu0 %838
  %v841 = vadd.f32 %v831, %v839
  %v842 = vtanh.pop %v841
  %844 = vrot.lane.b32.xlu0 %v842, 64
  %v845 = vpop.permute.xlu0 %844
  %v847 = vmul.f32 %v828, %v845
  %vm848 = vcmp.gt.s32.totalorder %v45, 6
  %v849 = vsel %vm848, 1, 0
  %850 = vset.pattern.permute.xlu0 0
  %851 = vperm.xlu0 %850, %v849
  %v852 = vpop.permute.xlu0 %851
  %vm853 = vcmp.eq.s32.totalorder %v852, 1
  %v854 = vsel %vm853, %v841, %v766
  %v855 = vsel %vm853, %v847, %v767
  %v856 = vsel %vm853, %v847, 0.0
  %858 = vrot.lane.b32.xlu0 %v856, 32
  %v859 = vpop.permute.xlu0 %858
  %861 = vst.msk [vmem:[#allocation2 + $0x30] sm:$0xff] %vm111, %v859
  %v862 = vld [vmem:[#allocation3 + $0x38] sm:$0xff]
  %v863 = vpack.c.bf16 %v855, %v855
  %865 = vrot.lane.b32.xlu0 %v863, 32
  %v866 = vpop.permute.xlu0 %865
  %v868 = vsel %vm111, %v866, 0
  %870 = vmatprep.subr.bf16.mxu0 0
  %871 = vmatpush1.bf16.msra.mxu0 %v239
  %872 = vmatprep.subr.bf16.mxu0 0
  %873 = vmatpush1.bf16.msra.mxu0 %v240
  %874 = vmatprep.subr.bf16.mxu0 0
  %875 = vmatpush1.bf16.msra.mxu0 0
  %876 = vmatprep.subr.bf16.mxu0 0
  %877 = vmatpush1.bf16.msra.mxu0 0
  %878 = vmatprep.subr.bf16.mxu0 0
  %879 = vmatpush1.bf16.msra.mxu0 0
  %880 = vmatprep.subr.bf16.mxu0 0
  %881 = vmatpush1.bf16.msra.mxu0 0
  %882 = vmatprep.subr.bf16.mxu0 0
  %883 = vmatpush1.bf16.msra.mxu0 0
  %884 = vmatprep.subr.bf16.mxu0 0
  %885 = vmatpush1.bf16.msra.mxu0 0
  %886 = vmatprep.subr.bf16.mxu0 0
  %887 = vmatpush1.bf16.msra.mxu0 0
  %888 = vmatprep.subr.bf16.mxu0 0
  %889 = vmatpush1.bf16.msra.mxu0 0
  %890 = vmatprep.subr.bf16.mxu0 0
  %891 = vmatpush1.bf16.msra.mxu0 0
  %892 = vmatprep.subr.bf16.mxu0 0
  %893 = vmatpush1.bf16.msra.mxu0 0
  %894 = vmatprep.subr.bf16.mxu0 0
  %895 = vmatpush1.bf16.msra.mxu0 0
  %896 = vmatprep.subr.bf16.mxu0 0
  %897 = vmatpush1.bf16.msra.mxu0 0
  %898 = vmatprep.subr.bf16.mxu0 0
  %899 = vmatpush1.bf16.msra.mxu0 0
  %900 = vmatprep.subr.bf16.mxu0 0
  %901 = vmatpush1.bf16.msra.mxu0 0
  %902 = vmatprep.mubr.bf16.mxu0 0
  %903 = vmatmul.mubr.bf16.gmra.mrb[0].mxu0 %v868
  %v904 = vpop.f32.mrb[0].mxu0
  %v905 = vadd.f32 0.0, %v904
  %v906 = vpop.f32.mrb[0].mxu0
  %v907 = vpop.f32.mrb[0].mxu0
  %v908 = vpop.f32.mrb[0].mxu0
  %909 = vdwg.mxu0
  %v910 = vadd.f32 %v862, %v905
  %v911 = vxor.u32 %v910, 2147483648
  %v912 = vmul.f32 %v911, 1.442695
  %v913 = vpow.pop %v912
  %v914 = vadd.f32 %v913, 1.0
  %v915 = vrcp.pop %v914
  %v916 = vmul.f32 1.0, %v915
  %v917 = vmul.f32 %v916, 2.0
  %v918 = vsub.f32 %v917, 1.0
  %v919 = vmul.f32 %v916, %v854
  %921 = vrot.lane.b32.xlu0 %v918, 64
  %v922 = vpop.permute.xlu0 %921
  %v924 = vmul.f32 %v916, %v922
  %926 = vrot.lane.b32.xlu0 %v924, 32
  %v927 = vpop.permute.xlu0 %926
  %v929 = vadd.f32 %v919, %v927
  %v930 = vtanh.pop %v929
  %932 = vrot.lane.b32.xlu0 %v930, 64
  %v933 = vpop.permute.xlu0 %932
  %v935 = vmul.f32 %v916, %v933
  %vm936 = vcmp.gt.s32.totalorder %v45, 7
  %v937 = vsel %vm936, 1, 0
  %938 = vset.pattern.permute.xlu0 0
  %939 = vperm.xlu0 %938, %v937
  %v940 = vpop.permute.xlu0 %939
  %vm941 = vcmp.eq.s32.totalorder %v940, 1
  %v942 = vsel %vm941, %v929, %v854
  %v943 = vsel %vm941, %v935, %v855
  %v944 = vsel %vm941, %v935, 0.0
  %946 = vrot.lane.b32.xlu0 %v944, 32
  %v947 = vpop.permute.xlu0 %946
  %949 = vst.msk [vmem:[#allocation2 + $0x38] sm:$0xff] %vm111, %v947
  %v950 = vld [vmem:[#allocation3 + $0x40] sm:$0xff]
  %v951 = vpack.c.bf16 %v943, %v943
  %953 = vrot.lane.b32.xlu0 %v951, 32
  %v954 = vpop.permute.xlu0 %953
  %v956 = vsel %vm111, %v954, 0
  %958 = vmatprep.subr.bf16.mxu0 0
  %959 = vmatpush1.bf16.msra.mxu0 %v239
  %960 = vmatprep.subr.bf16.mxu0 0
  %961 = vmatpush1.bf16.msra.mxu0 %v240
  %962 = vmatprep.subr.bf16.mxu0 0
  %963 = vmatpush1.bf16.msra.mxu0 0
  %964 = vmatprep.subr.bf16.mxu0 0
  %965 = vmatpush1.bf16.msra.mxu0 0
  %966 = vmatprep.subr.bf16.mxu0 0
  %967 = vmatpush1.bf16.msra.mxu0 0
  %968 = vmatprep.subr.bf16.mxu0 0
  %969 = vmatpush1.bf16.msra.mxu0 0
  %970 = vmatprep.subr.bf16.mxu0 0
  %971 = vmatpush1.bf16.msra.mxu0 0
  %972 = vmatprep.subr.bf16.mxu0 0
  %973 = vmatpush1.bf16.msra.mxu0 0
  %974 = vmatprep.subr.bf16.mxu0 0
  %975 = vmatpush1.bf16.msra.mxu0 0
  %976 = vmatprep.subr.bf16.mxu0 0
  %977 = vmatpush1.bf16.msra.mxu0 0
  %978 = vmatprep.subr.bf16.mxu0 0
  %979 = vmatpush1.bf16.msra.mxu0 0
  %980 = vmatprep.subr.bf16.mxu0 0
  %981 = vmatpush1.bf16.msra.mxu0 0
  %982 = vmatprep.subr.bf16.mxu0 0
  %983 = vmatpush1.bf16.msra.mxu0 0
  %984 = vmatprep.subr.bf16.mxu0 0
  %985 = vmatpush1.bf16.msra.mxu0 0
  %986 = vmatprep.subr.bf16.mxu0 0
  %987 = vmatpush1.bf16.msra.mxu0 0
  %988 = vmatprep.subr.bf16.mxu0 0
  %989 = vmatpush1.bf16.msra.mxu0 0
  %990 = vmatprep.mubr.bf16.mxu0 0
  %991 = vmatmul.mubr.bf16.gmra.mrb[0].mxu0 %v956
  %v992 = vpop.f32.mrb[0].mxu0
  %v993 = vadd.f32 0.0, %v992
  %v994 = vpop.f32.mrb[0].mxu0
  %v995 = vpop.f32.mrb[0].mxu0
  %v996 = vpop.f32.mrb[0].mxu0
  %997 = vdwg.mxu0
  %v998 = vadd.f32 %v950, %v993
  %v999 = vxor.u32 %v998, 2147483648
  %v1000 = vmul.f32 %v999, 1.442695
  %v1001 = vpow.pop %v1000
  %v1002 = vadd.f32 %v1001, 1.0
  %v1003 = vrcp.pop %v1002
  %v1004 = vmul.f32 1.0, %v1003
  %v1005 = vmul.f32 %v1004, 2.0
  %v1006 = vsub.f32 %v1005, 1.0
  %v1007 = vmul.f32 %v1004, %v942
  %1009 = vrot.lane.b32.xlu0 %v1006, 64
  %v1010 = vpop.permute.xlu0 %1009
  %v1012 = vmul.f32 %v1004, %v1010
  %1014 = vrot.lane.b32.xlu0 %v1012, 32
  %v1015 = vpop.permute.xlu0 %1014
  %v1017 = vadd.f32 %v1007, %v1015
  %v1018 = vtanh.pop %v1017
  %1020 = vrot.lane.b32.xlu0 %v1018, 64
  %v1021 = vpop.permute.xlu0 %1020
  %v1023 = vmul.f32 %v1004, %v1021
  %vm1024 = vcmp.gt.s32.totalorder %v45, 8
  %v1025 = vsel %vm1024, 1, 0
  %1026 = vset.pattern.permute.xlu0 0
  %1027 = vperm.xlu0 %1026, %v1025
  %v1028 = vpop.permute.xlu0 %1027
  %vm1029 = vcmp.eq.s32.totalorder %v1028, 1
  %v1030 = vsel %vm1029, %v1017, %v942
  %v1031 = vsel %vm1029, %v1023, %v943
  %v1032 = vsel %vm1029, %v1023, 0.0
  %1034 = vrot.lane.b32.xlu0 %v1032, 32
  %v1035 = vpop.permute.xlu0 %1034
  %1037 = vst.msk [vmem:[#allocation2 + $0x40] sm:$0xff] %vm111, %v1035
  %v1038 = vld [vmem:[#allocation3 + $0x48] sm:$0xff]
  %v1039 = vpack.c.bf16 %v1031, %v1031
  %1041 = vrot.lane.b32.xlu0 %v1039, 32
  %v1042 = vpop.permute.xlu0 %1041
  %v1044 = vsel %vm111, %v1042, 0
  %1046 = vmatprep.subr.bf16.mxu0 0
  %1047 = vmatpush1.bf16.msra.mxu0 %v239
  %1048 = vmatprep.subr.bf16.mxu0 0
  %1049 = vmatpush1.bf16.msra.mxu0 %v240
  %1050 = vmatprep.subr.bf16.mxu0 0
  %1051 = vmatpush1.bf16.msra.mxu0 0
  %1052 = vmatprep.subr.bf16.mxu0 0
  %1053 = vmatpush1.bf16.msra.mxu0 0
  %1054 = vmatprep.subr.bf16.mxu0 0
  %1055 = vmatpush1.bf16.msra.mxu0 0
  %1056 = vmatprep.subr.bf16.mxu0 0
  %1057 = vmatpush1.bf16.msra.mxu0 0
  %1058 = vmatprep.subr.bf16.mxu0 0
  %1059 = vmatpush1.bf16.msra.mxu0 0
  %1060 = vmatprep.subr.bf16.mxu0 0
  %1061 = vmatpush1.bf16.msra.mxu0 0
  %1062 = vmatprep.subr.bf16.mxu0 0
  %1063 = vmatpush1.bf16.msra.mxu0 0
  %1064 = vmatprep.subr.bf16.mxu0 0
  %1065 = vmatpush1.bf16.msra.mxu0 0
  %1066 = vmatprep.subr.bf16.mxu0 0
  %1067 = vmatpush1.bf16.msra.mxu0 0
  %1068 = vmatprep.subr.bf16.mxu0 0
  %1069 = vmatpush1.bf16.msra.mxu0 0
  %1070 = vmatprep.subr.bf16.mxu0 0
  %1071 = vmatpush1.bf16.msra.mxu0 0
  %1072 = vmatprep.subr.bf16.mxu0 0
  %1073 = vmatpush1.bf16.msra.mxu0 0
  %1074 = vmatprep.subr.bf16.mxu0 0
  %1075 = vmatpush1.bf16.msra.mxu0 0
  %1076 = vmatprep.subr.bf16.mxu0 0
  %1077 = vmatpush1.bf16.msra.mxu0 0
  %1078 = vmatprep.mubr.bf16.mxu0 0
  %1079 = vmatmul.mubr.bf16.gmra.mrb[0].mxu0 %v1044
  %v1080 = vpop.f32.mrb[0].mxu0
  %v1081 = vadd.f32 0.0, %v1080
  %v1082 = vpop.f32.mrb[0].mxu0
  %v1083 = vpop.f32.mrb[0].mxu0
  %v1084 = vpop.f32.mrb[0].mxu0
  %1085 = vdwg.mxu0
  %v1086 = vadd.f32 %v1038, %v1081
  %v1087 = vxor.u32 %v1086, 2147483648
  %v1088 = vmul.f32 %v1087, 1.442695
  %v1089 = vpow.pop %v1088
  %v1090 = vadd.f32 %v1089, 1.0
  %v1091 = vrcp.pop %v1090
  %v1092 = vmul.f32 1.0, %v1091
  %v1093 = vmul.f32 %v1092, 2.0
  %v1094 = vsub.f32 %v1093, 1.0
  %v1095 = vmul.f32 %v1092, %v1030
  %1097 = vrot.lane.b32.xlu0 %v1094, 64
  %v1098 = vpop.permute.xlu0 %1097
  %v1100 = vmul.f32 %v1092, %v1098
  %1102 = vrot.lane.b32.xlu0 %v1100, 32
  %v1103 = vpop.permute.xlu0 %1102
  %v1105 = vadd.f32 %v1095, %v1103
  %v1106 = vtanh.pop %v1105
  %1108 = vrot.lane.b32.xlu0 %v1106, 64
  %v1109 = vpop.permute.xlu0 %1108
  %v1111 = vmul.f32 %v1092, %v1109
  %vm1112 = vcmp.gt.s32.totalorder %v45, 9
  %v1113 = vsel %vm1112, 1, 0
  %1114 = vset.pattern.permute.xlu0 0
  %1115 = vperm.xlu0 %1114, %v1113
  %v1116 = vpop.permute.xlu0 %1115
  %vm1117 = vcmp.eq.s32.totalorder %v1116, 1
  %v1118 = vsel %vm1117, %v1105, %v1030
  %v1119 = vsel %vm1117, %v1111, %v1031
  %v1120 = vsel %vm1117, %v1111, 0.0
  %1122 = vrot.lane.b32.xlu0 %v1120, 32
  %v1123 = vpop.permute.xlu0 %1122
  %1125 = vst.msk [vmem:[#allocation2 + $0x48] sm:$0xff] %vm111, %v1123
  %v1126 = vld [vmem:[#allocation3 + $0x50] sm:$0xff]
  %v1127 = vpack.c.bf16 %v1119, %v1119
  %1129 = vrot.lane.b32.xlu0 %v1127, 32
  %v1130 = vpop.permute.xlu0 %1129
  %v1132 = vsel %vm111, %v1130, 0
  %1134 = vmatprep.subr.bf16.mxu0 0
  %1135 = vmatpush1.bf16.msra.mxu0 %v239
  %1136 = vmatprep.subr.bf16.mxu0 0
  %1137 = vmatpush1.bf16.msra.mxu0 %v240
  %1138 = vmatprep.subr.bf16.mxu0 0
  %1139 = vmatpush1.bf16.msra.mxu0 0
  %1140 = vmatprep.subr.bf16.mxu0 0
  %1141 = vmatpush1.bf16.msra.mxu0 0
  %1142 = vmatprep.subr.bf16.mxu0 0
  %1143 = vmatpush1.bf16.msra.mxu0 0
  %1144 = vmatprep.subr.bf16.mxu0 0
  %1145 = vmatpush1.bf16.msra.mxu0 0
  %1146 = vmatprep.subr.bf16.mxu0 0
  %1147 = vmatpush1.bf16.msra.mxu0 0
  %1148 = vmatprep.subr.bf16.mxu0 0
  %1149 = vmatpush1.bf16.msra.mxu0 0
  %1150 = vmatprep.subr.bf16.mxu0 0
  %1151 = vmatpush1.bf16.msra.mxu0 0
  %1152 = vmatprep.subr.bf16.mxu0 0
  %1153 = vmatpush1.bf16.msra.mxu0 0
  %1154 = vmatprep.subr.bf16.mxu0 0
  %1155 = vmatpush1.bf16.msra.mxu0 0
  %1156 = vmatprep.subr.bf16.mxu0 0
  %1157 = vmatpush1.bf16.msra.mxu0 0
  %1158 = vmatprep.subr.bf16.mxu0 0
  %1159 = vmatpush1.bf16.msra.mxu0 0
  %1160 = vmatprep.subr.bf16.mxu0 0
  %1161 = vmatpush1.bf16.msra.mxu0 0
  %1162 = vmatprep.subr.bf16.mxu0 0
  %1163 = vmatpush1.bf16.msra.mxu0 0
  %1164 = vmatprep.subr.bf16.mxu0 0
  %1165 = vmatpush1.bf16.msra.mxu0 0
  %1166 = vmatprep.mubr.bf16.mxu0 0
  %1167 = vmatmul.mubr.bf16.gmra.mrb[0].mxu0 %v1132
  %v1168 = vpop.f32.mrb[0].mxu0
  %v1169 = vadd.f32 0.0, %v1168
  %v1170 = vpop.f32.mrb[0].mxu0
  %v1171 = vpop.f32.mrb[0].mxu0
  %v1172 = vpop.f32.mrb[0].mxu0
  %1173 = vdwg.mxu0
  %v1174 = vadd.f32 %v1126, %v1169
  %v1175 = vxor.u32 %v1174, 2147483648
  %v1176 = vmul.f32 %v1175, 1.442695
  %v1177 = vpow.pop %v1176
  %v1178 = vadd.f32 %v1177, 1.0
  %v1179 = vrcp.pop %v1178
  %v1180 = vmul.f32 1.0, %v1179
  %v1181 = vmul.f32 %v1180, 2.0
  %v1182 = vsub.f32 %v1181, 1.0
  %v1183 = vmul.f32 %v1180, %v1118
  %1185 = vrot.lane.b32.xlu0 %v1182, 64
  %v1186 = vpop.permute.xlu0 %1185
  %v1188 = vmul.f32 %v1180, %v1186
  %1190 = vrot.lane.b32.xlu0 %v1188, 32
  %v1191 = vpop.permute.xlu0 %1190
  %v1193 = vadd.f32 %v1183, %v1191
  %v1194 = vtanh.pop %v1193
  %1196 = vrot.lane.b32.xlu0 %v1194, 64
  %v1197 = vpop.permute.xlu0 %1196
  %v1199 = vmul.f32 %v1180, %v1197
  %vm1200 = vcmp.gt.s32.totalorder %v45, 10
  %v1201 = vsel %vm1200, 1, 0
  %1202 = vset.pattern.permute.xlu0 0
  %1203 = vperm.xlu0 %1202, %v1201
  %v1204 = vpop.permute.xlu0 %1203
  %vm1205 = vcmp.eq.s32.totalorder %v1204, 1
  %v1206 = vsel %vm1205, %v1193, %v1118
  %v1207 = vsel %vm1205, %v1199, %v1119
  %v1208 = vsel %vm1205, %v1199, 0.0
  %1210 = vrot.lane.b32.xlu0 %v1208, 32
  %v1211 = vpop.permute.xlu0 %1210
  %1213 = vst.msk [vmem:[#allocation2 + $0x50] sm:$0xff] %vm111, %v1211
  %v1214 = vld [vmem:[#allocation3 + $0x58] sm:$0xff]
  %v1215 = vpack.c.bf16 %v1207, %v1207
  %1217 = vrot.lane.b32.xlu0 %v1215, 32
  %v1218 = vpop.permute.xlu0 %1217
  %v1220 = vsel %vm111, %v1218, 0
  %1222 = vmatprep.subr.bf16.mxu0 0
  %1223 = vmatpush1.bf16.msra.mxu0 %v239
  %1224 = vmatprep.subr.bf16.mxu0 0
  %1225 = vmatpush1.bf16.msra.mxu0 %v240
  %1226 = vmatprep.subr.bf16.mxu0 0
  %1227 = vmatpush1.bf16.msra.mxu0 0
  %1228 = vmatprep.subr.bf16.mxu0 0
  %1229 = vmatpush1.bf16.msra.mxu0 0
  %1230 = vmatprep.subr.bf16.mxu0 0
  %1231 = vmatpush1.bf16.msra.mxu0 0
  %1232 = vmatprep.subr.bf16.mxu0 0
  %1233 = vmatpush1.bf16.msra.mxu0 0
  %1234 = vmatprep.subr.bf16.mxu0 0
  %1235 = vmatpush1.bf16.msra.mxu0 0
  %1236 = vmatprep.subr.bf16.mxu0 0
  %1237 = vmatpush1.bf16.msra.mxu0 0
  %1238 = vmatprep.subr.bf16.mxu0 0
  %1239 = vmatpush1.bf16.msra.mxu0 0
  %1240 = vmatprep.subr.bf16.mxu0 0
  %1241 = vmatpush1.bf16.msra.mxu0 0
  %1242 = vmatprep.subr.bf16.mxu0 0
  %1243 = vmatpush1.bf16.msra.mxu0 0
  %1244 = vmatprep.subr.bf16.mxu0 0
  %1245 = vmatpush1.bf16.msra.mxu0 0
  %1246 = vmatprep.subr.bf16.mxu0 0
  %1247 = vmatpush1.bf16.msra.mxu0 0
  %1248 = vmatprep.subr.bf16.mxu0 0
  %1249 = vmatpush1.bf16.msra.mxu0 0
  %1250 = vmatprep.subr.bf16.mxu0 0
  %1251 = vmatpush1.bf16.msra.mxu0 0
  %1252 = vmatprep.subr.bf16.mxu0 0
  %1253 = vmatpush1.bf16.msra.mxu0 0
  %1254 = vmatprep.mubr.bf16.mxu0 0
  %1255 = vmatmul.mubr.bf16.gmra.mrb[0].mxu0 %v1220
  %v1256 = vpop.f32.mrb[0].mxu0
  %v1257 = vadd.f32 0.0, %v1256
  %v1258 = vpop.f32.mrb[0].mxu0
  %v1259 = vpop.f32.mrb[0].mxu0
  %v1260 = vpop.f32.mrb[0].mxu0
  %1261 = vdwg.mxu0
  %v1262 = vadd.f32 %v1214, %v1257
  %v1263 = vxor.u32 %v1262, 2147483648
  %v1264 = vmul.f32 %v1263, 1.442695
  %v1265 = vpow.pop %v1264
  %v1266 = vadd.f32 %v1265, 1.0
  %v1267 = vrcp.pop %v1266
  %v1268 = vmul.f32 1.0, %v1267
  %v1269 = vmul.f32 %v1268, 2.0
  %v1270 = vsub.f32 %v1269, 1.0
  %v1271 = vmul.f32 %v1268, %v1206
  %1273 = vrot.lane.b32.xlu0 %v1270, 64
  %v1274 = vpop.permute.xlu0 %1273
  %v1276 = vmul.f32 %v1268, %v1274
  %1278 = vrot.lane.b32.xlu0 %v1276, 32
  %v1279 = vpop.permute.xlu0 %1278
  %v1281 = vadd.f32 %v1271, %v1279
  %v1282 = vtanh.pop %v1281
  %1284 = vrot.lane.b32.xlu0 %v1282, 64
  %v1285 = vpop.permute.xlu0 %1284
  %v1287 = vmul.f32 %v1268, %v1285
  %vm1288 = vcmp.gt.s32.totalorder %v45, 11
  %v1289 = vsel %vm1288, 1, 0
  %1290 = vset.pattern.permute.xlu0 0
  %1291 = vperm.xlu0 %1290, %v1289
  %v1292 = vpop.permute.xlu0 %1291
  %vm1293 = vcmp.eq.s32.totalorder %v1292, 1
  %v1294 = vsel %vm1293, %v1287, 0.0
  %1296 = vrot.lane.b32.xlu0 %v1294, 32
  %v1297 = vpop.permute.xlu0 %1296
  %1299 = vst.msk [vmem:[#allocation2 + $0x58] sm:$0xff] %vm111, %v1297
  %v1300 = vld [vmem:[#allocation2] sm:$0xff]
  %v1301 = vld [vmem:[#allocation2 + $0x8] sm:$0xff]
  %v1302 = vld [vmem:[#allocation2 + $0x10] sm:$0xff]
  %v1303 = vld [vmem:[#allocation2 + $0x18] sm:$0xff]
  %v1304 = vld [vmem:[#allocation2 + $0x20] sm:$0xff]
  %v1305 = vld [vmem:[#allocation2 + $0x28] sm:$0xff]
  %v1306 = vld [vmem:[#allocation2 + $0x30] sm:$0xff]
  %v1307 = vld [vmem:[#allocation2 + $0x38] sm:$0xff]
  %v1308 = vld [vmem:[#allocation2 + $0x40] sm:$0xff]
  %v1309 = vld [vmem:[#allocation2 + $0x48] sm:$0xff]
  %v1310 = vld [vmem:[#allocation2 + $0x50] sm:$0xff]
  %v1311 = vld [vmem:[#allocation2 + $0x58] sm:$0xff]
  %v1312 = vpack.c.bf16 %v1301, %v1300
  %v1313 = vpack.c.bf16 %v1303, %v1302
  %v1314 = vpack.c.bf16 %v1305, %v1304
  %v1315 = vpack.c.bf16 %v1307, %v1306
  %v1316 = vpack.c.bf16 %v1309, %v1308
  %v1317 = vpack.c.bf16 %v1311, %v1310
  %v1318 = vld [vmem:[%s6] sm:$0xf]
  %v1319 = vld [vmem:[%s6 + $0x4] sm:$0xf]
  %v1320 = vld [vmem:[%s6 + $0x8] sm:$0xf]
  %v1321 = vld [vmem:[%s6 + $0xc] sm:$0xf]
  %v1322 = vld [vmem:[%s8] sm:$0x1]
  %v1324 = vlaneseq
  %v1325 = vshrl.u32 %v1324, 7
  %v1326 = vsub.s32 0, %v1325
  %v1327 = vrot.slane %v1322, %v1326
  %v1333 = vunpack.c.l.b16 %v1318
  %v1334 = vunpack.c.l.b16 %v1319
  %v1335 = vunpack.c.l.b16 %v1320
  %v1336 = vunpack.c.l.b16 %v1321
  %v1337 = vpack.c.b16 %v1334, %v1333
  %v1338 = vpack.c.b16 %v1336, %v1335
  %v1342 = vsel %vm111, %v1312, 0
  %v1345 = vsel %vm111, %v1313, 0
  %v1348 = vsel %vm111, %v1314, 0
  %v1351 = vsel %vm111, %v1315, 0
  %v1354 = vsel %vm111, %v1316, 0
  %v1357 = vsel %vm111, %v1317, 0
  %1359 = vmatprep.subr.bf16.mxu0 0
  %1360 = vmatpush1.bf16.msra.mxu0 %v1337
  %1361 = vmatprep.subr.bf16.mxu0 0
  %1362 = vmatpush1.bf16.msra.mxu0 %v1338
  %1363 = vmatprep.subr.bf16.mxu0 0
  %1364 = vmatpush1.bf16.msra.mxu0 0
  %1365 = vmatprep.subr.bf16.mxu0 0
  %1366 = vmatpush1.bf16.msra.mxu0 0
  %1367 = vmatprep.subr.bf16.mxu0 0
  %1368 = vmatpush1.bf16.msra.mxu0 0
  %1369 = vmatprep.subr.bf16.mxu0 0
  %1370 = vmatpush1.bf16.msra.mxu0 0
  %1371 = vmatprep.subr.bf16.mxu0 0
  %1372 = vmatpush1.bf16.msra.mxu0 0
  %1373 = vmatprep.subr.bf16.mxu0 0
  %1374 = vmatpush1.bf16.msra.mxu0 0
  %1375 = vmatprep.subr.bf16.mxu0 0
  %1376 = vmatpush1.bf16.msra.mxu0 0
  %1377 = vmatprep.subr.bf16.mxu0 0
  %1378 = vmatpush1.bf16.msra.mxu0 0
  %1379 = vmatprep.subr.bf16.mxu0 0
  %1380 = vmatpush1.bf16.msra.mxu0 0
  %1381 = vmatprep.subr.bf16.mxu0 0
  %1382 = vmatpush1.bf16.msra.mxu0 0
  %1383 = vmatprep.subr.bf16.mxu0 0
  %1384 = vmatpush1.bf16.msra.mxu0 0
  %1385 = vmatprep.subr.bf16.mxu0 0
  %1386 = vmatpush1.bf16.msra.mxu0 0
  %1387 = vmatprep.subr.bf16.mxu0 0
  %1388 = vmatpush1.bf16.msra.mxu0 0
  %1389 = vmatprep.subr.bf16.mxu0 0
  %1390 = vmatpush1.bf16.msra.mxu0 0
  %1391 = vmatprep.mubr.bf16.mxu0 0
  %1392 = vmatmul.mubr.bf16.gmra.mrb[0].mxu0 %v1342
  %v1393 = vpop.f32.mrb[0].mxu0
  %v1394 = vadd.f32 %v1327, %v1393
  %v1395 = vpop.f32.mrb[0].mxu0
  %v1396 = vpop.f32.mrb[0].mxu0
  %v1397 = vadd.f32 %v1327, %v1396
  %v1398 = vpop.f32.mrb[0].mxu0
  %1399 = vmatprep.mubr.bf16.mxu0 0
  %1400 = vmatmul.mubr.bf16.gmra.mrb[0].mxu0 %v1345
  %v1401 = vpop.f32.mrb[0].mxu0
  %v1402 = vadd.f32 %v1327, %v1401
  %v1403 = vpop.f32.mrb[0].mxu0
  %v1404 = vpop.f32.mrb[0].mxu0
  %v1405 = vadd.f32 %v1327, %v1404
  %v1406 = vpop.f32.mrb[0].mxu0
  %1407 = vmatprep.mubr.bf16.mxu0 0
  %1408 = vmatmul.mubr.bf16.gmra.mrb[0].mxu0 %v1348
  %v1409 = vpop.f32.mrb[0].mxu0
  %v1410 = vadd.f32 %v1327, %v1409
  %v1411 = vpop.f32.mrb[0].mxu0
  %v1412 = vpop.f32.mrb[0].mxu0
  %v1413 = vadd.f32 %v1327, %v1412
  %v1414 = vpop.f32.mrb[0].mxu0
  %1415 = vmatprep.mubr.bf16.mxu0 0
  %1416 = vmatmul.mubr.bf16.gmra.mrb[0].mxu0 %v1351
  %v1417 = vpop.f32.mrb[0].mxu0
  %v1418 = vadd.f32 %v1327, %v1417
  %v1419 = vpop.f32.mrb[0].mxu0
  %v1420 = vpop.f32.mrb[0].mxu0
  %v1421 = vadd.f32 %v1327, %v1420
  %v1422 = vpop.f32.mrb[0].mxu0
  %1423 = vmatprep.mubr.bf16.mxu0 0
  %1424 = vmatmul.mubr.bf16.gmra.mrb[0].mxu0 %v1354
  %v1425 = vpop.f32.mrb[0].mxu0
  %v1426 = vadd.f32 %v1327, %v1425
  %v1427 = vpop.f32.mrb[0].mxu0
  %v1428 = vpop.f32.mrb[0].mxu0
  %v1429 = vadd.f32 %v1327, %v1428
  %v1430 = vpop.f32.mrb[0].mxu0
  %1431 = vmatprep.mubr.bf16.mxu0 0
  %1432 = vmatmul.mubr.bf16.gmra.mrb[0].mxu0 %v1357
  %v1433 = vpop.f32.mrb[0].mxu0
  %v1434 = vadd.f32 %v1327, %v1433
  %v1435 = vpop.f32.mrb[0].mxu0
  %v1436 = vpop.f32.mrb[0].mxu0
  %v1437 = vadd.f32 %v1327, %v1436
  %v1438 = vpop.f32.mrb[0].mxu0
  %1439 = vdwg.mxu0
  %1440 = vst [vmem:[#allocation3] sm:$0xff] %v1394
  %1441 = vst [vmem:[#allocation3 + $0x8] sm:$0xff] %v1397
  %1442 = vst [vmem:[#allocation3 + $0x10] sm:$0xff] %v1402
  %1443 = vst [vmem:[#allocation3 + $0x18] sm:$0xff] %v1405
  %1444 = vst [vmem:[#allocation3 + $0x20] sm:$0xff] %v1410
  %1445 = vst [vmem:[#allocation3 + $0x28] sm:$0xff] %v1413
  %1446 = vst [vmem:[#allocation3 + $0x30] sm:$0xff] %v1418
  %1447 = vst [vmem:[#allocation3 + $0x38] sm:$0xff] %v1421
  %1448 = vst [vmem:[#allocation3 + $0x40] sm:$0xff] %v1426
  %1449 = vst [vmem:[#allocation3 + $0x48] sm:$0xff] %v1429
  %1450 = vst [vmem:[#allocation3 + $0x50] sm:$0xff] %v1434
  %1451 = vst [vmem:[#allocation3 + $0x58] sm:$0xff] %v1437
  %s1452 = scalar_lea.vmem %s9, 8
  %v1453 = vld [vmem:[%s1452] sm:$0xff]
  %s1454 = scalar_lea.vmem %s10, 8
  %v1455 = vld [vmem:[%s1454] sm:$0xff]
  %v1456 = vld [vmem:[%s7] sm:$0xf]
  %v1457 = vld [vmem:[%s7 + $0x4] sm:$0xf]
  %v1458 = vld [vmem:[%s7 + $0x8] sm:$0xf]
  %v1459 = vld [vmem:[%s7 + $0xc] sm:$0xf]
  %v1460 = vld [vmem:[#allocation3] sm:$0xff]
  %v1461 = vpack.c.bf16 %v1453, %v1453
  %v1466 = vunpack.c.l.b16 %v1456
  %v1467 = vunpack.c.l.b16 %v1457
  %v1468 = vunpack.c.l.b16 %v1458
  %v1469 = vunpack.c.l.b16 %v1459
  %v1470 = vpack.c.b16 %v1467, %v1466
  %v1471 = vpack.c.b16 %v1469, %v1468
  %v1475 = vsel %vm111, %v1461, 0
  %1477 = vmatprep.subr.bf16.mxu0 0
  %1478 = vmatpush1.bf16.msra.mxu0 %v1470
  %1479 = vmatprep.subr.bf16.mxu0 0
  %1480 = vmatpush1.bf16.msra.mxu0 %v1471
  %1481 = vmatprep.subr.bf16.mxu0 0
  %1482 = vmatpush1.bf16.msra.mxu0 0
  %1483 = vmatprep.subr.bf16.mxu0 0
  %1484 = vmatpush1.bf16.msra.mxu0 0
  %1485 = vmatprep.subr.bf16.mxu0 0
  %1486 = vmatpush1.bf16.msra.mxu0 0
  %1487 = vmatprep.subr.bf16.mxu0 0
  %1488 = vmatpush1.bf16.msra.mxu0 0
  %1489 = vmatprep.subr.bf16.mxu0 0
  %1490 = vmatpush1.bf16.msra.mxu0 0
  %1491 = vmatprep.subr.bf16.mxu0 0
  %1492 = vmatpush1.bf16.msra.mxu0 0
  %1493 = vmatprep.subr.bf16.mxu0 0
  %1494 = vmatpush1.bf16.msra.mxu0 0
  %1495 = vmatprep.subr.bf16.mxu0 0
  %1496 = vmatpush1.bf16.msra.mxu0 0
  %1497 = vmatprep.subr.bf16.mxu0 0
  %1498 = vmatpush1.bf16.msra.mxu0 0
  %1499 = vmatprep.subr.bf16.mxu0 0
  %1500 = vmatpush1.bf16.msra.mxu0 0
  %1501 = vmatprep.subr.bf16.mxu0 0
  %1502 = vmatpush1.bf16.msra.mxu0 0
  %1503 = vmatprep.subr.bf16.mxu0 0
  %1504 = vmatpush1.bf16.msra.mxu0 0
  %1505 = vmatprep.subr.bf16.mxu0 0
  %1506 = vmatpush1.bf16.msra.mxu0 0
  %1507 = vmatprep.subr.bf16.mxu0 0
  %1508 = vmatpush1.bf16.msra.mxu0 0
  %1509 = vmatprep.mubr.bf16.mxu0 0
  %1510 = vmatmul.mubr.bf16.gmra.mrb[0].mxu0 %v1475
  %v1511 = vpop.f32.mrb[0].mxu0
  %v1512 = vadd.f32 0.0, %v1511
  %v1513 = vpop.f32.mrb[0].mxu0
  %v1514 = vpop.f32.mrb[0].mxu0
  %v1515 = vpop.f32.mrb[0].mxu0
  %1516 = vdwg.mxu0
  %v1517 = vadd.f32 %v1460, %v1512
  %v1518 = vxor.u32 %v1517, 2147483648
  %v1519 = vmul.f32 %v1518, 1.442695
  %v1520 = vpow.pop %v1519
  %v1521 = vadd.f32 %v1520, 1.0
  %v1522 = vrcp.pop %v1521
  %v1523 = vmul.f32 1.0, %v1522
  %v1524 = vmul.f32 %v1523, 2.0
  %v1525 = vsub.f32 %v1524, 1.0
  %1527 = vrot.lane.b32.xlu0 %v1455, 32
  %v1528 = vpop.permute.xlu0 %1527
  %v1530 = vmul.f32 %v1523, %v1528
  %1532 = vrot.lane.b32.xlu0 %v1525, 64
  %v1533 = vpop.permute.xlu0 %1532
  %v1535 = vmul.f32 %v1523, %v1533
  %1537 = vrot.lane.b32.xlu0 %v1535, 32
  %v1538 = vpop.permute.xlu0 %1537
  %v1540 = vadd.f32 %v1530, %v1538
  %v1541 = vtanh.pop %v1540
  %1543 = vrot.lane.b32.xlu0 %v1541, 64
  %v1544 = vpop.permute.xlu0 %1543
  %v1546 = vmul.f32 %v1523, %v1544
  %v1547 = vsel %vm321, %v1540, %v1528
  %1549 = vrot.lane.b32.xlu0 %v1453, 96
  %v1550 = vpop.permute.xlu0 %1549
  %v1552 = vsel %vm321, %v1546, %v1550
  %v1553 = vsel %vm321, %v1546, 0.0
  %1555 = vrot.lane.b32.xlu0 %v1553, 32
  %v1556 = vpop.permute.xlu0 %1555
  %1558 = vst.msk [vmem:[#allocation2] sm:$0xff] %vm111, %v1556
  %v1559 = vld [vmem:[#allocation3 + $0x8] sm:$0xff]
  %v1560 = vpack.c.bf16 %v1552, %v1552
  %1562 = vrot.lane.b32.xlu0 %v1560, 32
  %v1563 = vpop.permute.xlu0 %1562
  %v1565 = vsel %vm111, %v1563, 0
  %1567 = vmatprep.subr.bf16.mxu0 0
  %1568 = vmatpush1.bf16.msra.mxu0 %v1470
  %1569 = vmatprep.subr.bf16.mxu0 0
  %1570 = vmatpush1.bf16.msra.mxu0 %v1471
  %1571 = vmatprep.subr.bf16.mxu0 0
  %1572 = vmatpush1.bf16.msra.mxu0 0
  %1573 = vmatprep.subr.bf16.mxu0 0
  %1574 = vmatpush1.bf16.msra.mxu0 0
  %1575 = vmatprep.subr.bf16.mxu0 0
  %1576 = vmatpush1.bf16.msra.mxu0 0
  %1577 = vmatprep.subr.bf16.mxu0 0
  %1578 = vmatpush1.bf16.msra.mxu0 0
  %1579 = vmatprep.subr.bf16.mxu0 0
  %1580 = vmatpush1.bf16.msra.mxu0 0
  %1581 = vmatprep.subr.bf16.mxu0 0
  %1582 = vmatpush1.bf16.msra.mxu0 0
  %1583 = vmatprep.subr.bf16.mxu0 0
  %1584 = vmatpush1.bf16.msra.mxu0 0
  %1585 = vmatprep.subr.bf16.mxu0 0
  %1586 = vmatpush1.bf16.msra.mxu0 0
  %1587 = vmatprep.subr.bf16.mxu0 0
  %1588 = vmatpush1.bf16.msra.mxu0 0
  %1589 = vmatprep.subr.bf16.mxu0 0
  %1590 = vmatpush1.bf16.msra.mxu0 0
  %1591 = vmatprep.subr.bf16.mxu0 0
  %1592 = vmatpush1.bf16.msra.mxu0 0
  %1593 = vmatprep.subr.bf16.mxu0 0
  %1594 = vmatpush1.bf16.msra.mxu0 0
  %1595 = vmatprep.subr.bf16.mxu0 0
  %1596 = vmatpush1.bf16.msra.mxu0 0
  %1597 = vmatprep.subr.bf16.mxu0 0
  %1598 = vmatpush1.bf16.msra.mxu0 0
  %1599 = vmatprep.mubr.bf16.mxu0 0
  %1600 = vmatmul.mubr.bf16.gmra.mrb[0].mxu0 %v1565
  %v1601 = vpop.f32.mrb[0].mxu0
  %v1602 = vadd.f32 0.0, %v1601
  %v1603 = vpop.f32.mrb[0].mxu0
  %v1604 = vpop.f32.mrb[0].mxu0
  %v1605 = vpop.f32.mrb[0].mxu0
  %1606 = vdwg.mxu0
  %v1607 = vadd.f32 %v1559, %v1602
  %v1608 = vxor.u32 %v1607, 2147483648
  %v1609 = vmul.f32 %v1608, 1.442695
  %v1610 = vpow.pop %v1609
  %v1611 = vadd.f32 %v1610, 1.0
  %v1612 = vrcp.pop %v1611
  %v1613 = vmul.f32 1.0, %v1612
  %v1614 = vmul.f32 %v1613, 2.0
  %v1615 = vsub.f32 %v1614, 1.0
  %v1616 = vmul.f32 %v1613, %v1547
  %1618 = vrot.lane.b32.xlu0 %v1615, 64
  %v1619 = vpop.permute.xlu0 %1618
  %v1621 = vmul.f32 %v1613, %v1619
  %1623 = vrot.lane.b32.xlu0 %v1621, 32
  %v1624 = vpop.permute.xlu0 %1623
  %v1626 = vadd.f32 %v1616, %v1624
  %v1627 = vtanh.pop %v1626
  %1629 = vrot.lane.b32.xlu0 %v1627, 64
  %v1630 = vpop.permute.xlu0 %1629
  %v1632 = vmul.f32 %v1613, %v1630
  %v1633 = vsel %vm413, %v1626, %v1547
  %v1634 = vsel %vm413, %v1632, %v1552
  %v1635 = vsel %vm413, %v1632, 0.0
  %1637 = vrot.lane.b32.xlu0 %v1635, 32
  %v1638 = vpop.permute.xlu0 %1637
  %1640 = vst.msk [vmem:[#allocation2 + $0x8] sm:$0xff] %vm111, %v1638
  %v1641 = vld [vmem:[#allocation3 + $0x10] sm:$0xff]
  %v1642 = vpack.c.bf16 %v1634, %v1634
  %1644 = vrot.lane.b32.xlu0 %v1642, 32
  %v1645 = vpop.permute.xlu0 %1644
  %v1647 = vsel %vm111, %v1645, 0
  %1649 = vmatprep.subr.bf16.mxu0 0
  %1650 = vmatpush1.bf16.msra.mxu0 %v1470
  %1651 = vmatprep.subr.bf16.mxu0 0
  %1652 = vmatpush1.bf16.msra.mxu0 %v1471
  %1653 = vmatprep.subr.bf16.mxu0 0
  %1654 = vmatpush1.bf16.msra.mxu0 0
  %1655 = vmatprep.subr.bf16.mxu0 0
  %1656 = vmatpush1.bf16.msra.mxu0 0
  %1657 = vmatprep.subr.bf16.mxu0 0
  %1658 = vmatpush1.bf16.msra.mxu0 0
  %1659 = vmatprep.subr.bf16.mxu0 0
  %1660 = vmatpush1.bf16.msra.mxu0 0
  %1661 = vmatprep.subr.bf16.mxu0 0
  %1662 = vmatpush1.bf16.msra.mxu0 0
  %1663 = vmatprep.subr.bf16.mxu0 0
  %1664 = vmatpush1.bf16.msra.mxu0 0
  %1665 = vmatprep.subr.bf16.mxu0 0
  %1666 = vmatpush1.bf16.msra.mxu0 0
  %1667 = vmatprep.subr.bf16.mxu0 0
  %1668 = vmatpush1.bf16.msra.mxu0 0
  %1669 = vmatprep.subr.bf16.mxu0 0
  %1670 = vmatpush1.bf16.msra.mxu0 0
  %1671 = vmatprep.subr.bf16.mxu0 0
  %1672 = vmatpush1.bf16.msra.mxu0 0
  %1673 = vmatprep.subr.bf16.mxu0 0
  %1674 = vmatpush1.bf16.msra.mxu0 0
  %1675 = vmatprep.subr.bf16.mxu0 0
  %1676 = vmatpush1.bf16.msra.mxu0 0
  %1677 = vmatprep.subr.bf16.mxu0 0
  %1678 = vmatpush1.bf16.msra.mxu0 0
  %1679 = vmatprep.subr.bf16.mxu0 0
  %1680 = vmatpush1.bf16.msra.mxu0 0
  %1681 = vmatprep.mubr.bf16.mxu0 0
  %1682 = vmatmul.mubr.bf16.gmra.mrb[0].mxu0 %v1647
  %v1683 = vpop.f32.mrb[0].mxu0
  %v1684 = vadd.f32 0.0, %v1683
  %v1685 = vpop.f32.mrb[0].mxu0
  %v1686 = vpop.f32.mrb[0].mxu0
  %v1687 = vpop.f32.mrb[0].mxu0
  %1688 = vdwg.mxu0
  %v1689 = vadd.f32 %v1641, %v1684
  %v1690 = vxor.u32 %v1689, 2147483648
  %v1691 = vmul.f32 %v1690, 1.442695
  %v1692 = vpow.pop %v1691
  %v1693 = vadd.f32 %v1692, 1.0
  %v1694 = vrcp.pop %v1693
  %v1695 = vmul.f32 1.0, %v1694
  %v1696 = vmul.f32 %v1695, 2.0
  %v1697 = vsub.f32 %v1696, 1.0
  %v1698 = vmul.f32 %v1695, %v1633
  %1700 = vrot.lane.b32.xlu0 %v1697, 64
  %v1701 = vpop.permute.xlu0 %1700
  %v1703 = vmul.f32 %v1695, %v1701
  %1705 = vrot.lane.b32.xlu0 %v1703, 32
  %v1706 = vpop.permute.xlu0 %1705
  %v1708 = vadd.f32 %v1698, %v1706
  %v1709 = vtanh.pop %v1708
  %1711 = vrot.lane.b32.xlu0 %v1709, 64
  %v1712 = vpop.permute.xlu0 %1711
  %v1714 = vmul.f32 %v1695, %v1712
  %v1715 = vsel %vm501, %v1708, %v1633
  %v1716 = vsel %vm501, %v1714, %v1634
  %v1717 = vsel %vm501, %v1714, 0.0
  %1719 = vrot.lane.b32.xlu0 %v1717, 32
  %v1720 = vpop.permute.xlu0 %1719
  %1722 = vst.msk [vmem:[#allocation2 + $0x10] sm:$0xff] %vm111, %v1720
  %v1723 = vld [vmem:[#allocation3 + $0x18] sm:$0xff]
  %v1724 = vpack.c.bf16 %v1716, %v1716
  %1726 = vrot.lane.b32.xlu0 %v1724, 32
  %v1727 = vpop.permute.xlu0 %1726
  %v1729 = vsel %vm111, %v1727, 0
  %1731 = vmatprep.subr.bf16.mxu0 0
  %1732 = vmatpush1.bf16.msra.mxu0 %v1470
  %1733 = vmatprep.subr.bf16.mxu0 0
  %1734 = vmatpush1.bf16.msra.mxu0 %v1471
  %1735 = vmatprep.subr.bf16.mxu0 0
  %1736 = vmatpush1.bf16.msra.mxu0 0
  %1737 = vmatprep.subr.bf16.mxu0 0
  %1738 = vmatpush1.bf16.msra.mxu0 0
  %1739 = vmatprep.subr.bf16.mxu0 0
  %1740 = vmatpush1.bf16.msra.mxu0 0
  %1741 = vmatprep.subr.bf16.mxu0 0
  %1742 = vmatpush1.bf16.msra.mxu0 0
  %1743 = vmatprep.subr.bf16.mxu0 0
  %1744 = vmatpush1.bf16.msra.mxu0 0
  %1745 = vmatprep.subr.bf16.mxu0 0
  %1746 = vmatpush1.bf16.msra.mxu0 0
  %1747 = vmatprep.subr.bf16.mxu0 0
  %1748 = vmatpush1.bf16.msra.mxu0 0
  %1749 = vmatprep.subr.bf16.mxu0 0
  %1750 = vmatpush1.bf16.msra.mxu0 0
  %1751 = vmatprep.subr.bf16.mxu0 0
  %1752 = vmatpush1.bf16.msra.mxu0 0
  %1753 = vmatprep.subr.bf16.mxu0 0
  %1754 = vmatpush1.bf16.msra.mxu0 0
  %1755 = vmatprep.subr.bf16.mxu0 0
  %1756 = vmatpush1.bf16.msra.mxu0 0
  %1757 = vmatprep.subr.bf16.mxu0 0
  %1758 = vmatpush1.bf16.msra.mxu0 0
  %1759 = vmatprep.subr.bf16.mxu0 0
  %1760 = vmatpush1.bf16.msra.mxu0 0
  %1761 = vmatprep.subr.bf16.mxu0 0
  %1762 = vmatpush1.bf16.msra.mxu0 0
  %1763 = vmatprep.mubr.bf16.mxu0 0
  %1764 = vmatmul.mubr.bf16.gmra.mrb[0].mxu0 %v1729
  %v1765 = vpop.f32.mrb[0].mxu0
  %v1766 = vadd.f32 0.0, %v1765
  %v1767 = vpop.f32.mrb[0].mxu0
  %v1768 = vpop.f32.mrb[0].mxu0
  %v1769 = vpop.f32.mrb[0].mxu0
  %1770 = vdwg.mxu0
  %v1771 = vadd.f32 %v1723, %v1766
  %v1772 = vxor.u32 %v1771, 2147483648
  %v1773 = vmul.f32 %v1772, 1.442695
  %v1774 = vpow.pop %v1773
  %v1775 = vadd.f32 %v1774, 1.0
  %v1776 = vrcp.pop %v1775
  %v1777 = vmul.f32 1.0, %v1776
  %v1778 = vmul.f32 %v1777, 2.0
  %v1779 = vsub.f32 %v1778, 1.0
  %v1780 = vmul.f32 %v1777, %v1715
  %1782 = vrot.lane.b32.xlu0 %v1779, 64
  %v1783 = vpop.permute.xlu0 %1782
  %v1785 = vmul.f32 %v1777, %v1783
  %1787 = vrot.lane.b32.xlu0 %v1785, 32
  %v1788 = vpop.permute.xlu0 %1787
  %v1790 = vadd.f32 %v1780, %v1788
  %v1791 = vtanh.pop %v1790
  %1793 = vrot.lane.b32.xlu0 %v1791, 64
  %v1794 = vpop.permute.xlu0 %1793
  %v1796 = vmul.f32 %v1777, %v1794
  %v1797 = vsel %vm589, %v1790, %v1715
  %v1798 = vsel %vm589, %v1796, %v1716
  %v1799 = vsel %vm589, %v1796, 0.0
  %1801 = vrot.lane.b32.xlu0 %v1799, 32
  %v1802 = vpop.permute.xlu0 %1801
  %1804 = vst.msk [vmem:[#allocation2 + $0x18] sm:$0xff] %vm111, %v1802
  %v1805 = vld [vmem:[#allocation3 + $0x20] sm:$0xff]
  %v1806 = vpack.c.bf16 %v1798, %v1798
  %1808 = vrot.lane.b32.xlu0 %v1806, 32
  %v1809 = vpop.permute.xlu0 %1808
  %v1811 = vsel %vm111, %v1809, 0
  %1813 = vmatprep.subr.bf16.mxu0 0
  %1814 = vmatpush1.bf16.msra.mxu0 %v1470
  %1815 = vmatprep.subr.bf16.mxu0 0
  %1816 = vmatpush1.bf16.msra.mxu0 %v1471
  %1817 = vmatprep.subr.bf16.mxu0 0
  %1818 = vmatpush1.bf16.msra.mxu0 0
  %1819 = vmatprep.subr.bf16.mxu0 0
  %1820 = vmatpush1.bf16.msra.mxu0 0
  %1821 = vmatprep.subr.bf16.mxu0 0
  %1822 = vmatpush1.bf16.msra.mxu0 0
  %1823 = vmatprep.subr.bf16.mxu0 0
  %1824 = vmatpush1.bf16.msra.mxu0 0
  %1825 = vmatprep.subr.bf16.mxu0 0
  %1826 = vmatpush1.bf16.msra.mxu0 0
  %1827 = vmatprep.subr.bf16.mxu0 0
  %1828 = vmatpush1.bf16.msra.mxu0 0
  %1829 = vmatprep.subr.bf16.mxu0 0
  %1830 = vmatpush1.bf16.msra.mxu0 0
  %1831 = vmatprep.subr.bf16.mxu0 0
  %1832 = vmatpush1.bf16.msra.mxu0 0
  %1833 = vmatprep.subr.bf16.mxu0 0
  %1834 = vmatpush1.bf16.msra.mxu0 0
  %1835 = vmatprep.subr.bf16.mxu0 0
  %1836 = vmatpush1.bf16.msra.mxu0 0
  %1837 = vmatprep.subr.bf16.mxu0 0
  %1838 = vmatpush1.bf16.msra.mxu0 0
  %1839 = vmatprep.subr.bf16.mxu0 0
  %1840 = vmatpush1.bf16.msra.mxu0 0
  %1841 = vmatprep.subr.bf16.mxu0 0
  %1842 = vmatpush1.bf16.msra.mxu0 0
  %1843 = vmatprep.subr.bf16.mxu0 0
  %1844 = vmatpush1.bf16.msra.mxu0 0
  %1845 = vmatprep.mubr.bf16.mxu0 0
  %1846 = vmatmul.mubr.bf16.gmra.mrb[0].mxu0 %v1811
  %v1847 = vpop.f32.mrb[0].mxu0
  %v1848 = vadd.f32 0.0, %v1847
  %v1849 = vpop.f32.mrb[0].mxu0
  %v1850 = vpop.f32.mrb[0].mxu0
  %v1851 = vpop.f32.mrb[0].mxu0
  %1852 = vdwg.mxu0
  %v1853 = vadd.f32 %v1805, %v1848
  %v1854 = vxor.u32 %v1853, 2147483648
  %v1855 = vmul.f32 %v1854, 1.442695
  %v1856 = vpow.pop %v1855
  %v1857 = vadd.f32 %v1856, 1.0
  %v1858 = vrcp.pop %v1857
  %v1859 = vmul.f32 1.0, %v1858
  %v1860 = vmul.f32 %v1859, 2.0
  %v1861 = vsub.f32 %v1860, 1.0
  %v1862 = vmul.f32 %v1859, %v1797
  %1864 = vrot.lane.b32.xlu0 %v1861, 64
  %v1865 = vpop.permute.xlu0 %1864
  %v1867 = vmul.f32 %v1859, %v1865
  %1869 = vrot.lane.b32.xlu0 %v1867, 32
  %v1870 = vpop.permute.xlu0 %1869
  %v1872 = vadd.f32 %v1862, %v1870
  %v1873 = vtanh.pop %v1872
  %1875 = vrot.lane.b32.xlu0 %v1873, 64
  %v1876 = vpop.permute.xlu0 %1875
  %v1878 = vmul.f32 %v1859, %v1876
  %v1879 = vsel %vm677, %v1872, %v1797
  %v1880 = vsel %vm677, %v1878, %v1798
  %v1881 = vsel %vm677, %v1878, 0.0
  %1883 = vrot.lane.b32.xlu0 %v1881, 32
  %v1884 = vpop.permute.xlu0 %1883
  %1886 = vst.msk [vmem:[#allocation2 + $0x20] sm:$0xff] %vm111, %v1884
  %v1887 = vld [vmem:[#allocation3 + $0x28] sm:$0xff]
  %v1888 = vpack.c.bf16 %v1880, %v1880
  %1890 = vrot.lane.b32.xlu0 %v1888, 32
  %v1891 = vpop.permute.xlu0 %1890
  %v1893 = vsel %vm111, %v1891, 0
  %1895 = vmatprep.subr.bf16.mxu0 0
  %1896 = vmatpush1.bf16.msra.mxu0 %v1470
  %1897 = vmatprep.subr.bf16.mxu0 0
  %1898 = vmatpush1.bf16.msra.mxu0 %v1471
  %1899 = vmatprep.subr.bf16.mxu0 0
  %1900 = vmatpush1.bf16.msra.mxu0 0
  %1901 = vmatprep.subr.bf16.mxu0 0
  %1902 = vmatpush1.bf16.msra.mxu0 0
  %1903 = vmatprep.subr.bf16.mxu0 0
  %1904 = vmatpush1.bf16.msra.mxu0 0
  %1905 = vmatprep.subr.bf16.mxu0 0
  %1906 = vmatpush1.bf16.msra.mxu0 0
  %1907 = vmatprep.subr.bf16.mxu0 0
  %1908 = vmatpush1.bf16.msra.mxu0 0
  %1909 = vmatprep.subr.bf16.mxu0 0
  %1910 = vmatpush1.bf16.msra.mxu0 0
  %1911 = vmatprep.subr.bf16.mxu0 0
  %1912 = vmatpush1.bf16.msra.mxu0 0
  %1913 = vmatprep.subr.bf16.mxu0 0
  %1914 = vmatpush1.bf16.msra.mxu0 0
  %1915 = vmatprep.subr.bf16.mxu0 0
  %1916 = vmatpush1.bf16.msra.mxu0 0
  %1917 = vmatprep.subr.bf16.mxu0 0
  %1918 = vmatpush1.bf16.msra.mxu0 0
  %1919 = vmatprep.subr.bf16.mxu0 0
  %1920 = vmatpush1.bf16.msra.mxu0 0
  %1921 = vmatprep.subr.bf16.mxu0 0
  %1922 = vmatpush1.bf16.msra.mxu0 0
  %1923 = vmatprep.subr.bf16.mxu0 0
  %1924 = vmatpush1.bf16.msra.mxu0 0
  %1925 = vmatprep.subr.bf16.mxu0 0
  %1926 = vmatpush1.bf16.msra.mxu0 0
  %1927 = vmatprep.mubr.bf16.mxu0 0
  %1928 = vmatmul.mubr.bf16.gmra.mrb[0].mxu0 %v1893
  %v1929 = vpop.f32.mrb[0].mxu0
  %v1930 = vadd.f32 0.0, %v1929
  %v1931 = vpop.f32.mrb[0].mxu0
  %v1932 = vpop.f32.mrb[0].mxu0
  %v1933 = vpop.f32.mrb[0].mxu0
  %1934 = vdwg.mxu0
  %v1935 = vadd.f32 %v1887, %v1930
  %v1936 = vxor.u32 %v1935, 2147483648
  %v1937 = vmul.f32 %v1936, 1.442695
  %v1938 = vpow.pop %v1937
  %v1939 = vadd.f32 %v1938, 1.0
  %v1940 = vrcp.pop %v1939
  %v1941 = vmul.f32 1.0, %v1940
  %v1942 = vmul.f32 %v1941, 2.0
  %v1943 = vsub.f32 %v1942, 1.0
  %v1944 = vmul.f32 %v1941, %v1879
  %1946 = vrot.lane.b32.xlu0 %v1943, 64
  %v1947 = vpop.permute.xlu0 %1946
  %v1949 = vmul.f32 %v1941, %v1947
  %1951 = vrot.lane.b32.xlu0 %v1949, 32
  %v1952 = vpop.permute.xlu0 %1951
  %v1954 = vadd.f32 %v1944, %v1952
  %v1955 = vtanh.pop %v1954
  %1957 = vrot.lane.b32.xlu0 %v1955, 64
  %v1958 = vpop.permute.xlu0 %1957
  %v1960 = vmul.f32 %v1941, %v1958
  %v1961 = vsel %vm765, %v1954, %v1879
  %v1962 = vsel %vm765, %v1960, %v1880
  %v1963 = vsel %vm765, %v1960, 0.0
  %1965 = vrot.lane.b32.xlu0 %v1963, 32
  %v1966 = vpop.permute.xlu0 %1965
  %1968 = vst.msk [vmem:[#allocation2 + $0x28] sm:$0xff] %vm111, %v1966
  %v1969 = vld [vmem:[#allocation3 + $0x30] sm:$0xff]
  %v1970 = vpack.c.bf16 %v1962, %v1962
  %1972 = vrot.lane.b32.xlu0 %v1970, 32
  %v1973 = vpop.permute.xlu0 %1972
  %v1975 = vsel %vm111, %v1973, 0
  %1977 = vmatprep.subr.bf16.mxu0 0
  %1978 = vmatpush1.bf16.msra.mxu0 %v1470
  %1979 = vmatprep.subr.bf16.mxu0 0
  %1980 = vmatpush1.bf16.msra.mxu0 %v1471
  %1981 = vmatprep.subr.bf16.mxu0 0
  %1982 = vmatpush1.bf16.msra.mxu0 0
  %1983 = vmatprep.subr.bf16.mxu0 0
  %1984 = vmatpush1.bf16.msra.mxu0 0
  %1985 = vmatprep.subr.bf16.mxu0 0
  %1986 = vmatpush1.bf16.msra.mxu0 0
  %1987 = vmatprep.subr.bf16.mxu0 0
  %1988 = vmatpush1.bf16.msra.mxu0 0
  %1989 = vmatprep.subr.bf16.mxu0 0
  %1990 = vmatpush1.bf16.msra.mxu0 0
  %1991 = vmatprep.subr.bf16.mxu0 0
  %1992 = vmatpush1.bf16.msra.mxu0 0
  %1993 = vmatprep.subr.bf16.mxu0 0
  %1994 = vmatpush1.bf16.msra.mxu0 0
  %1995 = vmatprep.subr.bf16.mxu0 0
  %1996 = vmatpush1.bf16.msra.mxu0 0
  %1997 = vmatprep.subr.bf16.mxu0 0
  %1998 = vmatpush1.bf16.msra.mxu0 0
  %1999 = vmatprep.subr.bf16.mxu0 0
  %2000 = vmatpush1.bf16.msra.mxu0 0
  %2001 = vmatprep.subr.bf16.mxu0 0
  %2002 = vmatpush1.bf16.msra.mxu0 0
  %2003 = vmatprep.subr.bf16.mxu0 0
  %2004 = vmatpush1.bf16.msra.mxu0 0
  %2005 = vmatprep.subr.bf16.mxu0 0
  %2006 = vmatpush1.bf16.msra.mxu0 0
  %2007 = vmatprep.subr.bf16.mxu0 0
  %2008 = vmatpush1.bf16.msra.mxu0 0
  %2009 = vmatprep.mubr.bf16.mxu0 0
  %2010 = vmatmul.mubr.bf16.gmra.mrb[0].mxu0 %v1975
  %v2011 = vpop.f32.mrb[0].mxu0
  %v2012 = vadd.f32 0.0, %v2011
  %v2013 = vpop.f32.mrb[0].mxu0
  %v2014 = vpop.f32.mrb[0].mxu0
  %v2015 = vpop.f32.mrb[0].mxu0
  %2016 = vdwg.mxu0
  %v2017 = vadd.f32 %v1969, %v2012
  %v2018 = vxor.u32 %v2017, 2147483648
  %v2019 = vmul.f32 %v2018, 1.442695
  %v2020 = vpow.pop %v2019
  %v2021 = vadd.f32 %v2020, 1.0
  %v2022 = vrcp.pop %v2021
  %v2023 = vmul.f32 1.0, %v2022
  %v2024 = vmul.f32 %v2023, 2.0
  %v2025 = vsub.f32 %v2024, 1.0
  %v2026 = vmul.f32 %v2023, %v1961
  %2028 = vrot.lane.b32.xlu0 %v2025, 64
  %v2029 = vpop.permute.xlu0 %2028
  %v2031 = vmul.f32 %v2023, %v2029
  %2033 = vrot.lane.b32.xlu0 %v2031, 32
  %v2034 = vpop.permute.xlu0 %2033
  %v2036 = vadd.f32 %v2026, %v2034
  %v2037 = vtanh.pop %v2036
  %2039 = vrot.lane.b32.xlu0 %v2037, 64
  %v2040 = vpop.permute.xlu0 %2039
  %v2042 = vmul.f32 %v2023, %v2040
  %v2043 = vsel %vm853, %v2036, %v1961
  %v2044 = vsel %vm853, %v2042, %v1962
  %v2045 = vsel %vm853, %v2042, 0.0
  %2047 = vrot.lane.b32.xlu0 %v2045, 32
  %v2048 = vpop.permute.xlu0 %2047
  %2050 = vst.msk [vmem:[#allocation2 + $0x30] sm:$0xff] %vm111, %v2048
  %v2051 = vld [vmem:[#allocation3 + $0x38] sm:$0xff]
  %v2052 = vpack.c.bf16 %v2044, %v2044
  %2054 = vrot.lane.b32.xlu0 %v2052, 32
  %v2055 = vpop.permute.xlu0 %2054
  %v2057 = vsel %vm111, %v2055, 0
  %2059 = vmatprep.subr.bf16.mxu0 0
  %2060 = vmatpush1.bf16.msra.mxu0 %v1470
  %2061 = vmatprep.subr.bf16.mxu0 0
  %2062 = vmatpush1.bf16.msra.mxu0 %v1471
  %2063 = vmatprep.subr.bf16.mxu0 0
  %2064 = vmatpush1.bf16.msra.mxu0 0
  %2065 = vmatprep.subr.bf16.mxu0 0
  %2066 = vmatpush1.bf16.msra.mxu0 0
  %2067 = vmatprep.subr.bf16.mxu0 0
  %2068 = vmatpush1.bf16.msra.mxu0 0
  %2069 = vmatprep.subr.bf16.mxu0 0
  %2070 = vmatpush1.bf16.msra.mxu0 0
  %2071 = vmatprep.subr.bf16.mxu0 0
  %2072 = vmatpush1.bf16.msra.mxu0 0
  %2073 = vmatprep.subr.bf16.mxu0 0
  %2074 = vmatpush1.bf16.msra.mxu0 0
  %2075 = vmatprep.subr.bf16.mxu0 0
  %2076 = vmatpush1.bf16.msra.mxu0 0
  %2077 = vmatprep.subr.bf16.mxu0 0
  %2078 = vmatpush1.bf16.msra.mxu0 0
  %2079 = vmatprep.subr.bf16.mxu0 0
  %2080 = vmatpush1.bf16.msra.mxu0 0
  %2081 = vmatprep.subr.bf16.mxu0 0
  %2082 = vmatpush1.bf16.msra.mxu0 0
  %2083 = vmatprep.subr.bf16.mxu0 0
  %2084 = vmatpush1.bf16.msra.mxu0 0
  %2085 = vmatprep.subr.bf16.mxu0 0
  %2086 = vmatpush1.bf16.msra.mxu0 0
  %2087 = vmatprep.subr.bf16.mxu0 0
  %2088 = vmatpush1.bf16.msra.mxu0 0
  %2089 = vmatprep.subr.bf16.mxu0 0
  %2090 = vmatpush1.bf16.msra.mxu0 0
  %2091 = vmatprep.mubr.bf16.mxu0 0
  %2092 = vmatmul.mubr.bf16.gmra.mrb[0].mxu0 %v2057
  %v2093 = vpop.f32.mrb[0].mxu0
  %v2094 = vadd.f32 0.0, %v2093
  %v2095 = vpop.f32.mrb[0].mxu0
  %v2096 = vpop.f32.mrb[0].mxu0
  %v2097 = vpop.f32.mrb[0].mxu0
  %2098 = vdwg.mxu0
  %v2099 = vadd.f32 %v2051, %v2094
  %v2100 = vxor.u32 %v2099, 2147483648
  %v2101 = vmul.f32 %v2100, 1.442695
  %v2102 = vpow.pop %v2101
  %v2103 = vadd.f32 %v2102, 1.0
  %v2104 = vrcp.pop %v2103
  %v2105 = vmul.f32 1.0, %v2104
  %v2106 = vmul.f32 %v2105, 2.0
  %v2107 = vsub.f32 %v2106, 1.0
  %v2108 = vmul.f32 %v2105, %v2043
  %2110 = vrot.lane.b32.xlu0 %v2107, 64
  %v2111 = vpop.permute.xlu0 %2110
  %v2113 = vmul.f32 %v2105, %v2111
  %2115 = vrot.lane.b32.xlu0 %v2113, 32
  %v2116 = vpop.permute.xlu0 %2115
  %v2118 = vadd.f32 %v2108, %v2116
  %v2119 = vtanh.pop %v2118
  %2121 = vrot.lane.b32.xlu0 %v2119, 64
  %v2122 = vpop.permute.xlu0 %2121
  %v2124 = vmul.f32 %v2105, %v2122
  %v2125 = vsel %vm941, %v2118, %v2043
  %v2126 = vsel %vm941, %v2124, %v2044
  %v2127 = vsel %vm941, %v2124, 0.0
  %2129 = vrot.lane.b32.xlu0 %v2127, 32
  %v2130 = vpop.permute.xlu0 %2129
  %2132 = vst.msk [vmem:[#allocation2 + $0x38] sm:$0xff] %vm111, %v2130
  %v2133 = vld [vmem:[#allocation3 + $0x40] sm:$0xff]
  %v2134 = vpack.c.bf16 %v2126, %v2126
  %2136 = vrot.lane.b32.xlu0 %v2134, 32
  %v2137 = vpop.permute.xlu0 %2136
  %v2139 = vsel %vm111, %v2137, 0
  %2141 = vmatprep.subr.bf16.mxu0 0
  %2142 = vmatpush1.bf16.msra.mxu0 %v1470
  %2143 = vmatprep.subr.bf16.mxu0 0
  %2144 = vmatpush1.bf16.msra.mxu0 %v1471
  %2145 = vmatprep.subr.bf16.mxu0 0
  %2146 = vmatpush1.bf16.msra.mxu0 0
  %2147 = vmatprep.subr.bf16.mxu0 0
  %2148 = vmatpush1.bf16.msra.mxu0 0
  %2149 = vmatprep.subr.bf16.mxu0 0
  %2150 = vmatpush1.bf16.msra.mxu0 0
  %2151 = vmatprep.subr.bf16.mxu0 0
  %2152 = vmatpush1.bf16.msra.mxu0 0
  %2153 = vmatprep.subr.bf16.mxu0 0
  %2154 = vmatpush1.bf16.msra.mxu0 0
  %2155 = vmatprep.subr.bf16.mxu0 0
  %2156 = vmatpush1.bf16.msra.mxu0 0
  %2157 = vmatprep.subr.bf16.mxu0 0
  %2158 = vmatpush1.bf16.msra.mxu0 0
  %2159 = vmatprep.subr.bf16.mxu0 0
  %2160 = vmatpush1.bf16.msra.mxu0 0
  %2161 = vmatprep.subr.bf16.mxu0 0
  %2162 = vmatpush1.bf16.msra.mxu0 0
  %2163 = vmatprep.subr.bf16.mxu0 0
  %2164 = vmatpush1.bf16.msra.mxu0 0
  %2165 = vmatprep.subr.bf16.mxu0 0
  %2166 = vmatpush1.bf16.msra.mxu0 0
  %2167 = vmatprep.subr.bf16.mxu0 0
  %2168 = vmatpush1.bf16.msra.mxu0 0
  %2169 = vmatprep.subr.bf16.mxu0 0
  %2170 = vmatpush1.bf16.msra.mxu0 0
  %2171 = vmatprep.subr.bf16.mxu0 0
  %2172 = vmatpush1.bf16.msra.mxu0 0
  %2173 = vmatprep.mubr.bf16.mxu0 0
  %2174 = vmatmul.mubr.bf16.gmra.mrb[0].mxu0 %v2139
  %v2175 = vpop.f32.mrb[0].mxu0
  %v2176 = vadd.f32 0.0, %v2175
  %v2177 = vpop.f32.mrb[0].mxu0
  %v2178 = vpop.f32.mrb[0].mxu0
  %v2179 = vpop.f32.mrb[0].mxu0
  %2180 = vdwg.mxu0
  %v2181 = vadd.f32 %v2133, %v2176
  %v2182 = vxor.u32 %v2181, 2147483648
  %v2183 = vmul.f32 %v2182, 1.442695
  %v2184 = vpow.pop %v2183
  %v2185 = vadd.f32 %v2184, 1.0
  %v2186 = vrcp.pop %v2185
  %v2187 = vmul.f32 1.0, %v2186
  %v2188 = vmul.f32 %v2187, 2.0
  %v2189 = vsub.f32 %v2188, 1.0
  %v2190 = vmul.f32 %v2187, %v2125
  %2192 = vrot.lane.b32.xlu0 %v2189, 64
  %v2193 = vpop.permute.xlu0 %2192
  %v2195 = vmul.f32 %v2187, %v2193
  %2197 = vrot.lane.b32.xlu0 %v2195, 32
  %v2198 = vpop.permute.xlu0 %2197
  %v2200 = vadd.f32 %v2190, %v2198
  %v2201 = vtanh.pop %v2200
  %2203 = vrot.lane.b32.xlu0 %v2201, 64
  %v2204 = vpop.permute.xlu0 %2203
  %v2206 = vmul.f32 %v2187, %v2204
  %v2207 = vsel %vm1029, %v2200, %v2125
  %v2208 = vsel %vm1029, %v2206, %v2126
  %v2209 = vsel %vm1029, %v2206, 0.0
  %2211 = vrot.lane.b32.xlu0 %v2209, 32
  %v2212 = vpop.permute.xlu0 %2211
  %2214 = vst.msk [vmem:[#allocation2 + $0x40] sm:$0xff] %vm111, %v2212
  %v2215 = vld [vmem:[#allocation3 + $0x48] sm:$0xff]
  %v2216 = vpack.c.bf16 %v2208, %v2208
  %2218 = vrot.lane.b32.xlu0 %v2216, 32
  %v2219 = vpop.permute.xlu0 %2218
  %v2221 = vsel %vm111, %v2219, 0
  %2223 = vmatprep.subr.bf16.mxu0 0
  %2224 = vmatpush1.bf16.msra.mxu0 %v1470
  %2225 = vmatprep.subr.bf16.mxu0 0
  %2226 = vmatpush1.bf16.msra.mxu0 %v1471
  %2227 = vmatprep.subr.bf16.mxu0 0
  %2228 = vmatpush1.bf16.msra.mxu0 0
  %2229 = vmatprep.subr.bf16.mxu0 0
  %2230 = vmatpush1.bf16.msra.mxu0 0
  %2231 = vmatprep.subr.bf16.mxu0 0
  %2232 = vmatpush1.bf16.msra.mxu0 0
  %2233 = vmatprep.subr.bf16.mxu0 0
  %2234 = vmatpush1.bf16.msra.mxu0 0
  %2235 = vmatprep.subr.bf16.mxu0 0
  %2236 = vmatpush1.bf16.msra.mxu0 0
  %2237 = vmatprep.subr.bf16.mxu0 0
  %2238 = vmatpush1.bf16.msra.mxu0 0
  %2239 = vmatprep.subr.bf16.mxu0 0
  %2240 = vmatpush1.bf16.msra.mxu0 0
  %2241 = vmatprep.subr.bf16.mxu0 0
  %2242 = vmatpush1.bf16.msra.mxu0 0
  %2243 = vmatprep.subr.bf16.mxu0 0
  %2244 = vmatpush1.bf16.msra.mxu0 0
  %2245 = vmatprep.subr.bf16.mxu0 0
  %2246 = vmatpush1.bf16.msra.mxu0 0
  %2247 = vmatprep.subr.bf16.mxu0 0
  %2248 = vmatpush1.bf16.msra.mxu0 0
  %2249 = vmatprep.subr.bf16.mxu0 0
  %2250 = vmatpush1.bf16.msra.mxu0 0
  %2251 = vmatprep.subr.bf16.mxu0 0
  %2252 = vmatpush1.bf16.msra.mxu0 0
  %2253 = vmatprep.subr.bf16.mxu0 0
  %2254 = vmatpush1.bf16.msra.mxu0 0
  %2255 = vmatprep.mubr.bf16.mxu0 0
  %2256 = vmatmul.mubr.bf16.gmra.mrb[0].mxu0 %v2221
  %v2257 = vpop.f32.mrb[0].mxu0
  %v2258 = vadd.f32 0.0, %v2257
  %v2259 = vpop.f32.mrb[0].mxu0
  %v2260 = vpop.f32.mrb[0].mxu0
  %v2261 = vpop.f32.mrb[0].mxu0
  %2262 = vdwg.mxu0
  %v2263 = vadd.f32 %v2215, %v2258
  %v2264 = vxor.u32 %v2263, 2147483648
  %v2265 = vmul.f32 %v2264, 1.442695
  %v2266 = vpow.pop %v2265
  %v2267 = vadd.f32 %v2266, 1.0
  %v2268 = vrcp.pop %v2267
  %v2269 = vmul.f32 1.0, %v2268
  %v2270 = vmul.f32 %v2269, 2.0
  %v2271 = vsub.f32 %v2270, 1.0
  %v2272 = vmul.f32 %v2269, %v2207
  %2274 = vrot.lane.b32.xlu0 %v2271, 64
  %v2275 = vpop.permute.xlu0 %2274
  %v2277 = vmul.f32 %v2269, %v2275
  %2279 = vrot.lane.b32.xlu0 %v2277, 32
  %v2280 = vpop.permute.xlu0 %2279
  %v2282 = vadd.f32 %v2272, %v2280
  %v2283 = vtanh.pop %v2282
  %2285 = vrot.lane.b32.xlu0 %v2283, 64
  %v2286 = vpop.permute.xlu0 %2285
  %v2288 = vmul.f32 %v2269, %v2286
  %v2289 = vsel %vm1117, %v2282, %v2207
  %v2290 = vsel %vm1117, %v2288, %v2208
  %v2291 = vsel %vm1117, %v2288, 0.0
  %2293 = vrot.lane.b32.xlu0 %v2291, 32
  %v2294 = vpop.permute.xlu0 %2293
  %2296 = vst.msk [vmem:[#allocation2 + $0x48] sm:$0xff] %vm111, %v2294
  %v2297 = vld [vmem:[#allocation3 + $0x50] sm:$0xff]
  %v2298 = vpack.c.bf16 %v2290, %v2290
  %2300 = vrot.lane.b32.xlu0 %v2298, 32
  %v2301 = vpop.permute.xlu0 %2300
  %v2303 = vsel %vm111, %v2301, 0
  %2305 = vmatprep.subr.bf16.mxu0 0
  %2306 = vmatpush1.bf16.msra.mxu0 %v1470
  %2307 = vmatprep.subr.bf16.mxu0 0
  %2308 = vmatpush1.bf16.msra.mxu0 %v1471
  %2309 = vmatprep.subr.bf16.mxu0 0
  %2310 = vmatpush1.bf16.msra.mxu0 0
  %2311 = vmatprep.subr.bf16.mxu0 0
  %2312 = vmatpush1.bf16.msra.mxu0 0
  %2313 = vmatprep.subr.bf16.mxu0 0
  %2314 = vmatpush1.bf16.msra.mxu0 0
  %2315 = vmatprep.subr.bf16.mxu0 0
  %2316 = vmatpush1.bf16.msra.mxu0 0
  %2317 = vmatprep.subr.bf16.mxu0 0
  %2318 = vmatpush1.bf16.msra.mxu0 0
  %2319 = vmatprep.subr.bf16.mxu0 0
  %2320 = vmatpush1.bf16.msra.mxu0 0
  %2321 = vmatprep.subr.bf16.mxu0 0
  %2322 = vmatpush1.bf16.msra.mxu0 0
  %2323 = vmatprep.subr.bf16.mxu0 0
  %2324 = vmatpush1.bf16.msra.mxu0 0
  %2325 = vmatprep.subr.bf16.mxu0 0
  %2326 = vmatpush1.bf16.msra.mxu0 0
  %2327 = vmatprep.subr.bf16.mxu0 0
  %2328 = vmatpush1.bf16.msra.mxu0 0
  %2329 = vmatprep.subr.bf16.mxu0 0
  %2330 = vmatpush1.bf16.msra.mxu0 0
  %2331 = vmatprep.subr.bf16.mxu0 0
  %2332 = vmatpush1.bf16.msra.mxu0 0
  %2333 = vmatprep.subr.bf16.mxu0 0
  %2334 = vmatpush1.bf16.msra.mxu0 0
  %2335 = vmatprep.subr.bf16.mxu0 0
  %2336 = vmatpush1.bf16.msra.mxu0 0
  %2337 = vmatprep.mubr.bf16.mxu0 0
  %2338 = vmatmul.mubr.bf16.gmra.mrb[0].mxu0 %v2303
  %v2339 = vpop.f32.mrb[0].mxu0
  %v2340 = vadd.f32 0.0, %v2339
  %v2341 = vpop.f32.mrb[0].mxu0
  %v2342 = vpop.f32.mrb[0].mxu0
  %v2343 = vpop.f32.mrb[0].mxu0
  %2344 = vdwg.mxu0
  %v2345 = vadd.f32 %v2297, %v2340
  %v2346 = vxor.u32 %v2345, 2147483648
  %v2347 = vmul.f32 %v2346, 1.442695
  %v2348 = vpow.pop %v2347
  %v2349 = vadd.f32 %v2348, 1.0
  %v2350 = vrcp.pop %v2349
  %v2351 = vmul.f32 1.0, %v2350
  %v2352 = vmul.f32 %v2351, 2.0
  %v2353 = vsub.f32 %v2352, 1.0
  %v2354 = vmul.f32 %v2351, %v2289
  %2356 = vrot.lane.b32.xlu0 %v2353, 64
  %v2357 = vpop.permute.xlu0 %2356
  %v2359 = vmul.f32 %v2351, %v2357
  %2361 = vrot.lane.b32.xlu0 %v2359, 32
  %v2362 = vpop.permute.xlu0 %2361
  %v2364 = vadd.f32 %v2354, %v2362
  %v2365 = vtanh.pop %v2364
  %2367 = vrot.lane.b32.xlu0 %v2365, 64
  %v2368 = vpop.permute.xlu0 %2367
  %v2370 = vmul.f32 %v2351, %v2368
  %v2371 = vsel %vm1205, %v2364, %v2289
  %v2372 = vsel %vm1205, %v2370, %v2290
  %v2373 = vsel %vm1205, %v2370, 0.0
  %2375 = vrot.lane.b32.xlu0 %v2373, 32
  %v2376 = vpop.permute.xlu0 %2375
  %2378 = vst.msk [vmem:[#allocation2 + $0x50] sm:$0xff] %vm111, %v2376
  %v2379 = vld [vmem:[#allocation3 + $0x58] sm:$0xff]
  %v2380 = vpack.c.bf16 %v2372, %v2372
  %2382 = vrot.lane.b32.xlu0 %v2380, 32
  %v2383 = vpop.permute.xlu0 %2382
  %v2385 = vsel %vm111, %v2383, 0
  %2387 = vmatprep.subr.bf16.mxu0 0
  %2388 = vmatpush1.bf16.msra.mxu0 %v1470
  %2389 = vmatprep.subr.bf16.mxu0 0
  %2390 = vmatpush1.bf16.msra.mxu0 %v1471
  %2391 = vmatprep.subr.bf16.mxu0 0
  %2392 = vmatpush1.bf16.msra.mxu0 0
  %2393 = vmatprep.subr.bf16.mxu0 0
  %2394 = vmatpush1.bf16.msra.mxu0 0
  %2395 = vmatprep.subr.bf16.mxu0 0
  %2396 = vmatpush1.bf16.msra.mxu0 0
  %2397 = vmatprep.subr.bf16.mxu0 0
  %2398 = vmatpush1.bf16.msra.mxu0 0
  %2399 = vmatprep.subr.bf16.mxu0 0
  %2400 = vmatpush1.bf16.msra.mxu0 0
  %2401 = vmatprep.subr.bf16.mxu0 0
  %2402 = vmatpush1.bf16.msra.mxu0 0
  %2403 = vmatprep.subr.bf16.mxu0 0
  %2404 = vmatpush1.bf16.msra.mxu0 0
  %2405 = vmatprep.subr.bf16.mxu0 0
  %2406 = vmatpush1.bf16.msra.mxu0 0
  %2407 = vmatprep.subr.bf16.mxu0 0
  %2408 = vmatpush1.bf16.msra.mxu0 0
  %2409 = vmatprep.subr.bf16.mxu0 0
  %2410 = vmatpush1.bf16.msra.mxu0 0
  %2411 = vmatprep.subr.bf16.mxu0 0
  %2412 = vmatpush1.bf16.msra.mxu0 0
  %2413 = vmatprep.subr.bf16.mxu0 0
  %2414 = vmatpush1.bf16.msra.mxu0 0
  %2415 = vmatprep.subr.bf16.mxu0 0
  %2416 = vmatpush1.bf16.msra.mxu0 0
  %2417 = vmatprep.subr.bf16.mxu0 0
  %2418 = vmatpush1.bf16.msra.mxu0 0
  %2419 = vmatprep.mubr.bf16.mxu0 0
  %2420 = vmatmul.mubr.bf16.gmra.mrb[0].mxu0 %v2385
  %v2421 = vpop.f32.mrb[0].mxu0
  %v2422 = vadd.f32 0.0, %v2421
  %v2423 = vpop.f32.mrb[0].mxu0
  %v2424 = vpop.f32.mrb[0].mxu0
  %v2425 = vpop.f32.mrb[0].mxu0
  %2426 = vdwg.mxu0
  %v2427 = vadd.f32 %v2379, %v2422
  %v2428 = vxor.u32 %v2427, 2147483648
  %v2429 = vmul.f32 %v2428, 1.442695
  %v2430 = vpow.pop %v2429
  %v2431 = vadd.f32 %v2430, 1.0
  %v2432 = vrcp.pop %v2431
  %v2433 = vmul.f32 1.0, %v2432
  %v2434 = vmul.f32 %v2433, 2.0
  %v2435 = vsub.f32 %v2434, 1.0
  %v2436 = vmul.f32 %v2433, %v2371
  %2438 = vrot.lane.b32.xlu0 %v2435, 64
  %v2439 = vpop.permute.xlu0 %2438
  %v2441 = vmul.f32 %v2433, %v2439
  %2443 = vrot.lane.b32.xlu0 %v2441, 32
  %v2444 = vpop.permute.xlu0 %2443
  %v2446 = vadd.f32 %v2436, %v2444
  %v2447 = vtanh.pop %v2446
  %2449 = vrot.lane.b32.xlu0 %v2447, 64
  %v2450 = vpop.permute.xlu0 %2449
  %v2452 = vmul.f32 %v2433, %v2450
  %v2453 = vsel %vm1293, %v2452, 0.0
  %2455 = vrot.lane.b32.xlu0 %v2453, 32
  %v2456 = vpop.permute.xlu0 %2455
  %2458 = vst.msk [vmem:[#allocation2 + $0x58] sm:$0xff] %vm111, %v2456
  %v2459 = vld [vmem:[#allocation2] sm:$0xff]
  %v2460 = vld [vmem:[#allocation2 + $0x8] sm:$0xff]
  %v2461 = vld [vmem:[#allocation2 + $0x10] sm:$0xff]
  %v2462 = vld [vmem:[#allocation2 + $0x18] sm:$0xff]
  %v2463 = vld [vmem:[#allocation2 + $0x20] sm:$0xff]
  %v2464 = vld [vmem:[#allocation2 + $0x28] sm:$0xff]
  %v2465 = vld [vmem:[#allocation2 + $0x30] sm:$0xff]
  %v2466 = vld [vmem:[#allocation2 + $0x38] sm:$0xff]
  %v2467 = vld [vmem:[#allocation2 + $0x40] sm:$0xff]
  %v2468 = vld [vmem:[#allocation2 + $0x48] sm:$0xff]
  %v2469 = vld [vmem:[#allocation2 + $0x50] sm:$0xff]
  %v2470 = vld [vmem:[#allocation2 + $0x58] sm:$0xff]
  %v2471 = vpack.c.bf16 %v2460, %v2459
  %v2472 = vpack.c.bf16 %v2462, %v2461
  %v2473 = vpack.c.bf16 %v2464, %v2463
  %v2474 = vpack.c.bf16 %v2466, %v2465
  %v2475 = vpack.c.bf16 %v2468, %v2467
  %v2476 = vpack.c.bf16 %v2470, %v2469
  %v2477 = vld [vmem:[%s11] sm:$0xf]
  %v2478 = vld [vmem:[%s11 + $0x4] sm:$0xf]
  %v2479 = vld [vmem:[%s11 + $0x8] sm:$0xf]
  %v2480 = vld [vmem:[%s11 + $0xc] sm:$0xf]
  %v2481 = vld [vmem:[%s2] sm:$0xff]
  %v2482 = vld [vmem:[%s2 + $0x8] sm:$0xff]
  %v2483 = vld [vmem:[%s2 + $0x10] sm:$0xff]
  %v2484 = vld [vmem:[%s2 + $0x18] sm:$0xff]
  %v2485 = vld [vmem:[%s2 + $0x20] sm:$0xff]
  %v2486 = vld [vmem:[%s2 + $0x28] sm:$0xff]
  %v2487 = vld [vmem:[%s2 + $0x30] sm:$0xff]
  %v2488 = vld [vmem:[%s2 + $0x38] sm:$0xff]
  %v2489 = vld [vmem:[%s2 + $0x40] sm:$0xff]
  %v2490 = vld [vmem:[%s2 + $0x48] sm:$0xff]
  %v2491 = vld [vmem:[%s2 + $0x50] sm:$0xff]
  %v2492 = vld [vmem:[%s2 + $0x58] sm:$0xff]
  %v2493 = vld [vmem:[%s12] sm:$0x1]
  %2495 = vset.pattern.permute.xlu0 0
  %2496 = vperm.xlu0 %2495, %v2481
  %v2497 = vpop.permute.xlu0 %2496
  %2500 = vset.pattern.permute.xlu0 0
  %2501 = vperm.xlu0 %2500, %v2482
  %v2502 = vpop.permute.xlu0 %2501
  %2505 = vset.pattern.permute.xlu0 0
  %2506 = vperm.xlu0 %2505, %v2483
  %v2507 = vpop.permute.xlu0 %2506
  %2510 = vset.pattern.permute.xlu0 0
  %2511 = vperm.xlu0 %2510, %v2484
  %v2512 = vpop.permute.xlu0 %2511
  %2515 = vset.pattern.permute.xlu0 0
  %2516 = vperm.xlu0 %2515, %v2485
  %v2517 = vpop.permute.xlu0 %2516
  %2520 = vset.pattern.permute.xlu0 0
  %2521 = vperm.xlu0 %2520, %v2486
  %v2522 = vpop.permute.xlu0 %2521
  %2525 = vset.pattern.permute.xlu0 0
  %2526 = vperm.xlu0 %2525, %v2487
  %v2527 = vpop.permute.xlu0 %2526
  %2530 = vset.pattern.permute.xlu0 0
  %2531 = vperm.xlu0 %2530, %v2488
  %v2532 = vpop.permute.xlu0 %2531
  %2535 = vset.pattern.permute.xlu0 0
  %2536 = vperm.xlu0 %2535, %v2489
  %v2537 = vpop.permute.xlu0 %2536
  %2540 = vset.pattern.permute.xlu0 0
  %2541 = vperm.xlu0 %2540, %v2490
  %v2542 = vpop.permute.xlu0 %2541
  %2545 = vset.pattern.permute.xlu0 0
  %2546 = vperm.xlu0 %2545, %v2491
  %v2547 = vpop.permute.xlu0 %2546
  %2550 = vset.pattern.permute.xlu0 0
  %2551 = vperm.xlu0 %2550, %v2492
  %v2552 = vpop.permute.xlu0 %2551
  %v2555 = vlaneseq
  %v2556 = vshrl.u32 %v2555, 7
  %v2557 = vsub.s32 0, %v2556
  %v2558 = vrot.slane %v2493, %v2557
  %v2560 = vmul.f32 %v2497, %v2558
  %v2561 = vmul.f32 %v2502, %v2558
  %v2562 = vmul.f32 %v2507, %v2558
  %v2563 = vmul.f32 %v2512, %v2558
  %v2564 = vmul.f32 %v2517, %v2558
  %v2565 = vmul.f32 %v2522, %v2558
  %v2566 = vmul.f32 %v2527, %v2558
  %v2567 = vmul.f32 %v2532, %v2558
  %v2568 = vmul.f32 %v2537, %v2558
  %v2569 = vmul.f32 %v2542, %v2558
  %v2570 = vmul.f32 %v2547, %v2558
  %v2571 = vmul.f32 %v2552, %v2558
  %v2576 = vunpack.c.l.b16 %v2477
  %v2577 = vunpack.c.l.b16 %v2478
  %v2578 = vunpack.c.l.b16 %v2479
  %v2579 = vunpack.c.l.b16 %v2480
  %v2580 = vpack.c.b16 %v2577, %v2576
  %v2581 = vpack.c.b16 %v2579, %v2578
  %v2585 = vsel %vm111, %v2471, 0
  %v2588 = vsel %vm111, %v2472, 0
  %v2591 = vsel %vm111, %v2473, 0
  %v2594 = vsel %vm111, %v2474, 0
  %v2597 = vsel %vm111, %v2475, 0
  %v2600 = vsel %vm111, %v2476, 0
  %2602 = vmatprep.subr.bf16.mxu0 0
  %2603 = vmatpush1.bf16.msra.mxu0 %v2580
  %2604 = vmatprep.subr.bf16.mxu0 0
  %2605 = vmatpush1.bf16.msra.mxu0 %v2581
  %2606 = vmatprep.subr.bf16.mxu0 0
  %2607 = vmatpush1.bf16.msra.mxu0 0
  %2608 = vmatprep.subr.bf16.mxu0 0
  %2609 = vmatpush1.bf16.msra.mxu0 0
  %2610 = vmatprep.subr.bf16.mxu0 0
  %2611 = vmatpush1.bf16.msra.mxu0 0
  %2612 = vmatprep.subr.bf16.mxu0 0
  %2613 = vmatpush1.bf16.msra.mxu0 0
  %2614 = vmatprep.subr.bf16.mxu0 0
  %2615 = vmatpush1.bf16.msra.mxu0 0
  %2616 = vmatprep.subr.bf16.mxu0 0
  %2617 = vmatpush1.bf16.msra.mxu0 0
  %2618 = vmatprep.subr.bf16.mxu0 0
  %2619 = vmatpush1.bf16.msra.mxu0 0
  %2620 = vmatprep.subr.bf16.mxu0 0
  %2621 = vmatpush1.bf16.msra.mxu0 0
  %2622 = vmatprep.subr.bf16.mxu0 0
  %2623 = vmatpush1.bf16.msra.mxu0 0
  %2624 = vmatprep.subr.bf16.mxu0 0
  %2625 = vmatpush1.bf16.msra.mxu0 0
  %2626 = vmatprep.subr.bf16.mxu0 0
  %2627 = vmatpush1.bf16.msra.mxu0 0
  %2628 = vmatprep.subr.bf16.mxu0 0
  %2629 = vmatpush1.bf16.msra.mxu0 0
  %2630 = vmatprep.subr.bf16.mxu0 0
  %2631 = vmatpush1.bf16.msra.mxu0 0
  %2632 = vmatprep.subr.bf16.mxu0 0
  %2633 = vmatpush1.bf16.msra.mxu0 0
  %2634 = vmatprep.mubr.bf16.mxu0 0
  %2635 = vmatmul.mubr.bf16.gmra.mrb[0].mxu0 %v2585
  %v2636 = vpop.f32.mrb[0].mxu0
  %v2637 = vadd.f32 %v2560, %v2636
  %v2638 = vpop.f32.mrb[0].mxu0
  %v2639 = vpop.f32.mrb[0].mxu0
  %v2640 = vadd.f32 %v2561, %v2639
  %v2641 = vpop.f32.mrb[0].mxu0
  %2642 = vmatprep.mubr.bf16.mxu0 0
  %2643 = vmatmul.mubr.bf16.gmra.mrb[0].mxu0 %v2588
  %v2644 = vpop.f32.mrb[0].mxu0
  %v2645 = vadd.f32 %v2562, %v2644
  %v2646 = vpop.f32.mrb[0].mxu0
  %v2647 = vpop.f32.mrb[0].mxu0
  %v2648 = vadd.f32 %v2563, %v2647
  %v2649 = vpop.f32.mrb[0].mxu0
  %2650 = vmatprep.mubr.bf16.mxu0 0
  %2651 = vmatmul.mubr.bf16.gmra.mrb[0].mxu0 %v2591
  %v2652 = vpop.f32.mrb[0].mxu0
  %v2653 = vadd.f32 %v2564, %v2652
  %v2654 = vpop.f32.mrb[0].mxu0
  %v2655 = vpop.f32.mrb[0].mxu0
  %v2656 = vadd.f32 %v2565, %v2655
  %v2657 = vpop.f32.mrb[0].mxu0
  %2658 = vmatprep.mubr.bf16.mxu0 0
  %2659 = vmatmul.mubr.bf16.gmra.mrb[0].mxu0 %v2594
  %v2660 = vpop.f32.mrb[0].mxu0
  %v2661 = vadd.f32 %v2566, %v2660
  %v2662 = vpop.f32.mrb[0].mxu0
  %v2663 = vpop.f32.mrb[0].mxu0
  %v2664 = vadd.f32 %v2567, %v2663
  %v2665 = vpop.f32.mrb[0].mxu0
  %2666 = vmatprep.mubr.bf16.mxu0 0
  %2667 = vmatmul.mubr.bf16.gmra.mrb[0].mxu0 %v2597
  %v2668 = vpop.f32.mrb[0].mxu0
  %v2669 = vadd.f32 %v2568, %v2668
  %v2670 = vpop.f32.mrb[0].mxu0
  %v2671 = vpop.f32.mrb[0].mxu0
  %v2672 = vadd.f32 %v2569, %v2671
  %v2673 = vpop.f32.mrb[0].mxu0
  %2674 = vmatprep.mubr.bf16.mxu0 0
  %2675 = vmatmul.mubr.bf16.gmra.mrb[0].mxu0 %v2600
  %v2676 = vpop.f32.mrb[0].mxu0
  %v2677 = vadd.f32 %v2570, %v2676
  %v2678 = vpop.f32.mrb[0].mxu0
  %v2679 = vpop.f32.mrb[0].mxu0
  %v2680 = vadd.f32 %v2571, %v2679
  %v2681 = vpop.f32.mrb[0].mxu0
  %2682 = vdwg.mxu0
  %2683 = vst [vmem:[%s13] sm:$0xff] %v2637
  %2684 = vst [vmem:[%s13 + $0x8] sm:$0xff] %v2640
  %2685 = vst [vmem:[%s13 + $0x10] sm:$0xff] %v2645
  %2686 = vst [vmem:[%s13 + $0x18] sm:$0xff] %v2648
  %2687 = vst [vmem:[%s13 + $0x20] sm:$0xff] %v2653
  %2688 = vst [vmem:[%s13 + $0x28] sm:$0xff] %v2656
  %2689 = vst [vmem:[%s13 + $0x30] sm:$0xff] %v2661
  %2690 = vst [vmem:[%s13 + $0x38] sm:$0xff] %v2664
  %2691 = vst [vmem:[%s13 + $0x40] sm:$0xff] %v2669
  %2692 = vst [vmem:[%s13 + $0x48] sm:$0xff] %v2672
  %2693 = vst [vmem:[%s13 + $0x50] sm:$0xff] %v2677
  %2694 = vst [vmem:[%s13 + $0x58] sm:$0xff] %v2680
  // Predicated region
  $region54: #{lstm_model_forward.1} parent=0 // pred_check
    _
  $region55: #{lstm_model_forward.1} parent=0 // pred_check_branch
    %2696 = sbr.rel (0) target = $region57
  $region56: #{lstm_model_forward.1} parent=0 // pred_region
    _
  $region57: #{lstm_model_forward.1} parent=0 // pred_fallthru
    _
  // Predicated region
  $region58: #{lstm_model_forward.1} parent=0 // pred_check
    _
  $region59: #{lstm_model_forward.1} parent=0 // pred_check_branch
    %2698 = sbr.rel (0) target = $region61
  $region60: #{lstm_model_forward.1} parent=0 // pred_region
    _
  $region61: #{lstm_model_forward.1} parent=0 // pred_fallthru
    _

</llo_original>
